<compile_context>
chip_gen: v7x
topology: tpu7x:2x2x1
jax: 0.10.0
libtpu: 0.0.40
codegen_flags: <defaults>
</compile_context>

<pallas_src>
import math

import numpy as np
import jax
import jax.numpy as jnp
from jax import lax
from jax.experimental import pallas as pl
from jax.experimental.pallas import tpu as pltpu

# ---- NNGDLOSS default hyper-parameters ----
M = 4
N = 256
T = 0.001
G = 0
E = 255
W = 0.1
MM = M * M
TWO_N = 2 * N


def _build_groupdiag():
    grp = np.full((MM, N), 1.0 - W, dtype=np.float64)
    if G == 0:
        grp[:, N - E - 1 + 1:N - G] = W
        grp[:, 0:1] = W
    else:
        grp[:, N - E - 1 + 1:N - G + 1] = 1.0 - W
        grp[:, 0:1] = W
        grp[:, N - E - 1 + 1:N - G + 1] = W
        grp[:, 0:1] = 1.0 - W
    return grp


def _build_constants():
    # Forward DFT quadrants stored once:  Wcat = [Wre | Wim]  (N, 4N), bf16.
    #   spec_re = cos @ Wre - sin @ Wim ;  spec_im = cos @ Wim + sin @ Wre
    n = np.arange(N, dtype=np.float64)[:, None]
    f = np.arange(TWO_N, dtype=np.float64)[None, :]
    ang_f = -2.0 * np.pi * n * f / TWO_N
    w_cat = np.concatenate([np.cos(ang_f), np.sin(ang_f)], axis=1)           # (256, 1024)

    # Inverse DFT restricted to the taus the reference reads
    # (tau = 0, then tau = N+1 .. 2N-1), with 1/(2N) folded in:
    #   Vcat = [Vre | Vim]  (2N, 2N), bf16.
    taus = np.array([0] + list(range(N + 1, TWO_N)), dtype=np.float64)
    fc = np.arange(TWO_N, dtype=np.float64)[:, None]
    ang_i = 2.0 * np.pi * fc * taus[None, :] / TWO_N
    v_cat = np.concatenate([np.cos(ang_i), np.sin(ang_i)], axis=1) / TWO_N   # (512, 512)

    # Groupdiag weighting folded into per-quantity masks (auto: diag rows,
    # tau>=1; cross: off-diag rows, all taus).  Scale / exclusion bias for the
    # logsumexp are derived from these two in-kernel.
    grp = _build_groupdiag()
    row = np.arange(MM, dtype=np.int64)[:, None]
    col = np.arange(N, dtype=np.int64)[None, :]
    is_diag = (row // M) == (row % M)                                        # (MM, 1)
    auto_f = (is_diag & (col >= 1)).astype(np.float64)
    cross_f = np.broadcast_to(~is_diag, (MM, N)).astype(np.float64)

    auto_w = (grp * auto_f).astype(np.float32)                               # (MM, N)
    cross_w = (grp * cross_f).astype(np.float32)                             # (MM, N)

    return (jnp.asarray(w_cat, dtype=jnp.bfloat16),
            jnp.asarray(v_cat, dtype=jnp.bfloat16),
            jnp.asarray(auto_w), jnp.asarray(cross_w))


# Device-resident constants, built exactly once at import.
_W_CAT, _V_CAT, _AUTO_W, _CROSS_W = _build_constants()


def _nngd_kernel(x_ref, wcat_ref, vcat_hbm, auto_w_ref, cross_w_ref,
                 out_ref, vcat_vmem, vcat_sem):
    f32 = jnp.float32
    bf16 = jnp.bfloat16

    # Start the IDFT-constant HBM->VMEM DMA now; it is only needed for the
    # second matmul, so it overlaps cos/sin, the DFT dot and the P build.
    v_copy = pltpu.make_async_copy(vcat_hbm, vcat_vmem, vcat_sem)
    v_copy.start()

    # phase -> complex waveform samples; LHS stacks [cos ; sin] on sublanes.
    ang = jnp.float32(2.0 * math.pi) * x_ref[...]                            # (M, N)
    lhs1 = jnp.concatenate([jnp.cos(ang), jnp.sin(ang)], axis=0).astype(bf16)  # (2M, N)

    # Zero-padded length-2N DFT: ONE single-pass bf16 matmul against [Wre|Wim].
    #   rows 0..M-1  = cos @ [Wre | Wim],   rows M..2M-1 = sin @ [Wre | Wim]
    spec = jnp.dot(lhs1, wcat_ref[...], preferred_element_type=f32)          # (2M, 4N)
    spec_re = spec[:M, :TWO_N] - spec[M:, TWO_N:]                            # (M, 2N)
    spec_im = spec[:M, TWO_N:] + spec[M:, :TWO_N]                            # (M, 2N)

    # Pairwise cross-spectra  P[i*M + j] = spec[j] * conj(spec[i]), built in
    # registers (sublane broadcast + concat; no VMEM scratch, no masked stores).
    p_re, p_im = [], []
    for i in range(M):
        b_re = spec_re[i:i + 1, :]                                           # (1, 2N)
        b_im = spec_im[i:i + 1, :]
        p_re.append((spec_re * b_re + spec_im * b_im).astype(bf16))          # Re(P) block
        p_im.append((spec_im * b_re - spec_re * b_im).astype(bf16))          # Im(P) block
    lhs2 = jnp.concatenate(p_re + p_im, axis=0)                              # (2*MM, 2N)

    # IDFT restricted to the used delays: ONE single-pass bf16 matmul against
    # [Vre | Vim] (copied asynchronously above).
    v_copy.wait()
    sig = jnp.dot(lhs2, vcat_vmem[...], preferred_element_type=f32)          # (2*MM, 2N)
    sig_re = sig[:MM, :N] - sig[MM:, N:]                                     # (MM, N)
    sig_im = sig[:MM, N:] + sig[MM:, :N]                                     # (MM, N)
    cm = sig_re * sig_re + sig_im * sig_im                                   # |sigma|^2

    auto_w = auto_w_ref[...]            # Groupdiag * auto-mask (diag rows, tau>=1)
    cross_w = cross_w_ref[...]          # Groupdiag * cross-mask (off-diag rows)
    cm_auto = cm * auto_w
    cm_cross = cm * cross_w

    apsl = jnp.max(cm_auto, keepdims=True)                                   # (1, 1)
    cpsl = jnp.max(cm_cross, keepdims=True)
    aisl = jnp.sum(cm_auto, keepdims=True)
    cisl = jnp.sum(cm_cross, keepdims=True)

    inv_n2 = jnp.float32(1.0 / (N * N))
    psl = jnp.maximum(apsl, cpsl) * inv_n2
    isl = (aisl + cisl) * inv_n2

    # loss = t * logsumexp(ac / t) over the included entries.  scale / bias are
    # derived in-kernel from the (disjoint) auto/cross weights.
    inc_w = auto_w + cross_w
    scale = inc_w * jnp.float32(1.0 / (N * N * T))
    bias = jnp.where(inc_w > 0, jnp.float32(0.0), jnp.float32(-1e30))
    zmax = psl * jnp.float32(1.0 / T)
    z = cm * scale + (bias - zmax)
    loss = jnp.float32(T) * (zmax + jnp.log(jnp.sum(jnp.exp(z), keepdims=True)))

    # Pack the 7 scalars into lanes 0..6 of the (1, 128) output block.
    vals = (loss, psl, apsl, cpsl, isl, aisl, cisl)
    lane = lax.broadcasted_iota(jnp.int32, (1, 128), 1)
    out = jnp.zeros((1, 128), jnp.float32)
    for idx, v in enumerate(vals):
        out = jnp.where(lane == idx, v, out)
    out_ref[...] = out


@jax.jit
def _nngd_forward(y_pred):
    x = y_pred[0, :M * N].reshape(M, N).astype(jnp.float32)
    vmem = pl.BlockSpec(memory_space=pltpu.MemorySpace.VMEM)
    return pl.pallas_call(
        _nngd_kernel,
        out_shape=jax.ShapeDtypeStruct((1, 128), jnp.float32),
        in_specs=[vmem,                                   # x
                  vmem,                                   # Wcat (bf16, needed first)
                  pl.BlockSpec(memory_space=pl.ANY),      # Vcat (bf16, manual async DMA)
                  vmem,                                   # auto_w
                  vmem],                                  # cross_w
        out_specs=vmem,
        scratch_shapes=[pltpu.VMEM((TWO_N, TWO_N), jnp.bfloat16),  # Vcat landing buffer
                        pltpu.SemaphoreType.DMA],
        # Real footprint ~1.2 MiB (0.5 MiB Wcat + 0.5 MiB Vcat scratch + masks
        # + small temporaries); 8 MiB leaves ample headroom, incl. on v7x.
        compiler_params=pltpu.CompilerParams(vmem_limit_bytes=8 * 1024 * 1024),
    )(x, _W_CAT, _V_CAT, _AUTO_W, _CROSS_W)


def nngd_loss(y_pred, y_true=None):
    """Pallas implementation of NNGDLOSS.forward (y_true is unused, as in torch)."""
    out = _nngd_forward(y_pred)
    loss, psl, apsl, cpsl, isl, aisl, cisl = (out[0, i] for i in range(7))
    return [loss, psl, apsl, cpsl, isl, aisl, cisl]


def reference_numpy(y_pred):
    """Float64 numpy re-implementation of Ewaveform2loss_psl for validation."""
    x = np.asarray(y_pred[0][:M * N], dtype=np.float64)
    yrad = 2.0 * np.pi * x
    y = yrad.reshape(M, N).T                               # (N, M)
    y_s = np.exp(1j * y)
    spec = np.fft.fft(y_s, TWO_N, axis=0).T                # (M, 2N)
    re1 = np.tile(spec, (M, 1))
    re2 = np.tile(spec, (1, M)).reshape(MM, TWO_N)
    sigma = np.fft.ifft(re1 * np.conj(re2), axis=1)
    cm = np.zeros((MM, N))
    cm[:, 0] = np.abs(sigma[:, 0]) ** 2
    cm[:, 1:] = np.abs(sigma[:, N + 1:]) ** 2
    cm = cm * _build_groupdiag()
    idx_eye = [i * M + i for i in range(M)]
    idx_oth = [i * M + j for i in range(M) for j in range(M) if j != i]
    A = cm[idx_eye].T
    A_N = A[1:]
    Em = cm[idx_oth].T
    APSL = A_N.reshape(-1)
    CPSL = Em.reshape(-1)
    ac = np.concatenate([APSL, CPSL]) / N / N
    zmax = np.max(ac / T)
    loss = T * (zmax + np.log(np.sum(np.exp(ac / T - zmax))))
    return [loss, ac.max(), APSL.max(), CPSL.max(), ac.sum(), APSL.sum(), CPSL.sum()]


if __name__ == "__main__":
    key = jax.random.PRNGKey(0)
    y_pred = jax.random.uniform(key, (2, M * N), dtype=jnp.float32)
    y_true = jnp.zeros_like(y_pred)          # unused by the forward pass

    outs = nngd_loss(y_pred, y_true)
    outs = [jax.block_until_ready(o) for o in outs]

    ref = reference_numpy(np.asarray(y_pred))
    # bf16 weights + single-pass MXU dots: ~0.3-1% relative error vs float64.
    for got, want in zip(outs, ref):
        np.testing.assert_allclose(float(got), float(want), rtol=3e-2, atol=1e-4)

    print("KERNEL_OK")
</pallas_src>

<mosaic_0001>
module attributes {stable_mosaic.version = 11 : i64} {
  func.func @_nngd_kernel(%arg0: memref<4x256xf32, #tpu.memory_space<vmem>>, %arg1: memref<256x1024xbf16, #tpu.memory_space<vmem>>, %arg2: memref<512x512xbf16, #tpu.memory_space<any>>, %arg3: memref<16x256xf32, #tpu.memory_space<vmem>>, %arg4: memref<16x256xf32, #tpu.memory_space<vmem>>, %arg5: memref<1x128xf32, #tpu.memory_space<vmem>>, %arg6: memref<512x512xbf16, #tpu.memory_space<vmem>>, %arg7: memref<!tpu.dma_semaphore, #tpu.memory_space<semaphore_mem>>) attributes {dimension_semantics = [], scalar_prefetch = 0 : i64, scratch_operands = 2 : i64, tpu.core_type = #tpu.core_type<tc>} {
    tpu.enqueue_dma source(%arg2 : memref<512x512xbf16, #tpu.memory_space<any>>) target(%arg6 : memref<512x512xbf16, #tpu.memory_space<vmem>>) target_semaphore(%arg7 : memref<!tpu.dma_semaphore, #tpu.memory_space<semaphore_mem>>)
    %c0 = arith.constant 0 : index
    %c0_0 = arith.constant 0 : index
    %0 = vector.load %arg0[%c0, %c0_0] : memref<4x256xf32, #tpu.memory_space<vmem>>, vector<4x256xf32>
    %cst = arith.constant 6.28318548 : f32
    %1 = vector.broadcast %cst : f32 to vector<4x256xf32>
    %2 = arith.mulf %1, %0 : vector<4x256xf32>
    %3 = math.cos %2 : vector<4x256xf32>
    %4 = math.sin %2 : vector<4x256xf32>
    %5 = tpu.concatenate %3, %4 in 0 : vector<4x256xf32>, vector<4x256xf32> -> vector<8x256xf32>
    %6 = arith.truncf %5 : vector<8x256xf32> to vector<8x256xbf16>
    %c0_1 = arith.constant 0 : index
    %c0_2 = arith.constant 0 : index
    %7 = vector.load %arg1[%c0_1, %c0_2] : memref<256x1024xbf16, #tpu.memory_space<vmem>>, vector<256x1024xbf16>
    %cst_3 = arith.constant dense<0.000000e+00> : vector<8x1024xf32>
    %8 = tpu.matmul %6, %7, %cst_3 {dimension_numbers = #tpu.dot_dimension_numbers<[1], [0], [0], [1], [0, 0, 1, 1], [], []>} : vector<8x256xbf16>, vector<256x1024xbf16>, vector<8x1024xf32> -> vector<8x1024xf32>
    %9 = vector.extract_strided_slice %8 {offsets = [0, 0], sizes = [4, 512], strides = [1, 1]} : vector<8x1024xf32> to vector<4x512xf32>
    %10 = vector.extract_strided_slice %8 {offsets = [4, 512], sizes = [4, 512], strides = [1, 1]} : vector<8x1024xf32> to vector<4x512xf32>
    %11 = arith.subf %9, %10 : vector<4x512xf32>
    %12 = vector.extract_strided_slice %8 {offsets = [0, 512], sizes = [4, 512], strides = [1, 1]} : vector<8x1024xf32> to vector<4x512xf32>
    %13 = vector.extract_strided_slice %8 {offsets = [4, 0], sizes = [4, 512], strides = [1, 1]} : vector<8x1024xf32> to vector<4x512xf32>
    %14 = arith.addf %12, %13 : vector<4x512xf32>
    %15 = vector.extract_strided_slice %11 {offsets = [0, 0], sizes = [1, 512], strides = [1, 1]} : vector<4x512xf32> to vector<1x512xf32>
    %16 = vector.extract_strided_slice %14 {offsets = [0, 0], sizes = [1, 512], strides = [1, 1]} : vector<4x512xf32> to vector<1x512xf32>
    %17 = vector.broadcast %15 : vector<1x512xf32> to vector<4x512xf32>
    %18 = arith.mulf %11, %17 : vector<4x512xf32>
    %19 = vector.broadcast %16 : vector<1x512xf32> to vector<4x512xf32>
    %20 = arith.mulf %14, %19 : vector<4x512xf32>
    %21 = arith.addf %18, %20 : vector<4x512xf32>
    %22 = arith.truncf %21 : vector<4x512xf32> to vector<4x512xbf16>
    %23 = vector.broadcast %15 : vector<1x512xf32> to vector<4x512xf32>
    %24 = arith.mulf %14, %23 : vector<4x512xf32>
    %25 = vector.broadcast %16 : vector<1x512xf32> to vector<4x512xf32>
    %26 = arith.mulf %11, %25 : vector<4x512xf32>
    %27 = arith.subf %24, %26 : vector<4x512xf32>
    %28 = arith.truncf %27 : vector<4x512xf32> to vector<4x512xbf16>
    %29 = vector.extract_strided_slice %11 {offsets = [1, 0], sizes = [1, 512], strides = [1, 1]} : vector<4x512xf32> to vector<1x512xf32>
    %30 = vector.extract_strided_slice %14 {offsets = [1, 0], sizes = [1, 512], strides = [1, 1]} : vector<4x512xf32> to vector<1x512xf32>
    %31 = vector.broadcast %29 : vector<1x512xf32> to vector<4x512xf32>
    %32 = arith.mulf %11, %31 : vector<4x512xf32>
    %33 = vector.broadcast %30 : vector<1x512xf32> to vector<4x512xf32>
    %34 = arith.mulf %14, %33 : vector<4x512xf32>
    %35 = arith.addf %32, %34 : vector<4x512xf32>
    %36 = arith.truncf %35 : vector<4x512xf32> to vector<4x512xbf16>
    %37 = vector.broadcast %29 : vector<1x512xf32> to vector<4x512xf32>
    %38 = arith.mulf %14, %37 : vector<4x512xf32>
    %39 = vector.broadcast %30 : vector<1x512xf32> to vector<4x512xf32>
    %40 = arith.mulf %11, %39 : vector<4x512xf32>
    %41 = arith.subf %38, %40 : vector<4x512xf32>
    %42 = arith.truncf %41 : vector<4x512xf32> to vector<4x512xbf16>
    %43 = vector.extract_strided_slice %11 {offsets = [2, 0], sizes = [1, 512], strides = [1, 1]} : vector<4x512xf32> to vector<1x512xf32>
    %44 = vector.extract_strided_slice %14 {offsets = [2, 0], sizes = [1, 512], strides = [1, 1]} : vector<4x512xf32> to vector<1x512xf32>
    %45 = vector.broadcast %43 : vector<1x512xf32> to vector<4x512xf32>
    %46 = arith.mulf %11, %45 : vector<4x512xf32>
    %47 = vector.broadcast %44 : vector<1x512xf32> to vector<4x512xf32>
    %48 = arith.mulf %14, %47 : vector<4x512xf32>
    %49 = arith.addf %46, %48 : vector<4x512xf32>
    %50 = arith.truncf %49 : vector<4x512xf32> to vector<4x512xbf16>
    %51 = vector.broadcast %43 : vector<1x512xf32> to vector<4x512xf32>
    %52 = arith.mulf %14, %51 : vector<4x512xf32>
    %53 = vector.broadcast %44 : vector<1x512xf32> to vector<4x512xf32>
    %54 = arith.mulf %11, %53 : vector<4x512xf32>
    %55 = arith.subf %52, %54 : vector<4x512xf32>
    %56 = arith.truncf %55 : vector<4x512xf32> to vector<4x512xbf16>
    %57 = vector.extract_strided_slice %11 {offsets = [3, 0], sizes = [1, 512], strides = [1, 1]} : vector<4x512xf32> to vector<1x512xf32>
    %58 = vector.extract_strided_slice %14 {offsets = [3, 0], sizes = [1, 512], strides = [1, 1]} : vector<4x512xf32> to vector<1x512xf32>
    %59 = vector.broadcast %57 : vector<1x512xf32> to vector<4x512xf32>
    %60 = arith.mulf %11, %59 : vector<4x512xf32>
    %61 = vector.broadcast %58 : vector<1x512xf32> to vector<4x512xf32>
    %62 = arith.mulf %14, %61 : vector<4x512xf32>
    %63 = arith.addf %60, %62 : vector<4x512xf32>
    %64 = arith.truncf %63 : vector<4x512xf32> to vector<4x512xbf16>
    %65 = vector.broadcast %57 : vector<1x512xf32> to vector<4x512xf32>
    %66 = arith.mulf %14, %65 : vector<4x512xf32>
    %67 = vector.broadcast %58 : vector<1x512xf32> to vector<4x512xf32>
    %68 = arith.mulf %11, %67 : vector<4x512xf32>
    %69 = arith.subf %66, %68 : vector<4x512xf32>
    %70 = arith.truncf %69 : vector<4x512xf32> to vector<4x512xbf16>
    %71 = tpu.concatenate %22, %36, %50, %64, %28, %42, %56, %70 in 0 : vector<4x512xbf16>, vector<4x512xbf16>, vector<4x512xbf16>, vector<4x512xbf16>, vector<4x512xbf16>, vector<4x512xbf16>, vector<4x512xbf16>, vector<4x512xbf16> -> vector<32x512xbf16>
    tpu.wait_dma2 semaphore(%arg7 : memref<!tpu.dma_semaphore, #tpu.memory_space<semaphore_mem>>) src(%arg2 : memref<512x512xbf16, #tpu.memory_space<any>>) dst(%arg6 : memref<512x512xbf16, #tpu.memory_space<vmem>>)
    %c0_4 = arith.constant 0 : index
    %c0_5 = arith.constant 0 : index
    %72 = vector.load %arg6[%c0_4, %c0_5] : memref<512x512xbf16, #tpu.memory_space<vmem>>, vector<512x512xbf16>
    %cst_6 = arith.constant dense<0.000000e+00> : vector<32x512xf32>
    %73 = tpu.matmul %71, %72, %cst_6 {dimension_numbers = #tpu.dot_dimension_numbers<[1], [0], [0], [1], [0, 0, 1, 1], [], []>} : vector<32x512xbf16>, vector<512x512xbf16>, vector<32x512xf32> -> vector<32x512xf32>
    %74 = vector.extract_strided_slice %73 {offsets = [0, 0], sizes = [16, 256], strides = [1, 1]} : vector<32x512xf32> to vector<16x256xf32>
    %75 = vector.extract_strided_slice %73 {offsets = [16, 256], sizes = [16, 256], strides = [1, 1]} : vector<32x512xf32> to vector<16x256xf32>
    %76 = arith.subf %74, %75 : vector<16x256xf32>
    %77 = vector.extract_strided_slice %73 {offsets = [0, 256], sizes = [16, 256], strides = [1, 1]} : vector<32x512xf32> to vector<16x256xf32>
    %78 = vector.extract_strided_slice %73 {offsets = [16, 0], sizes = [16, 256], strides = [1, 1]} : vector<32x512xf32> to vector<16x256xf32>
    %79 = arith.addf %77, %78 : vector<16x256xf32>
    %80 = arith.mulf %76, %76 : vector<16x256xf32>
    %81 = arith.mulf %79, %79 : vector<16x256xf32>
    %82 = arith.addf %80, %81 : vector<16x256xf32>
    %c0_7 = arith.constant 0 : index
    %c0_8 = arith.constant 0 : index
    %83 = vector.load %arg3[%c0_7, %c0_8] : memref<16x256xf32, #tpu.memory_space<vmem>>, vector<16x256xf32>
    %c0_9 = arith.constant 0 : index
    %c0_10 = arith.constant 0 : index
    %84 = vector.load %arg4[%c0_9, %c0_10] : memref<16x256xf32, #tpu.memory_space<vmem>>, vector<16x256xf32>
    %85 = arith.mulf %82, %83 : vector<16x256xf32>
    %86 = arith.mulf %82, %84 : vector<16x256xf32>
    %87 = vector.shape_cast %85 : vector<16x256xf32> to vector<1x16x256xf32>
    %cst_11 = arith.constant dense<0xFF800000> : vector<1xf32>
    %88 = vector.multi_reduction <maximumf>, %87, %cst_11 [1, 2] : vector<1x16x256xf32> to vector<1xf32>
    %89 = vector.shape_cast %88 : vector<1xf32> to vector<1x1x1xf32>
    %90 = vector.extract %89[0, 0, 0] : f32 from vector<1x1x1xf32>
    %91 = vector.broadcast %90 : f32 to vector<1x1xf32>
    %92 = vector.shape_cast %86 : vector<16x256xf32> to vector<1x16x256xf32>
    %cst_12 = arith.constant dense<0xFF800000> : vector<1xf32>
    %93 = vector.multi_reduction <maximumf>, %92, %cst_12 [1, 2] : vector<1x16x256xf32> to vector<1xf32>
    %94 = vector.shape_cast %93 : vector<1xf32> to vector<1x1x1xf32>
    %95 = vector.extract %94[0, 0, 0] : f32 from vector<1x1x1xf32>
    %96 = vector.broadcast %95 : f32 to vector<1x1xf32>
    %97 = vector.shape_cast %85 : vector<16x256xf32> to vector<1x16x256xf32>
    %cst_13 = arith.constant dense<0.000000e+00> : vector<1xf32>
    %98 = vector.multi_reduction <add>, %97, %cst_13 [1, 2] : vector<1x16x256xf32> to vector<1xf32>
    %99 = vector.shape_cast %98 : vector<1xf32> to vector<1x1x1xf32>
    %100 = vector.extract %99[0, 0, 0] : f32 from vector<1x1x1xf32>
    %101 = vector.broadcast %100 : f32 to vector<1x1xf32>
    %102 = vector.shape_cast %86 : vector<16x256xf32> to vector<1x16x256xf32>
    %cst_14 = arith.constant dense<0.000000e+00> : vector<1xf32>
    %103 = vector.multi_reduction <add>, %102, %cst_14 [1, 2] : vector<1x16x256xf32> to vector<1xf32>
    %104 = vector.shape_cast %103 : vector<1xf32> to vector<1x1x1xf32>
    %105 = vector.extract %104[0, 0, 0] : f32 from vector<1x1x1xf32>
    %106 = vector.broadcast %105 : f32 to vector<1x1xf32>
    %107 = arith.maximumf %91, %96 : vector<1x1xf32>
    %cst_15 = arith.constant 1.52587891E-5 : f32
    %108 = vector.broadcast %cst_15 : f32 to vector<1x1xf32>
    %109 = arith.mulf %107, %108 : vector<1x1xf32>
    %110 = arith.addf %101, %106 : vector<1x1xf32>
    %cst_16 = arith.constant 1.52587891E-5 : f32
    %111 = vector.broadcast %cst_16 : f32 to vector<1x1xf32>
    %112 = arith.mulf %110, %111 : vector<1x1xf32>
    %113 = arith.addf %83, %84 : vector<16x256xf32>
    %cst_17 = arith.constant 0.0152587891 : f32
    %114 = vector.broadcast %cst_17 : f32 to vector<16x256xf32>
    %115 = arith.mulf %113, %114 : vector<16x256xf32>
    %cst_18 = arith.constant 0.000000e+00 : f32
    %116 = vector.broadcast %cst_18 : f32 to vector<16x256xf32>
    %117 = arith.cmpf ogt, %113, %116 : vector<16x256xf32>
    %cst_19 = arith.constant 0.000000e+00 : f32
    %cst_20 = arith.constant -1.000000e+30 : f32
    %118 = vector.broadcast %cst_19 : f32 to vector<16x256xf32>
    %119 = vector.broadcast %cst_20 : f32 to vector<16x256xf32>
    %120 = arith.select %117, %118, %119 : vector<16x256xi1>, vector<16x256xf32>
    %cst_21 = arith.constant 1.000000e+03 : f32
    %121 = vector.broadcast %cst_21 : f32 to vector<1x1xf32>
    %122 = arith.mulf %109, %121 : vector<1x1xf32>
    %123 = arith.mulf %82, %115 : vector<16x256xf32>
    %124 = vector.broadcast %122 : vector<1x1xf32> to vector<16x256xf32>
    %125 = arith.subf %120, %124 : vector<16x256xf32>
    %126 = arith.addf %123, %125 : vector<16x256xf32>
    %127 = math.exp %126 : vector<16x256xf32>
    %128 = vector.shape_cast %127 : vector<16x256xf32> to vector<1x16x256xf32>
    %cst_22 = arith.constant dense<0.000000e+00> : vector<1xf32>
    %129 = vector.multi_reduction <add>, %128, %cst_22 [1, 2] : vector<1x16x256xf32> to vector<1xf32>
    %130 = vector.shape_cast %129 : vector<1xf32> to vector<1x1x1xf32>
    %131 = vector.extract %130[0, 0, 0] : f32 from vector<1x1x1xf32>
    %132 = vector.broadcast %131 : f32 to vector<1x1xf32>
    %133 = math.log %132 : vector<1x1xf32>
    %134 = arith.addf %122, %133 : vector<1x1xf32>
    %cst_23 = arith.constant 1.000000e-03 : f32
    %135 = vector.broadcast %cst_23 : f32 to vector<1x1xf32>
    %136 = arith.mulf %135, %134 : vector<1x1xf32>
    %137 = tpu.iota {dimensions = array<i32: 1>} : vector<1x128xi32>
    %cst_24 = arith.constant 0.000000e+00 : f32
    %138 = vector.broadcast %cst_24 : f32 to vector<1x128xf32>
    %c0_i32 = arith.constant 0 : i32
    %139 = vector.broadcast %c0_i32 : i32 to vector<1x128xi32>
    %140 = arith.cmpi eq, %137, %139 : vector<1x128xi32>
    %141 = vector.shape_cast %136 : vector<1x1xf32> to vector<1x1xf32>
    %142 = vector.broadcast %141 : vector<1x1xf32> to vector<1x128xf32>
    %143 = arith.select %140, %142, %138 : vector<1x128xi1>, vector<1x128xf32>
    %c1_i32 = arith.constant 1 : i32
    %144 = vector.broadcast %c1_i32 : i32 to vector<1x128xi32>
    %145 = arith.cmpi eq, %137, %144 : vector<1x128xi32>
    %146 = vector.shape_cast %109 : vector<1x1xf32> to vector<1x1xf32>
    %147 = vector.broadcast %146 : vector<1x1xf32> to vector<1x128xf32>
    %148 = arith.select %145, %147, %143 : vector<1x128xi1>, vector<1x128xf32>
    %c2_i32 = arith.constant 2 : i32
    %149 = vector.broadcast %c2_i32 : i32 to vector<1x128xi32>
    %150 = arith.cmpi eq, %137, %149 : vector<1x128xi32>
    %151 = vector.shape_cast %91 : vector<1x1xf32> to vector<1x1xf32>
    %152 = vector.broadcast %151 : vector<1x1xf32> to vector<1x128xf32>
    %153 = arith.select %150, %152, %148 : vector<1x128xi1>, vector<1x128xf32>
    %c3_i32 = arith.constant 3 : i32
    %154 = vector.broadcast %c3_i32 : i32 to vector<1x128xi32>
    %155 = arith.cmpi eq, %137, %154 : vector<1x128xi32>
    %156 = vector.shape_cast %96 : vector<1x1xf32> to vector<1x1xf32>
    %157 = vector.broadcast %156 : vector<1x1xf32> to vector<1x128xf32>
    %158 = arith.select %155, %157, %153 : vector<1x128xi1>, vector<1x128xf32>
    %c4_i32 = arith.constant 4 : i32
    %159 = vector.broadcast %c4_i32 : i32 to vector<1x128xi32>
    %160 = arith.cmpi eq, %137, %159 : vector<1x128xi32>
    %161 = vector.shape_cast %112 : vector<1x1xf32> to vector<1x1xf32>
    %162 = vector.broadcast %161 : vector<1x1xf32> to vector<1x128xf32>
    %163 = arith.select %160, %162, %158 : vector<1x128xi1>, vector<1x128xf32>
    %c5_i32 = arith.constant 5 : i32
    %164 = vector.broadcast %c5_i32 : i32 to vector<1x128xi32>
    %165 = arith.cmpi eq, %137, %164 : vector<1x128xi32>
    %166 = vector.shape_cast %101 : vector<1x1xf32> to vector<1x1xf32>
    %167 = vector.broadcast %166 : vector<1x1xf32> to vector<1x128xf32>
    %168 = arith.select %165, %167, %163 : vector<1x128xi1>, vector<1x128xf32>
    %c6_i32 = arith.constant 6 : i32
    %169 = vector.broadcast %c6_i32 : i32 to vector<1x128xi32>
    %170 = arith.cmpi eq, %137, %169 : vector<1x128xi32>
    %171 = vector.shape_cast %106 : vector<1x1xf32> to vector<1x1xf32>
    %172 = vector.broadcast %171 : vector<1x1xf32> to vector<1x128xf32>
    %173 = arith.select %170, %172, %168 : vector<1x128xi1>, vector<1x128xf32>
    %c0_25 = arith.constant 0 : index
    %c0_26 = arith.constant 0 : index
    %174 = vector.load %arg5[%c0_25, %c0_26] : memref<1x128xf32, #tpu.memory_space<vmem>>, vector<1x128xf32>
    tpu.vector_store %arg5[%c0_25, %c0_26], %173 {strides = array<i32>} : memref<1x128xf32, #tpu.memory_space<vmem>>, vector<1x128xf32>,
    return
  }
}

</mosaic_0001>

<llo_original>
// kernel: squeeze.1
$region0: #{squeeze.1}
  %s0 = inlined_call_operand.vmem [shape: f32[1024], index: 0, kind: input, shape index: {}]
  %s1 = inlined_call_operand.vmem [shape: f32[4,256], index: 1, kind: output, shape index: {}]
  $region1: #{squeeze.1} parent=0
    #allocation0 [shape = 'u8[8192]{0}', space=vmem, size = 0x2000, scoped, tag = 'scoped mem for output reshape']
    %v2 = vld [vmem:[%s0] sm:$0xff]
    %3 = vst [vmem:[#allocation0] ss:$8 sm:$0x3] %v2
    %s4 = scalar_lea.vmem [#allocation0], 4294967281
    %5 = vst [vmem:[%s4] ss:$8 sm:$0xc] %v2
    %s6 = scalar_lea.vmem [#allocation0], 4294967266
    %7 = vst [vmem:[%s6] ss:$8 sm:$0x30] %v2
    %s8 = scalar_lea.vmem [#allocation0], 4294967251
    %9 = vst [vmem:[%s8] ss:$8 sm:$0xc0] %v2
    %s11 = sshllo.u32 0, 4
    %v13 = vld [vmem:[#allocation0] sm:%s11]
    %s14 = sshllo.u32 0, 4
    %15 = vst [vmem:[%s1] sm:%s14] %v13
    %s16 = scalar_lea.vmem [#allocation0], 8
    %v17 = vld [vmem:[%s16] sm:%s11]
    %s18 = sshllo.u32 0, 4
    %s19 = scalar_lea.vmem %s1, 4
    %20 = vst [vmem:[%s19] sm:%s18] %v17

// kernel: _nngd_forward.1
$region0: #{_nngd_forward.1}
  #allocation0 [shape = 'u32[]', space=smem, size = 0x4, offset = 0x4, fixed_abs, tag = 'smem constant byte address 0x4 - core index']
  #allocation1 [shape = 'u32[144,128]{1,0:T(1,128)}', space=vmem, size = 0x12000, scoped, tag = 'internal scratch']
  #allocation2 [shape = 'bf16[512,512]{1,0:T(16,128)(2,1)}', space=vmem, size = 0x80000, scoped, tag = 'scratch operand']
  #allocation3 [shape = 's32[1]{0}', space=sflag, size = 0x4, scoped, tag = 'scratch operand']
  #allocation6 [shape = 's32[]', space=sflag, size = 0x4, offset = 0, fixed_abs, tag = 'sflag constant byte address 0x0 - dummy sync flag']
  %s0 = inlined_call_operand.vmem [shape: f32[4,256], index: 0, kind: input, shape index: {}]
  %s1 = inlined_call_operand.vmem [shape: bf16[256,1024], index: 1, kind: input, shape index: {}]
  %s2 = inlined_call_operand.vmem [shape: bf16[512,512], index: 2, kind: input, shape index: {}]
  %s3 = inlined_call_operand.vmem [shape: f32[16,256], index: 3, kind: input, shape index: {}]
  %s4 = inlined_call_operand.vmem [shape: f32[16,256], index: 4, kind: input, shape index: {}]
  %s5 = inlined_call_operand.hbm [shape: f32[1,128], index: 5, kind: output, shape index: {}]
  %s6 = sld [smem:[#allocation0]]
  $region63: #{_nngd_forward.1} parent=0
    _
  %s8 = ssub.s32 1, %s6
  %s9 = scalar_select 0, %s8, %s6
  $region1: #{_nngd_forward.1} parent=0
    #allocation4 [shape = 'u8[512]{0}', space=vmem, size = 0x400, scoped, tag = 'output window, operand 0, single buffered']
    #allocation5 [shape = 's32[1]{0}', space=sflag, size = 0x4, scoped, tag = 'scoped memory for _nngd_forward.1']
    %10 = vsyncpa [#allocation5], 0
    // Predicated region
    $region2: #{_nngd_forward.1} parent=1 // pred_check
      _
    $region3: #{_nngd_forward.1} parent=1 // pred_check_branch
      %12 = sbr.rel (0) target = $region5
    $region4: #{_nngd_forward.1} parent=1 // pred_region
      _
    $region5: #{_nngd_forward.1} parent=1 // pred_fallthru
      _
    // Predicated region
    $region6: #{_nngd_forward.1} parent=1 // pred_check
      _
    $region7: #{_nngd_forward.1} parent=1 // pred_check_branch
      %14 = sbr.rel (0) target = $region9
    $region8: #{_nngd_forward.1} parent=1 // pred_region
      _
    $region9: #{_nngd_forward.1} parent=1 // pred_fallthru
      _
    // Predicated region
    $region10: #{_nngd_forward.1} parent=1 // pred_check
      _
    $region11: #{_nngd_forward.1} parent=1 // pred_check_branch
      %16 = sbr.rel (0) target = $region13
    $region12: #{_nngd_forward.1} parent=1 // pred_region
      _
    $region13: #{_nngd_forward.1} parent=1 // pred_fallthru
      _
    // Predicated region
    $region14: #{_nngd_forward.1} parent=1 // pred_check
      _
    $region15: #{_nngd_forward.1} parent=1 // pred_check_branch
      %18 = sbr.rel (0) target = $region17
    $region16: #{_nngd_forward.1} parent=1 // pred_region
      _
    $region17: #{_nngd_forward.1} parent=1 // pred_fallthru
      _
    %p20 = scmp.lt.u32.totalorder 4, 8
    %p21 = pneg %p20
    // Predicated region
    $region18: #{_nngd_forward.1} parent=1 // pred_check
      _
    $region19: #{_nngd_forward.1} parent=1 // pred_check_branch
      %23 = sbr.rel (%p20) target = $region21
    $region20: #{_nngd_forward.1} parent=1 // pred_region
      %s548 = sand.u32 4, 7
      %p549 = scmp.eq.s32.totalorder %s548, 0
      %p550 = pneg %p549
      // Predicated region
      $region33: #{_nngd_forward.1} parent=20 // pred_check
        _
      $region34: #{_nngd_forward.1} parent=20 // pred_check_branch
        %552 = sbr.rel (%p549) target = $region36
      $region35: #{_nngd_forward.1} parent=20 // pred_region
        %s553 = sand.u32 4, 7
        %s554 = ssub.s32 4, %s553
        %s555 = scalar_lea.vmem %s2, %s554
        %s556 = ssub.s32 4, %s553
        %s557 = scalar_lea.vmem [#allocation2], %s556
        loop: start=0, step=1, limit=1
        $region37: #{_nngd_forward.1} parent=35 // loop_pre_header
          _
        $region38: #{_nngd_forward.1} parent=35 // loop_header
          %s559 = sphi 0, %s563
          %p560 = scmp.ge.s32.totalorder %s559, 1
          %s564 = sphi %s2, %s2
          %s565 = sphi [#allocation2], [#allocation2]
        $region39: #{_nngd_forward.1} parent=35 // loop_header_branch
          %562 = sbr.rel (%p560) target = $region43
        $region40: #{_nngd_forward.1} parent=35 // loop_body
          _
        $region41: #{_nngd_forward.1} parent=35 // loop_footer
          %s563 = sadd.s32 1, %s559
        $region42: #{_nngd_forward.1} parent=35 // loop_footer_branch
          %558 = sbr.rel target = $region38
        $region43: #{_nngd_forward.1} parent=35 // loop_exit
          _
        %s566 = sshllo.u32 0, %s553
        loop: start=0, step=1, limit=1
        $region44: #{_nngd_forward.1} parent=35 // loop_pre_header
          _
        $region45: #{_nngd_forward.1} parent=35 // loop_header
          %s568 = sphi 0, %s572
          %p569 = scmp.ge.s32.totalorder %s568, 1
          %s573 = sphi %s555, %s555
          %s574 = sphi %s557, %s557
        $region46: #{_nngd_forward.1} parent=35 // loop_header_branch
          %571 = sbr.rel (%p569) target = $region50
        $region47: #{_nngd_forward.1} parent=35 // loop_body
          %v575 = vld [vmem:[%s573] sm:%s566]
          %576 = vst [vmem:[%s574] sm:%s566] %v575
          %v577 = vld [vmem:[%s573 + $0x10] sm:%s566]
          %578 = vst [vmem:[%s574 + $0x4] sm:%s566] %v577
          %v579 = vld [vmem:[%s573 + $0x4] sm:%s566]
          %580 = vst [vmem:[%s574 + $0x8] sm:%s566] %v579
          %v581 = vld [vmem:[%s573 + $0x14] sm:%s566]
          %582 = vst [vmem:[%s574 + $0xc] sm:%s566] %v581
          %v583 = vld [vmem:[%s573 + $0x8] sm:%s566]
          %584 = vst [vmem:[%s574 + $0x10] sm:%s566] %v583
          %v585 = vld [vmem:[%s573 + $0x18] sm:%s566]
          %586 = vst [vmem:[%s574 + $0x14] sm:%s566] %v585
          %v587 = vld [vmem:[%s573 + $0xc] sm:%s566]
          %588 = vst [vmem:[%s574 + $0x18] sm:%s566] %v587
          %v589 = vld [vmem:[%s573 + $0x1c] sm:%s566]
          %590 = vst [vmem:[%s574 + $0x1c] sm:%s566] %v589
          %v591 = vld [vmem:[%s573 + $0x20] sm:%s566]
          %592 = vst [vmem:[%s574 + $0x20] sm:%s566] %v591
          %v593 = vld [vmem:[%s573 + $0x30] sm:%s566]
          %594 = vst [vmem:[%s574 + $0x24] sm:%s566] %v593
          %v595 = vld [vmem:[%s573 + $0x24] sm:%s566]
          %596 = vst [vmem:[%s574 + $0x28] sm:%s566] %v595
          %v597 = vld [vmem:[%s573 + $0x34] sm:%s566]
          %598 = vst [vmem:[%s574 + $0x2c] sm:%s566] %v597
          %v599 = vld [vmem:[%s573 + $0x28] sm:%s566]
          %600 = vst [vmem:[%s574 + $0x30] sm:%s566] %v599
          %v601 = vld [vmem:[%s573 + $0x38] sm:%s566]
          %602 = vst [vmem:[%s574 + $0x34] sm:%s566] %v601
          %v603 = vld [vmem:[%s573 + $0x2c] sm:%s566]
          %604 = vst [vmem:[%s574 + $0x38] sm:%s566] %v603
          %v605 = vld [vmem:[%s573 + $0x3c] sm:%s566]
          %606 = vst [vmem:[%s574 + $0x3c] sm:%s566] %v605
          %v607 = vld [vmem:[%s573 + $0x40] sm:%s566]
          %608 = vst [vmem:[%s574 + $0x40] sm:%s566] %v607
          %v609 = vld [vmem:[%s573 + $0x50] sm:%s566]
          %610 = vst [vmem:[%s574 + $0x44] sm:%s566] %v609
          %v611 = vld [vmem:[%s573 + $0x44] sm:%s566]
          %612 = vst [vmem:[%s574 + $0x48] sm:%s566] %v611
          %v613 = vld [vmem:[%s573 + $0x54] sm:%s566]
          %614 = vst [vmem:[%s574 + $0x4c] sm:%s566] %v613
          %v615 = vld [vmem:[%s573 + $0x48] sm:%s566]
          %616 = vst [vmem:[%s574 + $0x50] sm:%s566] %v615
          %v617 = vld [vmem:[%s573 + $0x58] sm:%s566]
          %618 = vst [vmem:[%s574 + $0x54] sm:%s566] %v617
          %v619 = vld [vmem:[%s573 + $0x4c] sm:%s566]
          %620 = vst [vmem:[%s574 + $0x58] sm:%s566] %v619
          %v621 = vld [vmem:[%s573 + $0x5c] sm:%s566]
          %622 = vst [vmem:[%s574 + $0x5c] sm:%s566] %v621
          %v623 = vld [vmem:[%s573 + $0x60] sm:%s566]
          %624 = vst [vmem:[%s574 + $0x60] sm:%s566] %v623
          %v625 = vld [vmem:[%s573 + $0x70] sm:%s566]
          %626 = vst [vmem:[%s574 + $0x64] sm:%s566] %v625
          %v627 = vld [vmem:[%s573 + $0x64] sm:%s566]
          %628 = vst [vmem:[%s574 + $0x68] sm:%s566] %v627
          %v629 = vld [vmem:[%s573 + $0x74] sm:%s566]
          %630 = vst [vmem:[%s574 + $0x6c] sm:%s566] %v629
          %v631 = vld [vmem:[%s573 + $0x68] sm:%s566]
          %632 = vst [vmem:[%s574 + $0x70] sm:%s566] %v631
          %v633 = vld [vmem:[%s573 + $0x78] sm:%s566]
          %634 = vst [vmem:[%s574 + $0x74] sm:%s566] %v633
          %v635 = vld [vmem:[%s573 + $0x6c] sm:%s566]
          %636 = vst [vmem:[%s574 + $0x78] sm:%s566] %v635
          %v637 = vld [vmem:[%s573 + $0x7c] sm:%s566]
          %638 = vst [vmem:[%s574 + $0x7c] sm:%s566] %v637
          %v639 = vld [vmem:[%s573 + $0x80] sm:%s566]
          %640 = vst [vmem:[%s574 + $0x80] sm:%s566] %v639
          %v641 = vld [vmem:[%s573 + $0x90] sm:%s566]
          %642 = vst [vmem:[%s574 + $0x84] sm:%s566] %v641
          %v643 = vld [vmem:[%s573 + $0x84] sm:%s566]
          %644 = vst [vmem:[%s574 + $0x88] sm:%s566] %v643
          %v645 = vld [vmem:[%s573 + $0x94] sm:%s566]
          %646 = vst [vmem:[%s574 + $0x8c] sm:%s566] %v645
          %v647 = vld [vmem:[%s573 + $0x88] sm:%s566]
          %648 = vst [vmem:[%s574 + $0x90] sm:%s566] %v647
          %v649 = vld [vmem:[%s573 + $0x98] sm:%s566]
          %650 = vst [vmem:[%s574 + $0x94] sm:%s566] %v649
          %v651 = vld [vmem:[%s573 + $0x8c] sm:%s566]
          %652 = vst [vmem:[%s574 + $0x98] sm:%s566] %v651
          %v653 = vld [vmem:[%s573 + $0x9c] sm:%s566]
          %654 = vst [vmem:[%s574 + $0x9c] sm:%s566] %v653
          %v655 = vld [vmem:[%s573 + $0xa0] sm:%s566]
          %656 = vst [vmem:[%s574 + $0xa0] sm:%s566] %v655
          %v657 = vld [vmem:[%s573 + $0xb0] sm:%s566]
          %658 = vst [vmem:[%s574 + $0xa4] sm:%s566] %v657
          %v659 = vld [vmem:[%s573 + $0xa4] sm:%s566]
          %660 = vst [vmem:[%s574 + $0xa8] sm:%s566] %v659
          %v661 = vld [vmem:[%s573 + $0xb4] sm:%s566]
          %662 = vst [vmem:[%s574 + $0xac] sm:%s566] %v661
          %v663 = vld [vmem:[%s573 + $0xa8] sm:%s566]
          %664 = vst [vmem:[%s574 + $0xb0] sm:%s566] %v663
          %v665 = vld [vmem:[%s573 + $0xb8] sm:%s566]
          %666 = vst [vmem:[%s574 + $0xb4] sm:%s566] %v665
          %v667 = vld [vmem:[%s573 + $0xac] sm:%s566]
          %668 = vst [vmem:[%s574 + $0xb8] sm:%s566] %v667
          %v669 = vld [vmem:[%s573 + $0xbc] sm:%s566]
          %670 = vst [vmem:[%s574 + $0xbc] sm:%s566] %v669
          %v671 = vld [vmem:[%s573 + $0xc0] sm:%s566]
          %672 = vst [vmem:[%s574 + $0xc0] sm:%s566] %v671
          %v673 = vld [vmem:[%s573 + $0xd0] sm:%s566]
          %674 = vst [vmem:[%s574 + $0xc4] sm:%s566] %v673
          %v675 = vld [vmem:[%s573 + $0xc4] sm:%s566]
          %676 = vst [vmem:[%s574 + $0xc8] sm:%s566] %v675
          %v677 = vld [vmem:[%s573 + $0xd4] sm:%s566]
          %678 = vst [vmem:[%s574 + $0xcc] sm:%s566] %v677
          %v679 = vld [vmem:[%s573 + $0xc8] sm:%s566]
          %680 = vst [vmem:[%s574 + $0xd0] sm:%s566] %v679
          %v681 = vld [vmem:[%s573 + $0xd8] sm:%s566]
          %682 = vst [vmem:[%s574 + $0xd4] sm:%s566] %v681
          %v683 = vld [vmem:[%s573 + $0xcc] sm:%s566]
          %684 = vst [vmem:[%s574 + $0xd8] sm:%s566] %v683
          %v685 = vld [vmem:[%s573 + $0xdc] sm:%s566]
          %686 = vst [vmem:[%s574 + $0xdc] sm:%s566] %v685
          %v687 = vld [vmem:[%s573 + $0xe0] sm:%s566]
          %688 = vst [vmem:[%s574 + $0xe0] sm:%s566] %v687
          %v689 = vld [vmem:[%s573 + $0xf0] sm:%s566]
          %690 = vst [vmem:[%s574 + $0xe4] sm:%s566] %v689
          %v691 = vld [vmem:[%s573 + $0xe4] sm:%s566]
          %692 = vst [vmem:[%s574 + $0xe8] sm:%s566] %v691
          %v693 = vld [vmem:[%s573 + $0xf4] sm:%s566]
          %694 = vst [vmem:[%s574 + $0xec] sm:%s566] %v693
          %v695 = vld [vmem:[%s573 + $0xe8] sm:%s566]
          %696 = vst [vmem:[%s574 + $0xf0] sm:%s566] %v695
          %v697 = vld [vmem:[%s573 + $0xf8] sm:%s566]
          %698 = vst [vmem:[%s574 + $0xf4] sm:%s566] %v697
          %v699 = vld [vmem:[%s573 + $0xec] sm:%s566]
          %700 = vst [vmem:[%s574 + $0xf8] sm:%s566] %v699
          %v701 = vld [vmem:[%s573 + $0xfc] sm:%s566]
          %702 = vst [vmem:[%s574 + $0xfc] sm:%s566] %v701
          %v703 = vld [vmem:[%s573 + $0x100] sm:%s566]
          %704 = vst [vmem:[%s574 + $0x100] sm:%s566] %v703
          %v705 = vld [vmem:[%s573 + $0x110] sm:%s566]
          %706 = vst [vmem:[%s574 + $0x104] sm:%s566] %v705
          %v707 = vld [vmem:[%s573 + $0x104] sm:%s566]
          %708 = vst [vmem:[%s574 + $0x108] sm:%s566] %v707
          %v709 = vld [vmem:[%s573 + $0x114] sm:%s566]
          %710 = vst [vmem:[%s574 + $0x10c] sm:%s566] %v709
          %v711 = vld [vmem:[%s573 + $0x108] sm:%s566]
          %712 = vst [vmem:[%s574 + $0x110] sm:%s566] %v711
          %v713 = vld [vmem:[%s573 + $0x118] sm:%s566]
          %714 = vst [vmem:[%s574 + $0x114] sm:%s566] %v713
          %v715 = vld [vmem:[%s573 + $0x10c] sm:%s566]
          %716 = vst [vmem:[%s574 + $0x118] sm:%s566] %v715
          %v717 = vld [vmem:[%s573 + $0x11c] sm:%s566]
          %718 = vst [vmem:[%s574 + $0x11c] sm:%s566] %v717
          %v719 = vld [vmem:[%s573 + $0x120] sm:%s566]
          %720 = vst [vmem:[%s574 + $0x120] sm:%s566] %v719
          %v721 = vld [vmem:[%s573 + $0x130] sm:%s566]
          %722 = vst [vmem:[%s574 + $0x124] sm:%s566] %v721
          %v723 = vld [vmem:[%s573 + $0x124] sm:%s566]
          %724 = vst [vmem:[%s574 + $0x128] sm:%s566] %v723
          %v725 = vld [vmem:[%s573 + $0x134] sm:%s566]
          %726 = vst [vmem:[%s574 + $0x12c] sm:%s566] %v725
          %v727 = vld [vmem:[%s573 + $0x128] sm:%s566]
          %728 = vst [vmem:[%s574 + $0x130] sm:%s566] %v727
          %v729 = vld [vmem:[%s573 + $0x138] sm:%s566]
          %730 = vst [vmem:[%s574 + $0x134] sm:%s566] %v729
          %v731 = vld [vmem:[%s573 + $0x12c] sm:%s566]
          %732 = vst [vmem:[%s574 + $0x138] sm:%s566] %v731
          %v733 = vld [vmem:[%s573 + $0x13c] sm:%s566]
          %734 = vst [vmem:[%s574 + $0x13c] sm:%s566] %v733
          %v735 = vld [vmem:[%s573 + $0x140] sm:%s566]
          %736 = vst [vmem:[%s574 + $0x140] sm:%s566] %v735
          %v737 = vld [vmem:[%s573 + $0x150] sm:%s566]
          %738 = vst [vmem:[%s574 + $0x144] sm:%s566] %v737
          %v739 = vld [vmem:[%s573 + $0x144] sm:%s566]
          %740 = vst [vmem:[%s574 + $0x148] sm:%s566] %v739
          %v741 = vld [vmem:[%s573 + $0x154] sm:%s566]
          %742 = vst [vmem:[%s574 + $0x14c] sm:%s566] %v741
          %v743 = vld [vmem:[%s573 + $0x148] sm:%s566]
          %744 = vst [vmem:[%s574 + $0x150] sm:%s566] %v743
          %v745 = vld [vmem:[%s573 + $0x158] sm:%s566]
          %746 = vst [vmem:[%s574 + $0x154] sm:%s566] %v745
          %v747 = vld [vmem:[%s573 + $0x14c] sm:%s566]
          %748 = vst [vmem:[%s574 + $0x158] sm:%s566] %v747
          %v749 = vld [vmem:[%s573 + $0x15c] sm:%s566]
          %750 = vst [vmem:[%s574 + $0x15c] sm:%s566] %v749
          %v751 = vld [vmem:[%s573 + $0x160] sm:%s566]
          %752 = vst [vmem:[%s574 + $0x160] sm:%s566] %v751
          %v753 = vld [vmem:[%s573 + $0x170] sm:%s566]
          %754 = vst [vmem:[%s574 + $0x164] sm:%s566] %v753
          %v755 = vld [vmem:[%s573 + $0x164] sm:%s566]
          %756 = vst [vmem:[%s574 + $0x168] sm:%s566] %v755
          %v757 = vld [vmem:[%s573 + $0x174] sm:%s566]
          %758 = vst [vmem:[%s574 + $0x16c] sm:%s566] %v757
          %v759 = vld [vmem:[%s573 + $0x168] sm:%s566]
          %760 = vst [vmem:[%s574 + $0x170] sm:%s566] %v759
          %v761 = vld [vmem:[%s573 + $0x178] sm:%s566]
          %762 = vst [vmem:[%s574 + $0x174] sm:%s566] %v761
          %v763 = vld [vmem:[%s573 + $0x16c] sm:%s566]
          %764 = vst [vmem:[%s574 + $0x178] sm:%s566] %v763
          %v765 = vld [vmem:[%s573 + $0x17c] sm:%s566]
          %766 = vst [vmem:[%s574 + $0x17c] sm:%s566] %v765
          %v767 = vld [vmem:[%s573 + $0x180] sm:%s566]
          %768 = vst [vmem:[%s574 + $0x180] sm:%s566] %v767
          %v769 = vld [vmem:[%s573 + $0x190] sm:%s566]
          %770 = vst [vmem:[%s574 + $0x184] sm:%s566] %v769
          %v771 = vld [vmem:[%s573 + $0x184] sm:%s566]
          %772 = vst [vmem:[%s574 + $0x188] sm:%s566] %v771
          %v773 = vld [vmem:[%s573 + $0x194] sm:%s566]
          %774 = vst [vmem:[%s574 + $0x18c] sm:%s566] %v773
          %v775 = vld [vmem:[%s573 + $0x188] sm:%s566]
          %776 = vst [vmem:[%s574 + $0x190] sm:%s566] %v775
          %v777 = vld [vmem:[%s573 + $0x198] sm:%s566]
          %778 = vst [vmem:[%s574 + $0x194] sm:%s566] %v777
          %v779 = vld [vmem:[%s573 + $0x18c] sm:%s566]
          %780 = vst [vmem:[%s574 + $0x198] sm:%s566] %v779
          %v781 = vld [vmem:[%s573 + $0x19c] sm:%s566]
          %782 = vst [vmem:[%s574 + $0x19c] sm:%s566] %v781
          %v783 = vld [vmem:[%s573 + $0x1a0] sm:%s566]
          %784 = vst [vmem:[%s574 + $0x1a0] sm:%s566] %v783
          %v785 = vld [vmem:[%s573 + $0x1b0] sm:%s566]
          %786 = vst [vmem:[%s574 + $0x1a4] sm:%s566] %v785
          %v787 = vld [vmem:[%s573 + $0x1a4] sm:%s566]
          %788 = vst [vmem:[%s574 + $0x1a8] sm:%s566] %v787
          %v789 = vld [vmem:[%s573 + $0x1b4] sm:%s566]
          %790 = vst [vmem:[%s574 + $0x1ac] sm:%s566] %v789
          %v791 = vld [vmem:[%s573 + $0x1a8] sm:%s566]
          %792 = vst [vmem:[%s574 + $0x1b0] sm:%s566] %v791
          %v793 = vld [vmem:[%s573 + $0x1b8] sm:%s566]
          %794 = vst [vmem:[%s574 + $0x1b4] sm:%s566] %v793
          %v795 = vld [vmem:[%s573 + $0x1ac] sm:%s566]
          %796 = vst [vmem:[%s574 + $0x1b8] sm:%s566] %v795
          %v797 = vld [vmem:[%s573 + $0x1bc] sm:%s566]
          %798 = vst [vmem:[%s574 + $0x1bc] sm:%s566] %v797
          %v799 = vld [vmem:[%s573 + $0x1c0] sm:%s566]
          %800 = vst [vmem:[%s574 + $0x1c0] sm:%s566] %v799
          %v801 = vld [vmem:[%s573 + $0x1d0] sm:%s566]
          %802 = vst [vmem:[%s574 + $0x1c4] sm:%s566] %v801
          %v803 = vld [vmem:[%s573 + $0x1c4] sm:%s566]
          %804 = vst [vmem:[%s574 + $0x1c8] sm:%s566] %v803
          %v805 = vld [vmem:[%s573 + $0x1d4] sm:%s566]
          %806 = vst [vmem:[%s574 + $0x1cc] sm:%s566] %v805
          %v807 = vld [vmem:[%s573 + $0x1c8] sm:%s566]
          %808 = vst [vmem:[%s574 + $0x1d0] sm:%s566] %v807
          %v809 = vld [vmem:[%s573 + $0x1d8] sm:%s566]
          %810 = vst [vmem:[%s574 + $0x1d4] sm:%s566] %v809
          %v811 = vld [vmem:[%s573 + $0x1cc] sm:%s566]
          %812 = vst [vmem:[%s574 + $0x1d8] sm:%s566] %v811
          %v813 = vld [vmem:[%s573 + $0x1dc] sm:%s566]
          %814 = vst [vmem:[%s574 + $0x1dc] sm:%s566] %v813
          %v815 = vld [vmem:[%s573 + $0x1e0] sm:%s566]
          %816 = vst [vmem:[%s574 + $0x1e0] sm:%s566] %v815
          %v817 = vld [vmem:[%s573 + $0x1f0] sm:%s566]
          %818 = vst [vmem:[%s574 + $0x1e4] sm:%s566] %v817
          %v819 = vld [vmem:[%s573 + $0x1e4] sm:%s566]
          %820 = vst [vmem:[%s574 + $0x1e8] sm:%s566] %v819
          %v821 = vld [vmem:[%s573 + $0x1f4] sm:%s566]
          %822 = vst [vmem:[%s574 + $0x1ec] sm:%s566] %v821
          %v823 = vld [vmem:[%s573 + $0x1e8] sm:%s566]
          %824 = vst [vmem:[%s574 + $0x1f0] sm:%s566] %v823
          %v825 = vld [vmem:[%s573 + $0x1f8] sm:%s566]
          %826 = vst [vmem:[%s574 + $0x1f4] sm:%s566] %v825
          %v827 = vld [vmem:[%s573 + $0x1ec] sm:%s566]
          %828 = vst [vmem:[%s574 + $0x1f8] sm:%s566] %v827
          %v829 = vld [vmem:[%s573 + $0x1fc] sm:%s566]
          %830 = vst [vmem:[%s574 + $0x1fc] sm:%s566] %v829
          %v831 = vld [vmem:[%s573 + $0x200] sm:%s566]
          %832 = vst [vmem:[%s574 + $0x200] sm:%s566] %v831
          %v833 = vld [vmem:[%s573 + $0x210] sm:%s566]
          %834 = vst [vmem:[%s574 + $0x204] sm:%s566] %v833
          %v835 = vld [vmem:[%s573 + $0x204] sm:%s566]
          %836 = vst [vmem:[%s574 + $0x208] sm:%s566] %v835
          %v837 = vld [vmem:[%s573 + $0x214] sm:%s566]
          %838 = vst [vmem:[%s574 + $0x20c] sm:%s566] %v837
          %v839 = vld [vmem:[%s573 + $0x208] sm:%s566]
          %840 = vst [vmem:[%s574 + $0x210] sm:%s566] %v839
          %v841 = vld [vmem:[%s573 + $0x218] sm:%s566]
          %842 = vst [vmem:[%s574 + $0x214] sm:%s566] %v841
          %v843 = vld [vmem:[%s573 + $0x20c] sm:%s566]
          %844 = vst [vmem:[%s574 + $0x218] sm:%s566] %v843
          %v845 = vld [vmem:[%s573 + $0x21c] sm:%s566]
          %846 = vst [vmem:[%s574 + $0x21c] sm:%s566] %v845
          %v847 = vld [vmem:[%s573 + $0x220] sm:%s566]
          %848 = vst [vmem:[%s574 + $0x220] sm:%s566] %v847
          %v849 = vld [vmem:[%s573 + $0x230] sm:%s566]
          %850 = vst [vmem:[%s574 + $0x224] sm:%s566] %v849
          %v851 = vld [vmem:[%s573 + $0x224] sm:%s566]
          %852 = vst [vmem:[%s574 + $0x228] sm:%s566] %v851
          %v853 = vld [vmem:[%s573 + $0x234] sm:%s566]
          %854 = vst [vmem:[%s574 + $0x22c] sm:%s566] %v853
          %v855 = vld [vmem:[%s573 + $0x228] sm:%s566]
          %856 = vst [vmem:[%s574 + $0x230] sm:%s566] %v855
          %v857 = vld [vmem:[%s573 + $0x238] sm:%s566]
          %858 = vst [vmem:[%s574 + $0x234] sm:%s566] %v857
          %v859 = vld [vmem:[%s573 + $0x22c] sm:%s566]
          %860 = vst [vmem:[%s574 + $0x238] sm:%s566] %v859
          %v861 = vld [vmem:[%s573 + $0x23c] sm:%s566]
          %862 = vst [vmem:[%s574 + $0x23c] sm:%s566] %v861
          %v863 = vld [vmem:[%s573 + $0x240] sm:%s566]
          %864 = vst [vmem:[%s574 + $0x240] sm:%s566] %v863
          %v865 = vld [vmem:[%s573 + $0x250] sm:%s566]
          %866 = vst [vmem:[%s574 + $0x244] sm:%s566] %v865
          %v867 = vld [vmem:[%s573 + $0x244] sm:%s566]
          %868 = vst [vmem:[%s574 + $0x248] sm:%s566] %v867
          %v869 = vld [vmem:[%s573 + $0x254] sm:%s566]
          %870 = vst [vmem:[%s574 + $0x24c] sm:%s566] %v869
          %v871 = vld [vmem:[%s573 + $0x248] sm:%s566]
          %872 = vst [vmem:[%s574 + $0x250] sm:%s566] %v871
          %v873 = vld [vmem:[%s573 + $0x258] sm:%s566]
          %874 = vst [vmem:[%s574 + $0x254] sm:%s566] %v873
          %v875 = vld [vmem:[%s573 + $0x24c] sm:%s566]
          %876 = vst [vmem:[%s574 + $0x258] sm:%s566] %v875
          %v877 = vld [vmem:[%s573 + $0x25c] sm:%s566]
          %878 = vst [vmem:[%s574 + $0x25c] sm:%s566] %v877
          %v879 = vld [vmem:[%s573 + $0x260] sm:%s566]
          %880 = vst [vmem:[%s574 + $0x260] sm:%s566] %v879
          %v881 = vld [vmem:[%s573 + $0x270] sm:%s566]
          %882 = vst [vmem:[%s574 + $0x264] sm:%s566] %v881
          %v883 = vld [vmem:[%s573 + $0x264] sm:%s566]
          %884 = vst [vmem:[%s574 + $0x268] sm:%s566] %v883
          %v885 = vld [vmem:[%s573 + $0x274] sm:%s566]
          %886 = vst [vmem:[%s574 + $0x26c] sm:%s566] %v885
          %v887 = vld [vmem:[%s573 + $0x268] sm:%s566]
          %888 = vst [vmem:[%s574 + $0x270] sm:%s566] %v887
          %v889 = vld [vmem:[%s573 + $0x278] sm:%s566]
          %890 = vst [vmem:[%s574 + $0x274] sm:%s566] %v889
          %v891 = vld [vmem:[%s573 + $0x26c] sm:%s566]
          %892 = vst [vmem:[%s574 + $0x278] sm:%s566] %v891
          %v893 = vld [vmem:[%s573 + $0x27c] sm:%s566]
          %894 = vst [vmem:[%s574 + $0x27c] sm:%s566] %v893
          %v895 = vld [vmem:[%s573 + $0x280] sm:%s566]
          %896 = vst [vmem:[%s574 + $0x280] sm:%s566] %v895
          %v897 = vld [vmem:[%s573 + $0x290] sm:%s566]
          %898 = vst [vmem:[%s574 + $0x284] sm:%s566] %v897
          %v899 = vld [vmem:[%s573 + $0x284] sm:%s566]
          %900 = vst [vmem:[%s574 + $0x288] sm:%s566] %v899
          %v901 = vld [vmem:[%s573 + $0x294] sm:%s566]
          %902 = vst [vmem:[%s574 + $0x28c] sm:%s566] %v901
          %v903 = vld [vmem:[%s573 + $0x288] sm:%s566]
          %904 = vst [vmem:[%s574 + $0x290] sm:%s566] %v903
          %v905 = vld [vmem:[%s573 + $0x298] sm:%s566]
          %906 = vst [vmem:[%s574 + $0x294] sm:%s566] %v905
          %v907 = vld [vmem:[%s573 + $0x28c] sm:%s566]
          %908 = vst [vmem:[%s574 + $0x298] sm:%s566] %v907
          %v909 = vld [vmem:[%s573 + $0x29c] sm:%s566]
          %910 = vst [vmem:[%s574 + $0x29c] sm:%s566] %v909
          %v911 = vld [vmem:[%s573 + $0x2a0] sm:%s566]
          %912 = vst [vmem:[%s574 + $0x2a0] sm:%s566] %v911
          %v913 = vld [vmem:[%s573 + $0x2b0] sm:%s566]
          %914 = vst [vmem:[%s574 + $0x2a4] sm:%s566] %v913
          %v915 = vld [vmem:[%s573 + $0x2a4] sm:%s566]
          %916 = vst [vmem:[%s574 + $0x2a8] sm:%s566] %v915
          %v917 = vld [vmem:[%s573 + $0x2b4] sm:%s566]
          %918 = vst [vmem:[%s574 + $0x2ac] sm:%s566] %v917
          %v919 = vld [vmem:[%s573 + $0x2a8] sm:%s566]
          %920 = vst [vmem:[%s574 + $0x2b0] sm:%s566] %v919
          %v921 = vld [vmem:[%s573 + $0x2b8] sm:%s566]
          %922 = vst [vmem:[%s574 + $0x2b4] sm:%s566] %v921
          %v923 = vld [vmem:[%s573 + $0x2ac] sm:%s566]
          %924 = vst [vmem:[%s574 + $0x2b8] sm:%s566] %v923
          %v925 = vld [vmem:[%s573 + $0x2bc] sm:%s566]
          %926 = vst [vmem:[%s574 + $0x2bc] sm:%s566] %v925
          %v927 = vld [vmem:[%s573 + $0x2c0] sm:%s566]
          %928 = vst [vmem:[%s574 + $0x2c0] sm:%s566] %v927
          %v929 = vld [vmem:[%s573 + $0x2d0] sm:%s566]
          %930 = vst [vmem:[%s574 + $0x2c4] sm:%s566] %v929
          %v931 = vld [vmem:[%s573 + $0x2c4] sm:%s566]
          %932 = vst [vmem:[%s574 + $0x2c8] sm:%s566] %v931
          %v933 = vld [vmem:[%s573 + $0x2d4] sm:%s566]
          %934 = vst [vmem:[%s574 + $0x2cc] sm:%s566] %v933
          %v935 = vld [vmem:[%s573 + $0x2c8] sm:%s566]
          %936 = vst [vmem:[%s574 + $0x2d0] sm:%s566] %v935
          %v937 = vld [vmem:[%s573 + $0x2d8] sm:%s566]
          %938 = vst [vmem:[%s574 + $0x2d4] sm:%s566] %v937
          %v939 = vld [vmem:[%s573 + $0x2cc] sm:%s566]
          %940 = vst [vmem:[%s574 + $0x2d8] sm:%s566] %v939
          %v941 = vld [vmem:[%s573 + $0x2dc] sm:%s566]
          %942 = vst [vmem:[%s574 + $0x2dc] sm:%s566] %v941
          %v943 = vld [vmem:[%s573 + $0x2e0] sm:%s566]
          %944 = vst [vmem:[%s574 + $0x2e0] sm:%s566] %v943
          %v945 = vld [vmem:[%s573 + $0x2f0] sm:%s566]
          %946 = vst [vmem:[%s574 + $0x2e4] sm:%s566] %v945
          %v947 = vld [vmem:[%s573 + $0x2e4] sm:%s566]
          %948 = vst [vmem:[%s574 + $0x2e8] sm:%s566] %v947
          %v949 = vld [vmem:[%s573 + $0x2f4] sm:%s566]
          %950 = vst [vmem:[%s574 + $0x2ec] sm:%s566] %v949
          %v951 = vld [vmem:[%s573 + $0x2e8] sm:%s566]
          %952 = vst [vmem:[%s574 + $0x2f0] sm:%s566] %v951
          %v953 = vld [vmem:[%s573 + $0x2f8] sm:%s566]
          %954 = vst [vmem:[%s574 + $0x2f4] sm:%s566] %v953
          %v955 = vld [vmem:[%s573 + $0x2ec] sm:%s566]
          %956 = vst [vmem:[%s574 + $0x2f8] sm:%s566] %v955
          %v957 = vld [vmem:[%s573 + $0x2fc] sm:%s566]
          %958 = vst [vmem:[%s574 + $0x2fc] sm:%s566] %v957
          %v959 = vld [vmem:[%s573 + $0x300] sm:%s566]
          %960 = vst [vmem:[%s574 + $0x300] sm:%s566] %v959
          %v961 = vld [vmem:[%s573 + $0x310] sm:%s566]
          %962 = vst [vmem:[%s574 + $0x304] sm:%s566] %v961
          %v963 = vld [vmem:[%s573 + $0x304] sm:%s566]
          %964 = vst [vmem:[%s574 + $0x308] sm:%s566] %v963
          %v965 = vld [vmem:[%s573 + $0x314] sm:%s566]
          %966 = vst [vmem:[%s574 + $0x30c] sm:%s566] %v965
          %v967 = vld [vmem:[%s573 + $0x308] sm:%s566]
          %968 = vst [vmem:[%s574 + $0x310] sm:%s566] %v967
          %v969 = vld [vmem:[%s573 + $0x318] sm:%s566]
          %970 = vst [vmem:[%s574 + $0x314] sm:%s566] %v969
          %v971 = vld [vmem:[%s573 + $0x30c] sm:%s566]
          %972 = vst [vmem:[%s574 + $0x318] sm:%s566] %v971
          %v973 = vld [vmem:[%s573 + $0x31c] sm:%s566]
          %974 = vst [vmem:[%s574 + $0x31c] sm:%s566] %v973
          %v975 = vld [vmem:[%s573 + $0x320] sm:%s566]
          %976 = vst [vmem:[%s574 + $0x320] sm:%s566] %v975
          %v977 = vld [vmem:[%s573 + $0x330] sm:%s566]
          %978 = vst [vmem:[%s574 + $0x324] sm:%s566] %v977
          %v979 = vld [vmem:[%s573 + $0x324] sm:%s566]
          %980 = vst [vmem:[%s574 + $0x328] sm:%s566] %v979
          %v981 = vld [vmem:[%s573 + $0x334] sm:%s566]
          %982 = vst [vmem:[%s574 + $0x32c] sm:%s566] %v981
          %v983 = vld [vmem:[%s573 + $0x328] sm:%s566]
          %984 = vst [vmem:[%s574 + $0x330] sm:%s566] %v983
          %v985 = vld [vmem:[%s573 + $0x338] sm:%s566]
          %986 = vst [vmem:[%s574 + $0x334] sm:%s566] %v985
          %v987 = vld [vmem:[%s573 + $0x32c] sm:%s566]
          %988 = vst [vmem:[%s574 + $0x338] sm:%s566] %v987
          %v989 = vld [vmem:[%s573 + $0x33c] sm:%s566]
          %990 = vst [vmem:[%s574 + $0x33c] sm:%s566] %v989
          %v991 = vld [vmem:[%s573 + $0x340] sm:%s566]
          %992 = vst [vmem:[%s574 + $0x340] sm:%s566] %v991
          %v993 = vld [vmem:[%s573 + $0x350] sm:%s566]
          %994 = vst [vmem:[%s574 + $0x344] sm:%s566] %v993
          %v995 = vld [vmem:[%s573 + $0x344] sm:%s566]
          %996 = vst [vmem:[%s574 + $0x348] sm:%s566] %v995
          %v997 = vld [vmem:[%s573 + $0x354] sm:%s566]
          %998 = vst [vmem:[%s574 + $0x34c] sm:%s566] %v997
          %v999 = vld [vmem:[%s573 + $0x348] sm:%s566]
          %1000 = vst [vmem:[%s574 + $0x350] sm:%s566] %v999
          %v1001 = vld [vmem:[%s573 + $0x358] sm:%s566]
          %1002 = vst [vmem:[%s574 + $0x354] sm:%s566] %v1001
          %v1003 = vld [vmem:[%s573 + $0x34c] sm:%s566]
          %1004 = vst [vmem:[%s574 + $0x358] sm:%s566] %v1003
          %v1005 = vld [vmem:[%s573 + $0x35c] sm:%s566]
          %1006 = vst [vmem:[%s574 + $0x35c] sm:%s566] %v1005
          %v1007 = vld [vmem:[%s573 + $0x360] sm:%s566]
          %1008 = vst [vmem:[%s574 + $0x360] sm:%s566] %v1007
          %v1009 = vld [vmem:[%s573 + $0x370] sm:%s566]
          %1010 = vst [vmem:[%s574 + $0x364] sm:%s566] %v1009
          %v1011 = vld [vmem:[%s573 + $0x364] sm:%s566]
          %1012 = vst [vmem:[%s574 + $0x368] sm:%s566] %v1011
          %v1013 = vld [vmem:[%s573 + $0x374] sm:%s566]
          %1014 = vst [vmem:[%s574 + $0x36c] sm:%s566] %v1013
          %v1015 = vld [vmem:[%s573 + $0x368] sm:%s566]
          %1016 = vst [vmem:[%s574 + $0x370] sm:%s566] %v1015
          %v1017 = vld [vmem:[%s573 + $0x378] sm:%s566]
          %1018 = vst [vmem:[%s574 + $0x374] sm:%s566] %v1017
          %v1019 = vld [vmem:[%s573 + $0x36c] sm:%s566]
          %1020 = vst [vmem:[%s574 + $0x378] sm:%s566] %v1019
          %v1021 = vld [vmem:[%s573 + $0x37c] sm:%s566]
          %1022 = vst [vmem:[%s574 + $0x37c] sm:%s566] %v1021
          %v1023 = vld [vmem:[%s573 + $0x380] sm:%s566]
          %1024 = vst [vmem:[%s574 + $0x380] sm:%s566] %v1023
          %v1025 = vld [vmem:[%s573 + $0x390] sm:%s566]
          %1026 = vst [vmem:[%s574 + $0x384] sm:%s566] %v1025
          %v1027 = vld [vmem:[%s573 + $0x384] sm:%s566]
          %1028 = vst [vmem:[%s574 + $0x388] sm:%s566] %v1027
          %v1029 = vld [vmem:[%s573 + $0x394] sm:%s566]
          %1030 = vst [vmem:[%s574 + $0x38c] sm:%s566] %v1029
          %v1031 = vld [vmem:[%s573 + $0x388] sm:%s566]
          %1032 = vst [vmem:[%s574 + $0x390] sm:%s566] %v1031
          %v1033 = vld [vmem:[%s573 + $0x398] sm:%s566]
          %1034 = vst [vmem:[%s574 + $0x394] sm:%s566] %v1033
          %v1035 = vld [vmem:[%s573 + $0x38c] sm:%s566]
          %1036 = vst [vmem:[%s574 + $0x398] sm:%s566] %v1035
          %v1037 = vld [vmem:[%s573 + $0x39c] sm:%s566]
          %1038 = vst [vmem:[%s574 + $0x39c] sm:%s566] %v1037
          %v1039 = vld [vmem:[%s573 + $0x3a0] sm:%s566]
          %1040 = vst [vmem:[%s574 + $0x3a0] sm:%s566] %v1039
          %v1041 = vld [vmem:[%s573 + $0x3b0] sm:%s566]
          %1042 = vst [vmem:[%s574 + $0x3a4] sm:%s566] %v1041
          %v1043 = vld [vmem:[%s573 + $0x3a4] sm:%s566]
          %1044 = vst [vmem:[%s574 + $0x3a8] sm:%s566] %v1043
          %v1045 = vld [vmem:[%s573 + $0x3b4] sm:%s566]
          %1046 = vst [vmem:[%s574 + $0x3ac] sm:%s566] %v1045
          %v1047 = vld [vmem:[%s573 + $0x3a8] sm:%s566]
          %1048 = vst [vmem:[%s574 + $0x3b0] sm:%s566] %v1047
          %v1049 = vld [vmem:[%s573 + $0x3b8] sm:%s566]
          %1050 = vst [vmem:[%s574 + $0x3b4] sm:%s566] %v1049
          %v1051 = vld [vmem:[%s573 + $0x3ac] sm:%s566]
          %1052 = vst [vmem:[%s574 + $0x3b8] sm:%s566] %v1051
          %v1053 = vld [vmem:[%s573 + $0x3bc] sm:%s566]
          %1054 = vst [vmem:[%s574 + $0x3bc] sm:%s566] %v1053
          %v1055 = vld [vmem:[%s573 + $0x3c0] sm:%s566]
          %1056 = vst [vmem:[%s574 + $0x3c0] sm:%s566] %v1055
          %v1057 = vld [vmem:[%s573 + $0x3d0] sm:%s566]
          %1058 = vst [vmem:[%s574 + $0x3c4] sm:%s566] %v1057
          %v1059 = vld [vmem:[%s573 + $0x3c4] sm:%s566]
          %1060 = vst [vmem:[%s574 + $0x3c8] sm:%s566] %v1059
          %v1061 = vld [vmem:[%s573 + $0x3d4] sm:%s566]
          %1062 = vst [vmem:[%s574 + $0x3cc] sm:%s566] %v1061
          %v1063 = vld [vmem:[%s573 + $0x3c8] sm:%s566]
          %1064 = vst [vmem:[%s574 + $0x3d0] sm:%s566] %v1063
          %v1065 = vld [vmem:[%s573 + $0x3d8] sm:%s566]
          %1066 = vst [vmem:[%s574 + $0x3d4] sm:%s566] %v1065
          %v1067 = vld [vmem:[%s573 + $0x3cc] sm:%s566]
          %1068 = vst [vmem:[%s574 + $0x3d8] sm:%s566] %v1067
          %v1069 = vld [vmem:[%s573 + $0x3dc] sm:%s566]
          %1070 = vst [vmem:[%s574 + $0x3dc] sm:%s566] %v1069
          %v1071 = vld [vmem:[%s573 + $0x3e0] sm:%s566]
          %1072 = vst [vmem:[%s574 + $0x3e0] sm:%s566] %v1071
          %v1073 = vld [vmem:[%s573 + $0x3f0] sm:%s566]
          %1074 = vst [vmem:[%s574 + $0x3e4] sm:%s566] %v1073
          %v1075 = vld [vmem:[%s573 + $0x3e4] sm:%s566]
          %1076 = vst [vmem:[%s574 + $0x3e8] sm:%s566] %v1075
          %v1077 = vld [vmem:[%s573 + $0x3f4] sm:%s566]
          %1078 = vst [vmem:[%s574 + $0x3ec] sm:%s566] %v1077
          %v1079 = vld [vmem:[%s573 + $0x3e8] sm:%s566]
          %1080 = vst [vmem:[%s574 + $0x3f0] sm:%s566] %v1079
          %v1081 = vld [vmem:[%s573 + $0x3f8] sm:%s566]
          %1082 = vst [vmem:[%s574 + $0x3f4] sm:%s566] %v1081
          %v1083 = vld [vmem:[%s573 + $0x3ec] sm:%s566]
          %1084 = vst [vmem:[%s574 + $0x3f8] sm:%s566] %v1083
          %v1085 = vld [vmem:[%s573 + $0x3fc] sm:%s566]
          %1086 = vst [vmem:[%s574 + $0x3fc] sm:%s566] %v1085
        $region48: #{_nngd_forward.1} parent=35 // loop_footer
          %s572 = sadd.s32 1, %s568
        $region49: #{_nngd_forward.1} parent=35 // loop_footer_branch
          %567 = sbr.rel target = $region45
        $region50: #{_nngd_forward.1} parent=35 // loop_exit
          _
      $region36: #{_nngd_forward.1} parent=20 // pred_fallthru
        _
    $region21: #{_nngd_forward.1} parent=1 // pred_fallthru
      _
    // Predicated region
    $region22: #{_nngd_forward.1} parent=1 // pred_check
      %p24 = pneg %p20
    $region23: #{_nngd_forward.1} parent=1 // pred_check_branch
      %26 = sbr.rel (%p24) target = $region25
    $region24: #{_nngd_forward.1} parent=1 // pred_region
      %s27 = sshllo.u32 0, 4
      loop: start=0, step=1, limit=1
      $region26: #{_nngd_forward.1} parent=24 // loop_pre_header
        _
      $region27: #{_nngd_forward.1} parent=24 // loop_header
        %s29 = sphi 0, %s33
        %p30 = scmp.ge.s32.totalorder %s29, 1
        %s34 = sphi %s2, %s2
        %s35 = sphi [#allocation2], [#allocation2]
      $region28: #{_nngd_forward.1} parent=24 // loop_header_branch
        %32 = sbr.rel (%p30) target = $region32
      $region29: #{_nngd_forward.1} parent=24 // loop_body
        %v36 = vld [vmem:[%s34] sm:%s27]
        %37 = vst [vmem:[%s35] sm:%s27] %v36
        %v38 = vld [vmem:[%s34 + $0x10] sm:%s27]
        %39 = vst [vmem:[%s35 + $0x4] sm:%s27] %v38
        %v40 = vld [vmem:[%s34 + $0x4] sm:%s27]
        %41 = vst [vmem:[%s35 + $0x8] sm:%s27] %v40
        %v42 = vld [vmem:[%s34 + $0x14] sm:%s27]
        %43 = vst [vmem:[%s35 + $0xc] sm:%s27] %v42
        %v44 = vld [vmem:[%s34 + $0x8] sm:%s27]
        %45 = vst [vmem:[%s35 + $0x10] sm:%s27] %v44
        %v46 = vld [vmem:[%s34 + $0x18] sm:%s27]
        %47 = vst [vmem:[%s35 + $0x14] sm:%s27] %v46
        %v48 = vld [vmem:[%s34 + $0xc] sm:%s27]
        %49 = vst [vmem:[%s35 + $0x18] sm:%s27] %v48
        %v50 = vld [vmem:[%s34 + $0x1c] sm:%s27]
        %51 = vst [vmem:[%s35 + $0x1c] sm:%s27] %v50
        %v52 = vld [vmem:[%s34 + $0x20] sm:%s27]
        %53 = vst [vmem:[%s35 + $0x20] sm:%s27] %v52
        %v54 = vld [vmem:[%s34 + $0x30] sm:%s27]
        %55 = vst [vmem:[%s35 + $0x24] sm:%s27] %v54
        %v56 = vld [vmem:[%s34 + $0x24] sm:%s27]
        %57 = vst [vmem:[%s35 + $0x28] sm:%s27] %v56
        %v58 = vld [vmem:[%s34 + $0x34] sm:%s27]
        %59 = vst [vmem:[%s35 + $0x2c] sm:%s27] %v58
        %v60 = vld [vmem:[%s34 + $0x28] sm:%s27]
        %61 = vst [vmem:[%s35 + $0x30] sm:%s27] %v60
        %v62 = vld [vmem:[%s34 + $0x38] sm:%s27]
        %63 = vst [vmem:[%s35 + $0x34] sm:%s27] %v62
        %v64 = vld [vmem:[%s34 + $0x2c] sm:%s27]
        %65 = vst [vmem:[%s35 + $0x38] sm:%s27] %v64
        %v66 = vld [vmem:[%s34 + $0x3c] sm:%s27]
        %67 = vst [vmem:[%s35 + $0x3c] sm:%s27] %v66
        %v68 = vld [vmem:[%s34 + $0x40] sm:%s27]
        %69 = vst [vmem:[%s35 + $0x40] sm:%s27] %v68
        %v70 = vld [vmem:[%s34 + $0x50] sm:%s27]
        %71 = vst [vmem:[%s35 + $0x44] sm:%s27] %v70
        %v72 = vld [vmem:[%s34 + $0x44] sm:%s27]
        %73 = vst [vmem:[%s35 + $0x48] sm:%s27] %v72
        %v74 = vld [vmem:[%s34 + $0x54] sm:%s27]
        %75 = vst [vmem:[%s35 + $0x4c] sm:%s27] %v74
        %v76 = vld [vmem:[%s34 + $0x48] sm:%s27]
        %77 = vst [vmem:[%s35 + $0x50] sm:%s27] %v76
        %v78 = vld [vmem:[%s34 + $0x58] sm:%s27]
        %79 = vst [vmem:[%s35 + $0x54] sm:%s27] %v78
        %v80 = vld [vmem:[%s34 + $0x4c] sm:%s27]
        %81 = vst [vmem:[%s35 + $0x58] sm:%s27] %v80
        %v82 = vld [vmem:[%s34 + $0x5c] sm:%s27]
        %83 = vst [vmem:[%s35 + $0x5c] sm:%s27] %v82
        %v84 = vld [vmem:[%s34 + $0x60] sm:%s27]
        %85 = vst [vmem:[%s35 + $0x60] sm:%s27] %v84
        %v86 = vld [vmem:[%s34 + $0x70] sm:%s27]
        %87 = vst [vmem:[%s35 + $0x64] sm:%s27] %v86
        %v88 = vld [vmem:[%s34 + $0x64] sm:%s27]
        %89 = vst [vmem:[%s35 + $0x68] sm:%s27] %v88
        %v90 = vld [vmem:[%s34 + $0x74] sm:%s27]
        %91 = vst [vmem:[%s35 + $0x6c] sm:%s27] %v90
        %v92 = vld [vmem:[%s34 + $0x68] sm:%s27]
        %93 = vst [vmem:[%s35 + $0x70] sm:%s27] %v92
        %v94 = vld [vmem:[%s34 + $0x78] sm:%s27]
        %95 = vst [vmem:[%s35 + $0x74] sm:%s27] %v94
        %v96 = vld [vmem:[%s34 + $0x6c] sm:%s27]
        %97 = vst [vmem:[%s35 + $0x78] sm:%s27] %v96
        %v98 = vld [vmem:[%s34 + $0x7c] sm:%s27]
        %99 = vst [vmem:[%s35 + $0x7c] sm:%s27] %v98
        %v100 = vld [vmem:[%s34 + $0x80] sm:%s27]
        %101 = vst [vmem:[%s35 + $0x80] sm:%s27] %v100
        %v102 = vld [vmem:[%s34 + $0x90] sm:%s27]
        %103 = vst [vmem:[%s35 + $0x84] sm:%s27] %v102
        %v104 = vld [vmem:[%s34 + $0x84] sm:%s27]
        %105 = vst [vmem:[%s35 + $0x88] sm:%s27] %v104
        %v106 = vld [vmem:[%s34 + $0x94] sm:%s27]
        %107 = vst [vmem:[%s35 + $0x8c] sm:%s27] %v106
        %v108 = vld [vmem:[%s34 + $0x88] sm:%s27]
        %109 = vst [vmem:[%s35 + $0x90] sm:%s27] %v108
        %v110 = vld [vmem:[%s34 + $0x98] sm:%s27]
        %111 = vst [vmem:[%s35 + $0x94] sm:%s27] %v110
        %v112 = vld [vmem:[%s34 + $0x8c] sm:%s27]
        %113 = vst [vmem:[%s35 + $0x98] sm:%s27] %v112
        %v114 = vld [vmem:[%s34 + $0x9c] sm:%s27]
        %115 = vst [vmem:[%s35 + $0x9c] sm:%s27] %v114
        %v116 = vld [vmem:[%s34 + $0xa0] sm:%s27]
        %117 = vst [vmem:[%s35 + $0xa0] sm:%s27] %v116
        %v118 = vld [vmem:[%s34 + $0xb0] sm:%s27]
        %119 = vst [vmem:[%s35 + $0xa4] sm:%s27] %v118
        %v120 = vld [vmem:[%s34 + $0xa4] sm:%s27]
        %121 = vst [vmem:[%s35 + $0xa8] sm:%s27] %v120
        %v122 = vld [vmem:[%s34 + $0xb4] sm:%s27]
        %123 = vst [vmem:[%s35 + $0xac] sm:%s27] %v122
        %v124 = vld [vmem:[%s34 + $0xa8] sm:%s27]
        %125 = vst [vmem:[%s35 + $0xb0] sm:%s27] %v124
        %v126 = vld [vmem:[%s34 + $0xb8] sm:%s27]
        %127 = vst [vmem:[%s35 + $0xb4] sm:%s27] %v126
        %v128 = vld [vmem:[%s34 + $0xac] sm:%s27]
        %129 = vst [vmem:[%s35 + $0xb8] sm:%s27] %v128
        %v130 = vld [vmem:[%s34 + $0xbc] sm:%s27]
        %131 = vst [vmem:[%s35 + $0xbc] sm:%s27] %v130
        %v132 = vld [vmem:[%s34 + $0xc0] sm:%s27]
        %133 = vst [vmem:[%s35 + $0xc0] sm:%s27] %v132
        %v134 = vld [vmem:[%s34 + $0xd0] sm:%s27]
        %135 = vst [vmem:[%s35 + $0xc4] sm:%s27] %v134
        %v136 = vld [vmem:[%s34 + $0xc4] sm:%s27]
        %137 = vst [vmem:[%s35 + $0xc8] sm:%s27] %v136
        %v138 = vld [vmem:[%s34 + $0xd4] sm:%s27]
        %139 = vst [vmem:[%s35 + $0xcc] sm:%s27] %v138
        %v140 = vld [vmem:[%s34 + $0xc8] sm:%s27]
        %141 = vst [vmem:[%s35 + $0xd0] sm:%s27] %v140
        %v142 = vld [vmem:[%s34 + $0xd8] sm:%s27]
        %143 = vst [vmem:[%s35 + $0xd4] sm:%s27] %v142
        %v144 = vld [vmem:[%s34 + $0xcc] sm:%s27]
        %145 = vst [vmem:[%s35 + $0xd8] sm:%s27] %v144
        %v146 = vld [vmem:[%s34 + $0xdc] sm:%s27]
        %147 = vst [vmem:[%s35 + $0xdc] sm:%s27] %v146
        %v148 = vld [vmem:[%s34 + $0xe0] sm:%s27]
        %149 = vst [vmem:[%s35 + $0xe0] sm:%s27] %v148
        %v150 = vld [vmem:[%s34 + $0xf0] sm:%s27]
        %151 = vst [vmem:[%s35 + $0xe4] sm:%s27] %v150
        %v152 = vld [vmem:[%s34 + $0xe4] sm:%s27]
        %153 = vst [vmem:[%s35 + $0xe8] sm:%s27] %v152
        %v154 = vld [vmem:[%s34 + $0xf4] sm:%s27]
        %155 = vst [vmem:[%s35 + $0xec] sm:%s27] %v154
        %v156 = vld [vmem:[%s34 + $0xe8] sm:%s27]
        %157 = vst [vmem:[%s35 + $0xf0] sm:%s27] %v156
        %v158 = vld [vmem:[%s34 + $0xf8] sm:%s27]
        %159 = vst [vmem:[%s35 + $0xf4] sm:%s27] %v158
        %v160 = vld [vmem:[%s34 + $0xec] sm:%s27]
        %161 = vst [vmem:[%s35 + $0xf8] sm:%s27] %v160
        %v162 = vld [vmem:[%s34 + $0xfc] sm:%s27]
        %163 = vst [vmem:[%s35 + $0xfc] sm:%s27] %v162
        %v164 = vld [vmem:[%s34 + $0x100] sm:%s27]
        %165 = vst [vmem:[%s35 + $0x100] sm:%s27] %v164
        %v166 = vld [vmem:[%s34 + $0x110] sm:%s27]
        %167 = vst [vmem:[%s35 + $0x104] sm:%s27] %v166
        %v168 = vld [vmem:[%s34 + $0x104] sm:%s27]
        %169 = vst [vmem:[%s35 + $0x108] sm:%s27] %v168
        %v170 = vld [vmem:[%s34 + $0x114] sm:%s27]
        %171 = vst [vmem:[%s35 + $0x10c] sm:%s27] %v170
        %v172 = vld [vmem:[%s34 + $0x108] sm:%s27]
        %173 = vst [vmem:[%s35 + $0x110] sm:%s27] %v172
        %v174 = vld [vmem:[%s34 + $0x118] sm:%s27]
        %175 = vst [vmem:[%s35 + $0x114] sm:%s27] %v174
        %v176 = vld [vmem:[%s34 + $0x10c] sm:%s27]
        %177 = vst [vmem:[%s35 + $0x118] sm:%s27] %v176
        %v178 = vld [vmem:[%s34 + $0x11c] sm:%s27]
        %179 = vst [vmem:[%s35 + $0x11c] sm:%s27] %v178
        %v180 = vld [vmem:[%s34 + $0x120] sm:%s27]
        %181 = vst [vmem:[%s35 + $0x120] sm:%s27] %v180
        %v182 = vld [vmem:[%s34 + $0x130] sm:%s27]
        %183 = vst [vmem:[%s35 + $0x124] sm:%s27] %v182
        %v184 = vld [vmem:[%s34 + $0x124] sm:%s27]
        %185 = vst [vmem:[%s35 + $0x128] sm:%s27] %v184
        %v186 = vld [vmem:[%s34 + $0x134] sm:%s27]
        %187 = vst [vmem:[%s35 + $0x12c] sm:%s27] %v186
        %v188 = vld [vmem:[%s34 + $0x128] sm:%s27]
        %189 = vst [vmem:[%s35 + $0x130] sm:%s27] %v188
        %v190 = vld [vmem:[%s34 + $0x138] sm:%s27]
        %191 = vst [vmem:[%s35 + $0x134] sm:%s27] %v190
        %v192 = vld [vmem:[%s34 + $0x12c] sm:%s27]
        %193 = vst [vmem:[%s35 + $0x138] sm:%s27] %v192
        %v194 = vld [vmem:[%s34 + $0x13c] sm:%s27]
        %195 = vst [vmem:[%s35 + $0x13c] sm:%s27] %v194
        %v196 = vld [vmem:[%s34 + $0x140] sm:%s27]
        %197 = vst [vmem:[%s35 + $0x140] sm:%s27] %v196
        %v198 = vld [vmem:[%s34 + $0x150] sm:%s27]
        %199 = vst [vmem:[%s35 + $0x144] sm:%s27] %v198
        %v200 = vld [vmem:[%s34 + $0x144] sm:%s27]
        %201 = vst [vmem:[%s35 + $0x148] sm:%s27] %v200
        %v202 = vld [vmem:[%s34 + $0x154] sm:%s27]
        %203 = vst [vmem:[%s35 + $0x14c] sm:%s27] %v202
        %v204 = vld [vmem:[%s34 + $0x148] sm:%s27]
        %205 = vst [vmem:[%s35 + $0x150] sm:%s27] %v204
        %v206 = vld [vmem:[%s34 + $0x158] sm:%s27]
        %207 = vst [vmem:[%s35 + $0x154] sm:%s27] %v206
        %v208 = vld [vmem:[%s34 + $0x14c] sm:%s27]
        %209 = vst [vmem:[%s35 + $0x158] sm:%s27] %v208
        %v210 = vld [vmem:[%s34 + $0x15c] sm:%s27]
        %211 = vst [vmem:[%s35 + $0x15c] sm:%s27] %v210
        %v212 = vld [vmem:[%s34 + $0x160] sm:%s27]
        %213 = vst [vmem:[%s35 + $0x160] sm:%s27] %v212
        %v214 = vld [vmem:[%s34 + $0x170] sm:%s27]
        %215 = vst [vmem:[%s35 + $0x164] sm:%s27] %v214
        %v216 = vld [vmem:[%s34 + $0x164] sm:%s27]
        %217 = vst [vmem:[%s35 + $0x168] sm:%s27] %v216
        %v218 = vld [vmem:[%s34 + $0x174] sm:%s27]
        %219 = vst [vmem:[%s35 + $0x16c] sm:%s27] %v218
        %v220 = vld [vmem:[%s34 + $0x168] sm:%s27]
        %221 = vst [vmem:[%s35 + $0x170] sm:%s27] %v220
        %v222 = vld [vmem:[%s34 + $0x178] sm:%s27]
        %223 = vst [vmem:[%s35 + $0x174] sm:%s27] %v222
        %v224 = vld [vmem:[%s34 + $0x16c] sm:%s27]
        %225 = vst [vmem:[%s35 + $0x178] sm:%s27] %v224
        %v226 = vld [vmem:[%s34 + $0x17c] sm:%s27]
        %227 = vst [vmem:[%s35 + $0x17c] sm:%s27] %v226
        %v228 = vld [vmem:[%s34 + $0x180] sm:%s27]
        %229 = vst [vmem:[%s35 + $0x180] sm:%s27] %v228
        %v230 = vld [vmem:[%s34 + $0x190] sm:%s27]
        %231 = vst [vmem:[%s35 + $0x184] sm:%s27] %v230
        %v232 = vld [vmem:[%s34 + $0x184] sm:%s27]
        %233 = vst [vmem:[%s35 + $0x188] sm:%s27] %v232
        %v234 = vld [vmem:[%s34 + $0x194] sm:%s27]
        %235 = vst [vmem:[%s35 + $0x18c] sm:%s27] %v234
        %v236 = vld [vmem:[%s34 + $0x188] sm:%s27]
        %237 = vst [vmem:[%s35 + $0x190] sm:%s27] %v236
        %v238 = vld [vmem:[%s34 + $0x198] sm:%s27]
        %239 = vst [vmem:[%s35 + $0x194] sm:%s27] %v238
        %v240 = vld [vmem:[%s34 + $0x18c] sm:%s27]
        %241 = vst [vmem:[%s35 + $0x198] sm:%s27] %v240
        %v242 = vld [vmem:[%s34 + $0x19c] sm:%s27]
        %243 = vst [vmem:[%s35 + $0x19c] sm:%s27] %v242
        %v244 = vld [vmem:[%s34 + $0x1a0] sm:%s27]
        %245 = vst [vmem:[%s35 + $0x1a0] sm:%s27] %v244
        %v246 = vld [vmem:[%s34 + $0x1b0] sm:%s27]
        %247 = vst [vmem:[%s35 + $0x1a4] sm:%s27] %v246
        %v248 = vld [vmem:[%s34 + $0x1a4] sm:%s27]
        %249 = vst [vmem:[%s35 + $0x1a8] sm:%s27] %v248
        %v250 = vld [vmem:[%s34 + $0x1b4] sm:%s27]
        %251 = vst [vmem:[%s35 + $0x1ac] sm:%s27] %v250
        %v252 = vld [vmem:[%s34 + $0x1a8] sm:%s27]
        %253 = vst [vmem:[%s35 + $0x1b0] sm:%s27] %v252
        %v254 = vld [vmem:[%s34 + $0x1b8] sm:%s27]
        %255 = vst [vmem:[%s35 + $0x1b4] sm:%s27] %v254
        %v256 = vld [vmem:[%s34 + $0x1ac] sm:%s27]
        %257 = vst [vmem:[%s35 + $0x1b8] sm:%s27] %v256
        %v258 = vld [vmem:[%s34 + $0x1bc] sm:%s27]
        %259 = vst [vmem:[%s35 + $0x1bc] sm:%s27] %v258
        %v260 = vld [vmem:[%s34 + $0x1c0] sm:%s27]
        %261 = vst [vmem:[%s35 + $0x1c0] sm:%s27] %v260
        %v262 = vld [vmem:[%s34 + $0x1d0] sm:%s27]
        %263 = vst [vmem:[%s35 + $0x1c4] sm:%s27] %v262
        %v264 = vld [vmem:[%s34 + $0x1c4] sm:%s27]
        %265 = vst [vmem:[%s35 + $0x1c8] sm:%s27] %v264
        %v266 = vld [vmem:[%s34 + $0x1d4] sm:%s27]
        %267 = vst [vmem:[%s35 + $0x1cc] sm:%s27] %v266
        %v268 = vld [vmem:[%s34 + $0x1c8] sm:%s27]
        %269 = vst [vmem:[%s35 + $0x1d0] sm:%s27] %v268
        %v270 = vld [vmem:[%s34 + $0x1d8] sm:%s27]
        %271 = vst [vmem:[%s35 + $0x1d4] sm:%s27] %v270
        %v272 = vld [vmem:[%s34 + $0x1cc] sm:%s27]
        %273 = vst [vmem:[%s35 + $0x1d8] sm:%s27] %v272
        %v274 = vld [vmem:[%s34 + $0x1dc] sm:%s27]
        %275 = vst [vmem:[%s35 + $0x1dc] sm:%s27] %v274
        %v276 = vld [vmem:[%s34 + $0x1e0] sm:%s27]
        %277 = vst [vmem:[%s35 + $0x1e0] sm:%s27] %v276
        %v278 = vld [vmem:[%s34 + $0x1f0] sm:%s27]
        %279 = vst [vmem:[%s35 + $0x1e4] sm:%s27] %v278
        %v280 = vld [vmem:[%s34 + $0x1e4] sm:%s27]
        %281 = vst [vmem:[%s35 + $0x1e8] sm:%s27] %v280
        %v282 = vld [vmem:[%s34 + $0x1f4] sm:%s27]
        %283 = vst [vmem:[%s35 + $0x1ec] sm:%s27] %v282
        %v284 = vld [vmem:[%s34 + $0x1e8] sm:%s27]
        %285 = vst [vmem:[%s35 + $0x1f0] sm:%s27] %v284
        %v286 = vld [vmem:[%s34 + $0x1f8] sm:%s27]
        %287 = vst [vmem:[%s35 + $0x1f4] sm:%s27] %v286
        %v288 = vld [vmem:[%s34 + $0x1ec] sm:%s27]
        %289 = vst [vmem:[%s35 + $0x1f8] sm:%s27] %v288
        %v290 = vld [vmem:[%s34 + $0x1fc] sm:%s27]
        %291 = vst [vmem:[%s35 + $0x1fc] sm:%s27] %v290
        %v292 = vld [vmem:[%s34 + $0x200] sm:%s27]
        %293 = vst [vmem:[%s35 + $0x200] sm:%s27] %v292
        %v294 = vld [vmem:[%s34 + $0x210] sm:%s27]
        %295 = vst [vmem:[%s35 + $0x204] sm:%s27] %v294
        %v296 = vld [vmem:[%s34 + $0x204] sm:%s27]
        %297 = vst [vmem:[%s35 + $0x208] sm:%s27] %v296
        %v298 = vld [vmem:[%s34 + $0x214] sm:%s27]
        %299 = vst [vmem:[%s35 + $0x20c] sm:%s27] %v298
        %v300 = vld [vmem:[%s34 + $0x208] sm:%s27]
        %301 = vst [vmem:[%s35 + $0x210] sm:%s27] %v300
        %v302 = vld [vmem:[%s34 + $0x218] sm:%s27]
        %303 = vst [vmem:[%s35 + $0x214] sm:%s27] %v302
        %v304 = vld [vmem:[%s34 + $0x20c] sm:%s27]
        %305 = vst [vmem:[%s35 + $0x218] sm:%s27] %v304
        %v306 = vld [vmem:[%s34 + $0x21c] sm:%s27]
        %307 = vst [vmem:[%s35 + $0x21c] sm:%s27] %v306
        %v308 = vld [vmem:[%s34 + $0x220] sm:%s27]
        %309 = vst [vmem:[%s35 + $0x220] sm:%s27] %v308
        %v310 = vld [vmem:[%s34 + $0x230] sm:%s27]
        %311 = vst [vmem:[%s35 + $0x224] sm:%s27] %v310
        %v312 = vld [vmem:[%s34 + $0x224] sm:%s27]
        %313 = vst [vmem:[%s35 + $0x228] sm:%s27] %v312
        %v314 = vld [vmem:[%s34 + $0x234] sm:%s27]
        %315 = vst [vmem:[%s35 + $0x22c] sm:%s27] %v314
        %v316 = vld [vmem:[%s34 + $0x228] sm:%s27]
        %317 = vst [vmem:[%s35 + $0x230] sm:%s27] %v316
        %v318 = vld [vmem:[%s34 + $0x238] sm:%s27]
        %319 = vst [vmem:[%s35 + $0x234] sm:%s27] %v318
        %v320 = vld [vmem:[%s34 + $0x22c] sm:%s27]
        %321 = vst [vmem:[%s35 + $0x238] sm:%s27] %v320
        %v322 = vld [vmem:[%s34 + $0x23c] sm:%s27]
        %323 = vst [vmem:[%s35 + $0x23c] sm:%s27] %v322
        %v324 = vld [vmem:[%s34 + $0x240] sm:%s27]
        %325 = vst [vmem:[%s35 + $0x240] sm:%s27] %v324
        %v326 = vld [vmem:[%s34 + $0x250] sm:%s27]
        %327 = vst [vmem:[%s35 + $0x244] sm:%s27] %v326
        %v328 = vld [vmem:[%s34 + $0x244] sm:%s27]
        %329 = vst [vmem:[%s35 + $0x248] sm:%s27] %v328
        %v330 = vld [vmem:[%s34 + $0x254] sm:%s27]
        %331 = vst [vmem:[%s35 + $0x24c] sm:%s27] %v330
        %v332 = vld [vmem:[%s34 + $0x248] sm:%s27]
        %333 = vst [vmem:[%s35 + $0x250] sm:%s27] %v332
        %v334 = vld [vmem:[%s34 + $0x258] sm:%s27]
        %335 = vst [vmem:[%s35 + $0x254] sm:%s27] %v334
        %v336 = vld [vmem:[%s34 + $0x24c] sm:%s27]
        %337 = vst [vmem:[%s35 + $0x258] sm:%s27] %v336
        %v338 = vld [vmem:[%s34 + $0x25c] sm:%s27]
        %339 = vst [vmem:[%s35 + $0x25c] sm:%s27] %v338
        %v340 = vld [vmem:[%s34 + $0x260] sm:%s27]
        %341 = vst [vmem:[%s35 + $0x260] sm:%s27] %v340
        %v342 = vld [vmem:[%s34 + $0x270] sm:%s27]
        %343 = vst [vmem:[%s35 + $0x264] sm:%s27] %v342
        %v344 = vld [vmem:[%s34 + $0x264] sm:%s27]
        %345 = vst [vmem:[%s35 + $0x268] sm:%s27] %v344
        %v346 = vld [vmem:[%s34 + $0x274] sm:%s27]
        %347 = vst [vmem:[%s35 + $0x26c] sm:%s27] %v346
        %v348 = vld [vmem:[%s34 + $0x268] sm:%s27]
        %349 = vst [vmem:[%s35 + $0x270] sm:%s27] %v348
        %v350 = vld [vmem:[%s34 + $0x278] sm:%s27]
        %351 = vst [vmem:[%s35 + $0x274] sm:%s27] %v350
        %v352 = vld [vmem:[%s34 + $0x26c] sm:%s27]
        %353 = vst [vmem:[%s35 + $0x278] sm:%s27] %v352
        %v354 = vld [vmem:[%s34 + $0x27c] sm:%s27]
        %355 = vst [vmem:[%s35 + $0x27c] sm:%s27] %v354
        %v356 = vld [vmem:[%s34 + $0x280] sm:%s27]
        %357 = vst [vmem:[%s35 + $0x280] sm:%s27] %v356
        %v358 = vld [vmem:[%s34 + $0x290] sm:%s27]
        %359 = vst [vmem:[%s35 + $0x284] sm:%s27] %v358
        %v360 = vld [vmem:[%s34 + $0x284] sm:%s27]
        %361 = vst [vmem:[%s35 + $0x288] sm:%s27] %v360
        %v362 = vld [vmem:[%s34 + $0x294] sm:%s27]
        %363 = vst [vmem:[%s35 + $0x28c] sm:%s27] %v362
        %v364 = vld [vmem:[%s34 + $0x288] sm:%s27]
        %365 = vst [vmem:[%s35 + $0x290] sm:%s27] %v364
        %v366 = vld [vmem:[%s34 + $0x298] sm:%s27]
        %367 = vst [vmem:[%s35 + $0x294] sm:%s27] %v366
        %v368 = vld [vmem:[%s34 + $0x28c] sm:%s27]
        %369 = vst [vmem:[%s35 + $0x298] sm:%s27] %v368
        %v370 = vld [vmem:[%s34 + $0x29c] sm:%s27]
        %371 = vst [vmem:[%s35 + $0x29c] sm:%s27] %v370
        %v372 = vld [vmem:[%s34 + $0x2a0] sm:%s27]
        %373 = vst [vmem:[%s35 + $0x2a0] sm:%s27] %v372
        %v374 = vld [vmem:[%s34 + $0x2b0] sm:%s27]
        %375 = vst [vmem:[%s35 + $0x2a4] sm:%s27] %v374
        %v376 = vld [vmem:[%s34 + $0x2a4] sm:%s27]
        %377 = vst [vmem:[%s35 + $0x2a8] sm:%s27] %v376
        %v378 = vld [vmem:[%s34 + $0x2b4] sm:%s27]
        %379 = vst [vmem:[%s35 + $0x2ac] sm:%s27] %v378
        %v380 = vld [vmem:[%s34 + $0x2a8] sm:%s27]
        %381 = vst [vmem:[%s35 + $0x2b0] sm:%s27] %v380
        %v382 = vld [vmem:[%s34 + $0x2b8] sm:%s27]
        %383 = vst [vmem:[%s35 + $0x2b4] sm:%s27] %v382
        %v384 = vld [vmem:[%s34 + $0x2ac] sm:%s27]
        %385 = vst [vmem:[%s35 + $0x2b8] sm:%s27] %v384
        %v386 = vld [vmem:[%s34 + $0x2bc] sm:%s27]
        %387 = vst [vmem:[%s35 + $0x2bc] sm:%s27] %v386
        %v388 = vld [vmem:[%s34 + $0x2c0] sm:%s27]
        %389 = vst [vmem:[%s35 + $0x2c0] sm:%s27] %v388
        %v390 = vld [vmem:[%s34 + $0x2d0] sm:%s27]
        %391 = vst [vmem:[%s35 + $0x2c4] sm:%s27] %v390
        %v392 = vld [vmem:[%s34 + $0x2c4] sm:%s27]
        %393 = vst [vmem:[%s35 + $0x2c8] sm:%s27] %v392
        %v394 = vld [vmem:[%s34 + $0x2d4] sm:%s27]
        %395 = vst [vmem:[%s35 + $0x2cc] sm:%s27] %v394
        %v396 = vld [vmem:[%s34 + $0x2c8] sm:%s27]
        %397 = vst [vmem:[%s35 + $0x2d0] sm:%s27] %v396
        %v398 = vld [vmem:[%s34 + $0x2d8] sm:%s27]
        %399 = vst [vmem:[%s35 + $0x2d4] sm:%s27] %v398
        %v400 = vld [vmem:[%s34 + $0x2cc] sm:%s27]
        %401 = vst [vmem:[%s35 + $0x2d8] sm:%s27] %v400
        %v402 = vld [vmem:[%s34 + $0x2dc] sm:%s27]
        %403 = vst [vmem:[%s35 + $0x2dc] sm:%s27] %v402
        %v404 = vld [vmem:[%s34 + $0x2e0] sm:%s27]
        %405 = vst [vmem:[%s35 + $0x2e0] sm:%s27] %v404
        %v406 = vld [vmem:[%s34 + $0x2f0] sm:%s27]
        %407 = vst [vmem:[%s35 + $0x2e4] sm:%s27] %v406
        %v408 = vld [vmem:[%s34 + $0x2e4] sm:%s27]
        %409 = vst [vmem:[%s35 + $0x2e8] sm:%s27] %v408
        %v410 = vld [vmem:[%s34 + $0x2f4] sm:%s27]
        %411 = vst [vmem:[%s35 + $0x2ec] sm:%s27] %v410
        %v412 = vld [vmem:[%s34 + $0x2e8] sm:%s27]
        %413 = vst [vmem:[%s35 + $0x2f0] sm:%s27] %v412
        %v414 = vld [vmem:[%s34 + $0x2f8] sm:%s27]
        %415 = vst [vmem:[%s35 + $0x2f4] sm:%s27] %v414
        %v416 = vld [vmem:[%s34 + $0x2ec] sm:%s27]
        %417 = vst [vmem:[%s35 + $0x2f8] sm:%s27] %v416
        %v418 = vld [vmem:[%s34 + $0x2fc] sm:%s27]
        %419 = vst [vmem:[%s35 + $0x2fc] sm:%s27] %v418
        %v420 = vld [vmem:[%s34 + $0x300] sm:%s27]
        %421 = vst [vmem:[%s35 + $0x300] sm:%s27] %v420
        %v422 = vld [vmem:[%s34 + $0x310] sm:%s27]
        %423 = vst [vmem:[%s35 + $0x304] sm:%s27] %v422
        %v424 = vld [vmem:[%s34 + $0x304] sm:%s27]
        %425 = vst [vmem:[%s35 + $0x308] sm:%s27] %v424
        %v426 = vld [vmem:[%s34 + $0x314] sm:%s27]
        %427 = vst [vmem:[%s35 + $0x30c] sm:%s27] %v426
        %v428 = vld [vmem:[%s34 + $0x308] sm:%s27]
        %429 = vst [vmem:[%s35 + $0x310] sm:%s27] %v428
        %v430 = vld [vmem:[%s34 + $0x318] sm:%s27]
        %431 = vst [vmem:[%s35 + $0x314] sm:%s27] %v430
        %v432 = vld [vmem:[%s34 + $0x30c] sm:%s27]
        %433 = vst [vmem:[%s35 + $0x318] sm:%s27] %v432
        %v434 = vld [vmem:[%s34 + $0x31c] sm:%s27]
        %435 = vst [vmem:[%s35 + $0x31c] sm:%s27] %v434
        %v436 = vld [vmem:[%s34 + $0x320] sm:%s27]
        %437 = vst [vmem:[%s35 + $0x320] sm:%s27] %v436
        %v438 = vld [vmem:[%s34 + $0x330] sm:%s27]
        %439 = vst [vmem:[%s35 + $0x324] sm:%s27] %v438
        %v440 = vld [vmem:[%s34 + $0x324] sm:%s27]
        %441 = vst [vmem:[%s35 + $0x328] sm:%s27] %v440
        %v442 = vld [vmem:[%s34 + $0x334] sm:%s27]
        %443 = vst [vmem:[%s35 + $0x32c] sm:%s27] %v442
        %v444 = vld [vmem:[%s34 + $0x328] sm:%s27]
        %445 = vst [vmem:[%s35 + $0x330] sm:%s27] %v444
        %v446 = vld [vmem:[%s34 + $0x338] sm:%s27]
        %447 = vst [vmem:[%s35 + $0x334] sm:%s27] %v446
        %v448 = vld [vmem:[%s34 + $0x32c] sm:%s27]
        %449 = vst [vmem:[%s35 + $0x338] sm:%s27] %v448
        %v450 = vld [vmem:[%s34 + $0x33c] sm:%s27]
        %451 = vst [vmem:[%s35 + $0x33c] sm:%s27] %v450
        %v452 = vld [vmem:[%s34 + $0x340] sm:%s27]
        %453 = vst [vmem:[%s35 + $0x340] sm:%s27] %v452
        %v454 = vld [vmem:[%s34 + $0x350] sm:%s27]
        %455 = vst [vmem:[%s35 + $0x344] sm:%s27] %v454
        %v456 = vld [vmem:[%s34 + $0x344] sm:%s27]
        %457 = vst [vmem:[%s35 + $0x348] sm:%s27] %v456
        %v458 = vld [vmem:[%s34 + $0x354] sm:%s27]
        %459 = vst [vmem:[%s35 + $0x34c] sm:%s27] %v458
        %v460 = vld [vmem:[%s34 + $0x348] sm:%s27]
        %461 = vst [vmem:[%s35 + $0x350] sm:%s27] %v460
        %v462 = vld [vmem:[%s34 + $0x358] sm:%s27]
        %463 = vst [vmem:[%s35 + $0x354] sm:%s27] %v462
        %v464 = vld [vmem:[%s34 + $0x34c] sm:%s27]
        %465 = vst [vmem:[%s35 + $0x358] sm:%s27] %v464
        %v466 = vld [vmem:[%s34 + $0x35c] sm:%s27]
        %467 = vst [vmem:[%s35 + $0x35c] sm:%s27] %v466
        %v468 = vld [vmem:[%s34 + $0x360] sm:%s27]
        %469 = vst [vmem:[%s35 + $0x360] sm:%s27] %v468
        %v470 = vld [vmem:[%s34 + $0x370] sm:%s27]
        %471 = vst [vmem:[%s35 + $0x364] sm:%s27] %v470
        %v472 = vld [vmem:[%s34 + $0x364] sm:%s27]
        %473 = vst [vmem:[%s35 + $0x368] sm:%s27] %v472
        %v474 = vld [vmem:[%s34 + $0x374] sm:%s27]
        %475 = vst [vmem:[%s35 + $0x36c] sm:%s27] %v474
        %v476 = vld [vmem:[%s34 + $0x368] sm:%s27]
        %477 = vst [vmem:[%s35 + $0x370] sm:%s27] %v476
        %v478 = vld [vmem:[%s34 + $0x378] sm:%s27]
        %479 = vst [vmem:[%s35 + $0x374] sm:%s27] %v478
        %v480 = vld [vmem:[%s34 + $0x36c] sm:%s27]
        %481 = vst [vmem:[%s35 + $0x378] sm:%s27] %v480
        %v482 = vld [vmem:[%s34 + $0x37c] sm:%s27]
        %483 = vst [vmem:[%s35 + $0x37c] sm:%s27] %v482
        %v484 = vld [vmem:[%s34 + $0x380] sm:%s27]
        %485 = vst [vmem:[%s35 + $0x380] sm:%s27] %v484
        %v486 = vld [vmem:[%s34 + $0x390] sm:%s27]
        %487 = vst [vmem:[%s35 + $0x384] sm:%s27] %v486
        %v488 = vld [vmem:[%s34 + $0x384] sm:%s27]
        %489 = vst [vmem:[%s35 + $0x388] sm:%s27] %v488
        %v490 = vld [vmem:[%s34 + $0x394] sm:%s27]
        %491 = vst [vmem:[%s35 + $0x38c] sm:%s27] %v490
        %v492 = vld [vmem:[%s34 + $0x388] sm:%s27]
        %493 = vst [vmem:[%s35 + $0x390] sm:%s27] %v492
        %v494 = vld [vmem:[%s34 + $0x398] sm:%s27]
        %495 = vst [vmem:[%s35 + $0x394] sm:%s27] %v494
        %v496 = vld [vmem:[%s34 + $0x38c] sm:%s27]
        %497 = vst [vmem:[%s35 + $0x398] sm:%s27] %v496
        %v498 = vld [vmem:[%s34 + $0x39c] sm:%s27]
        %499 = vst [vmem:[%s35 + $0x39c] sm:%s27] %v498
        %v500 = vld [vmem:[%s34 + $0x3a0] sm:%s27]
        %501 = vst [vmem:[%s35 + $0x3a0] sm:%s27] %v500
        %v502 = vld [vmem:[%s34 + $0x3b0] sm:%s27]
        %503 = vst [vmem:[%s35 + $0x3a4] sm:%s27] %v502
        %v504 = vld [vmem:[%s34 + $0x3a4] sm:%s27]
        %505 = vst [vmem:[%s35 + $0x3a8] sm:%s27] %v504
        %v506 = vld [vmem:[%s34 + $0x3b4] sm:%s27]
        %507 = vst [vmem:[%s35 + $0x3ac] sm:%s27] %v506
        %v508 = vld [vmem:[%s34 + $0x3a8] sm:%s27]
        %509 = vst [vmem:[%s35 + $0x3b0] sm:%s27] %v508
        %v510 = vld [vmem:[%s34 + $0x3b8] sm:%s27]
        %511 = vst [vmem:[%s35 + $0x3b4] sm:%s27] %v510
        %v512 = vld [vmem:[%s34 + $0x3ac] sm:%s27]
        %513 = vst [vmem:[%s35 + $0x3b8] sm:%s27] %v512
        %v514 = vld [vmem:[%s34 + $0x3bc] sm:%s27]
        %515 = vst [vmem:[%s35 + $0x3bc] sm:%s27] %v514
        %v516 = vld [vmem:[%s34 + $0x3c0] sm:%s27]
        %517 = vst [vmem:[%s35 + $0x3c0] sm:%s27] %v516
        %v518 = vld [vmem:[%s34 + $0x3d0] sm:%s27]
        %519 = vst [vmem:[%s35 + $0x3c4] sm:%s27] %v518
        %v520 = vld [vmem:[%s34 + $0x3c4] sm:%s27]
        %521 = vst [vmem:[%s35 + $0x3c8] sm:%s27] %v520
        %v522 = vld [vmem:[%s34 + $0x3d4] sm:%s27]
        %523 = vst [vmem:[%s35 + $0x3cc] sm:%s27] %v522
        %v524 = vld [vmem:[%s34 + $0x3c8] sm:%s27]
        %525 = vst [vmem:[%s35 + $0x3d0] sm:%s27] %v524
        %v526 = vld [vmem:[%s34 + $0x3d8] sm:%s27]
        %527 = vst [vmem:[%s35 + $0x3d4] sm:%s27] %v526
        %v528 = vld [vmem:[%s34 + $0x3cc] sm:%s27]
        %529 = vst [vmem:[%s35 + $0x3d8] sm:%s27] %v528
        %v530 = vld [vmem:[%s34 + $0x3dc] sm:%s27]
        %531 = vst [vmem:[%s35 + $0x3dc] sm:%s27] %v530
        %v532 = vld [vmem:[%s34 + $0x3e0] sm:%s27]
        %533 = vst [vmem:[%s35 + $0x3e0] sm:%s27] %v532
        %v534 = vld [vmem:[%s34 + $0x3f0] sm:%s27]
        %535 = vst [vmem:[%s35 + $0x3e4] sm:%s27] %v534
        %v536 = vld [vmem:[%s34 + $0x3e4] sm:%s27]
        %537 = vst [vmem:[%s35 + $0x3e8] sm:%s27] %v536
        %v538 = vld [vmem:[%s34 + $0x3f4] sm:%s27]
        %539 = vst [vmem:[%s35 + $0x3ec] sm:%s27] %v538
        %v540 = vld [vmem:[%s34 + $0x3e8] sm:%s27]
        %541 = vst [vmem:[%s35 + $0x3f0] sm:%s27] %v540
        %v542 = vld [vmem:[%s34 + $0x3f8] sm:%s27]
        %543 = vst [vmem:[%s35 + $0x3f4] sm:%s27] %v542
        %v544 = vld [vmem:[%s34 + $0x3ec] sm:%s27]
        %545 = vst [vmem:[%s35 + $0x3f8] sm:%s27] %v544
        %v546 = vld [vmem:[%s34 + $0x3fc] sm:%s27]
        %547 = vst [vmem:[%s35 + $0x3fc] sm:%s27] %v546
      $region30: #{_nngd_forward.1} parent=24 // loop_footer
        %s33 = sadd.s32 1, %s29
      $region31: #{_nngd_forward.1} parent=24 // loop_footer_branch
        %28 = sbr.rel target = $region27
      $region32: #{_nngd_forward.1} parent=24 // loop_exit
        _
    $region25: #{_nngd_forward.1} parent=1 // pred_fallthru
      _
    // Predicated region
    $region51: #{_nngd_forward.1} parent=1 // pred_check
      _
    $region52: #{_nngd_forward.1} parent=1 // pred_check_branch
      %1089 = sbr.rel (0) target = $region54
    $region53: #{_nngd_forward.1} parent=1 // pred_region
      %1090 = vsyncadd [#allocation3], 16384
    $region54: #{_nngd_forward.1} parent=1 // pred_fallthru
      _
    %v1091 = vld [vmem:[%s0] sm:$0xff]
    %v1092 = vmul.f32 %v1091, 6.2831855
    %v1093 = vand.u32 2147483647, %v1092
    %vm1094 = vcmp.le.f32.partialorder %v1093, 0.7853982
    %vm1095 = vcmp.lt.s32.totalorder %v1092, 0
    %v1096 = vand.u32 %v1092, 2139095040
    %v1097 = vshrl.u32 %v1096, 23
    %v1098 = vsub.s32 %v1097, 127
    %v1099 = vand.u32 2147483647, %v1092
    %v1100 = vand.u32 %v1099, 8388607
    %v1101 = vor.u32 %v1100, 8388608
    %v1102 = vsub.s32 0, %v1101
    %v1103 = vadd.s32 %v1098, 1
    %vm1104 = vcmp.gt.s32.totalorder %v1103, 0
    %v1105 = vsel %vm1104, %v1103, 0
    %v1106 = vshrl.u32 %v1105, 5
    %v1107 = vand.u32 %v1105, 31
    %v1108 = vsub.s32 32, %v1107
    %v1109 = vshrl.u32 683565275, %v1108
    %v1110 = vshll.u32 683565275, %v1107
    %v1111 = vshrl.u32 2475754826, %v1108
    %v1112 = vor.u32 %v1110, %v1111
    %v1113 = vshll.u32 2475754826, %v1107
    %v1114 = vshrl.u32 2131351028, %v1108
    %v1115 = vor.u32 %v1113, %v1114
    %v1116 = vshll.u32 2131351028, %v1107
    %v1117 = vshrl.u32 2102212464, %v1108
    %v1118 = vor.u32 %v1116, %v1117
    %v1119 = vshll.u32 2102212464, %v1107
    %v1120 = vshrl.u32 920167782, %v1108
    %v1121 = vor.u32 %v1119, %v1120
    %v1122 = vshll.u32 920167782, %v1107
    %v1123 = vshrl.u32 1326507024, %v1108
    %v1124 = vor.u32 %v1122, %v1123
    %vm1125 = vcmp.lt.s32.totalorder %v1106, 1
    %vm1126 = vcmp.lt.s32.totalorder %v1106, 2
    %vm1127 = vcmp.lt.s32.totalorder %v1106, 3
    %vm1128 = vcmp.lt.s32.totalorder %v1106, 4
    %v1129 = vsel %vm1125, %v1109, %v1112
    %v1130 = vsel %vm1128, %v1118, 2102212464
    %v1131 = vsel %vm1127, %v1115, %v1130
    %v1132 = vsel %vm1126, %v1129, %v1131
    %v1133 = vsel %vm1125, %v1112, %v1115
    %v1134 = vsel %vm1128, %v1121, 920167782
    %v1135 = vsel %vm1127, %v1118, %v1134
    %v1136 = vsel %vm1126, %v1133, %v1135
    %v1137 = vsel %vm1125, %v1115, %v1118
    %v1138 = vsel %vm1128, %v1124, 1326507024
    %v1139 = vsel %vm1127, %v1121, %v1138
    %v1140 = vsel %vm1126, %v1137, %v1139
    %v1141 = vshll.u32 %v1101, 8
    %v1142 = vmul.u32.u64.compose %v1141, %v1140
    %v1143 = vextract.low.u32 %v1142
    %v1144 = vextract.high.u32 %v1142
    %v1145 = vmul.u32.u64.compose %v1141, %v1136
    %v1146 = vextract.low.u32 %v1145
    %v1147 = vextract.high.u32 %v1145
    %v1148 = vmul.u32 %v1141, %v1132
    %v1149 = vadd.s32 %v1144, %v1146
    %vm1150 = vc.u32 %v1144, %v1146
    %v1151 = vadd.s32 %v1147, 1
    %v1152 = vsel %vm1150, %v1151, %v1147
    %v1153 = vadd.s32 %v1148, %v1152
    %v1154 = vadd.s32 %v1153, 536870912
    %v1155 = vshrl.u32 %v1154, 30
    %v1156 = vshll.u32 %v1155, 30
    %v1157 = vsub.s32 %v1153, %v1156
    %vm1158 = vcmp.lt.s32.totalorder %v1157, 0
    %v1159 = vsub.s32 0, %v1157
    %v1160 = vsel %vm1158, %v1159, %v1157
    %v1161 = vclz %v1160
    %v1162 = vsub.s32 %v1161, 2
    %vm1163 = vcmp.gt.s32.totalorder 0, %v1162
    %v1164 = vsel %vm1163, 0, %v1162
    %v1165 = vsub.s32 32, %v1164
    %v1166 = vshll.u32 %v1157, %v1164
    %v1167 = vshrl.u32 %v1149, %v1165
    %v1168 = vor.u32 %v1166, %v1167
    %v1169 = vsub.s32 4294967266, %v1164
    %v1170 = vadd.s32 %v1169, 127
    %v1171 = vshll.u32 %v1170, 23
    %v1172 = vor.u32 4788187, %v1171
    %v1173 = vand.u32 2147483647, %v1172
    %v1175 = vcvt.s32.f32 %v1168
    %v1176 = vmul.f32 %v1175, %v1173
    %v1177 = vxor.u32 %v1176, 2147483648
    %v1178 = vsel %vm1095, %v1177, %v1176
    %v1179 = vsub.s32 4, %v1155
    %v1180 = vsel %vm1095, %v1179, %v1155
    %v1181 = vsel %vm1094, %v1092, %v1178
    %v1182 = vsel %vm1094, 0, %v1180
    %v1183 = vcosq.f32.pop %v1181
    %v1184 = vsinq.f32.pop %v1181
    %vm1185 = vweird.f32 %v1092
    %v1186 = vand.u32 %v1182, 3
    %vm1187 = vcmp.lt.s32.totalorder %v1186, 2
    %vm1188 = vcmp.eq.s32.totalorder %v1186, 0
    %v1189 = vxor.u32 %v1184, 2147483648
    %v1190 = vsel %vm1188, %v1183, %v1189
    %vm1191 = vcmp.eq.s32.totalorder %v1186, 2
    %v1192 = vxor.u32 %v1183, 2147483648
    %v1193 = vsel %vm1191, %v1192, %v1184
    %v1194 = vsel %vm1187, %v1190, %v1193
    %v1195 = vsel %vm1185, nan, %v1194
    %v1196 = vand.u32 2147483647, %v1092
    %vm1197 = vcmp.le.f32.partialorder %v1196, 0.7853982
    %vm1198 = vcmp.lt.s32.totalorder %v1092, 0
    %v1199 = vand.u32 %v1092, 2139095040
    %v1200 = vshrl.u32 %v1199, 23
    %v1201 = vsub.s32 %v1200, 127
    %v1202 = vand.u32 2147483647, %v1092
    %v1203 = vand.u32 %v1202, 8388607
    %v1204 = vor.u32 %v1203, 8388608
    %v1205 = vsub.s32 0, %v1204
    %v1206 = vadd.s32 %v1201, 1
    %vm1207 = vcmp.gt.s32.totalorder %v1206, 0
    %v1208 = vsel %vm1207, %v1206, 0
    %v1209 = vshrl.u32 %v1208, 5
    %v1210 = vand.u32 %v1208, 31
    %v1211 = vsub.s32 32, %v1210
    %v1212 = vshrl.u32 683565275, %v1211
    %v1213 = vshll.u32 683565275, %v1210
    %v1214 = vshrl.u32 2475754826, %v1211
    %v1215 = vor.u32 %v1213, %v1214
    %v1216 = vshll.u32 2475754826, %v1210
    %v1217 = vshrl.u32 2131351028, %v1211
    %v1218 = vor.u32 %v1216, %v1217
    %v1219 = vshll.u32 2131351028, %v1210
    %v1220 = vshrl.u32 2102212464, %v1211
    %v1221 = vor.u32 %v1219, %v1220
    %v1222 = vshll.u32 2102212464, %v1210
    %v1223 = vshrl.u32 920167782, %v1211
    %v1224 = vor.u32 %v1222, %v1223
    %v1225 = vshll.u32 920167782, %v1210
    %v1226 = vshrl.u32 1326507024, %v1211
    %v1227 = vor.u32 %v1225, %v1226
    %vm1228 = vcmp.lt.s32.totalorder %v1209, 1
    %vm1229 = vcmp.lt.s32.totalorder %v1209, 2
    %vm1230 = vcmp.lt.s32.totalorder %v1209, 3
    %vm1231 = vcmp.lt.s32.totalorder %v1209, 4
    %v1232 = vsel %vm1228, %v1212, %v1215
    %v1233 = vsel %vm1231, %v1221, 2102212464
    %v1234 = vsel %vm1230, %v1218, %v1233
    %v1235 = vsel %vm1229, %v1232, %v1234
    %v1236 = vsel %vm1228, %v1215, %v1218
    %v1237 = vsel %vm1231, %v1224, 920167782
    %v1238 = vsel %vm1230, %v1221, %v1237
    %v1239 = vsel %vm1229, %v1236, %v1238
    %v1240 = vsel %vm1228, %v1218, %v1221
    %v1241 = vsel %vm1231, %v1227, 1326507024
    %v1242 = vsel %vm1230, %v1224, %v1241
    %v1243 = vsel %vm1229, %v1240, %v1242
    %v1244 = vshll.u32 %v1204, 8
    %v1245 = vmul.u32.u64.compose %v1244, %v1243
    %v1246 = vextract.low.u32 %v1245
    %v1247 = vextract.high.u32 %v1245
    %v1248 = vmul.u32.u64.compose %v1244, %v1239
    %v1249 = vextract.low.u32 %v1248
    %v1250 = vextract.high.u32 %v1248
    %v1251 = vmul.u32 %v1244, %v1235
    %v1252 = vadd.s32 %v1247, %v1249
    %vm1253 = vc.u32 %v1247, %v1249
    %v1254 = vadd.s32 %v1250, 1
    %v1255 = vsel %vm1253, %v1254, %v1250
    %v1256 = vadd.s32 %v1251, %v1255
    %v1257 = vadd.s32 %v1256, 536870912
    %v1258 = vshrl.u32 %v1257, 30
    %v1259 = vshll.u32 %v1258, 30
    %v1260 = vsub.s32 %v1256, %v1259
    %vm1261 = vcmp.lt.s32.totalorder %v1260, 0
    %v1262 = vsub.s32 0, %v1260
    %v1263 = vsel %vm1261, %v1262, %v1260
    %v1264 = vclz %v1263
    %v1265 = vsub.s32 %v1264, 2
    %vm1266 = vcmp.gt.s32.totalorder 0, %v1265
    %v1267 = vsel %vm1266, 0, %v1265
    %v1268 = vsub.s32 32, %v1267
    %v1269 = vshll.u32 %v1260, %v1267
    %v1270 = vshrl.u32 %v1252, %v1268
    %v1271 = vor.u32 %v1269, %v1270
    %v1272 = vsub.s32 4294967266, %v1267
    %v1273 = vadd.s32 %v1272, 127
    %v1274 = vshll.u32 %v1273, 23
    %v1275 = vor.u32 4788187, %v1274
    %v1276 = vand.u32 2147483647, %v1275
    %v1278 = vcvt.s32.f32 %v1271
    %v1279 = vmul.f32 %v1278, %v1276
    %v1280 = vxor.u32 %v1279, 2147483648
    %v1281 = vsel %vm1198, %v1280, %v1279
    %v1282 = vsub.s32 4, %v1258
    %v1283 = vsel %vm1198, %v1282, %v1258
    %v1284 = vsel %vm1197, %v1092, %v1281
    %v1285 = vsel %vm1197, 0, %v1283
    %v1286 = vcosq.f32.pop %v1284
    %v1287 = vsinq.f32.pop %v1284
    %vm1288 = vweird.f32 %v1092
    %v1289 = vadd.s32 %v1285, 3
    %v1290 = vand.u32 %v1289, 3
    %vm1291 = vcmp.lt.s32.totalorder %v1290, 2
    %vm1292 = vcmp.eq.s32.totalorder %v1290, 0
    %v1293 = vxor.u32 %v1287, 2147483648
    %v1294 = vsel %vm1292, %v1286, %v1293
    %vm1295 = vcmp.eq.s32.totalorder %v1290, 2
    %v1296 = vxor.u32 %v1286, 2147483648
    %v1297 = vsel %vm1295, %v1296, %v1287
    %v1298 = vsel %vm1291, %v1294, %v1297
    %v1299 = vsel %vm1288, nan, %v1298
    %v1301 = vcombine.high %v1195, %v1195
    %v1304 = vcombine.low %v1299, %v1299
    %vm1306 = vcmask 1043456
    %v1307 = vsel %vm1306, %v1195, %v1304
    %v1308 = vsel %vm1306, %v1301, %v1299
    %v1309 = vpack.c.bf16 %v1307, %v1307
    %v1310 = vpack.c.bf16 %v1308, %v1308
    %v1311 = vld [vmem:[%s1] sm:$0xff]
    %v1312 = vld [vmem:[%s1 + $0x8] sm:$0xff]
    %v1313 = vld [vmem:[%s1 + $0x10] sm:$0xff]
    %v1314 = vld [vmem:[%s1 + $0x18] sm:$0xff]
    %v1315 = vld [vmem:[%s1 + $0x20] sm:$0xff]
    %v1316 = vld [vmem:[%s1 + $0x28] sm:$0xff]
    %v1317 = vld [vmem:[%s1 + $0x30] sm:$0xff]
    %v1318 = vld [vmem:[%s1 + $0x38] sm:$0xff]
    %v1319 = vld [vmem:[%s1 + $0x40] sm:$0xff]
    %v1320 = vld [vmem:[%s1 + $0x48] sm:$0xff]
    %v1321 = vld [vmem:[%s1 + $0x50] sm:$0xff]
    %v1322 = vld [vmem:[%s1 + $0x58] sm:$0xff]
    %v1323 = vld [vmem:[%s1 + $0x60] sm:$0xff]
    %v1324 = vld [vmem:[%s1 + $0x68] sm:$0xff]
    %v1325 = vld [vmem:[%s1 + $0x70] sm:$0xff]
    %v1326 = vld [vmem:[%s1 + $0x78] sm:$0xff]
    %v1327 = vld [vmem:[%s1 + $0x80] sm:$0xff]
    %v1328 = vld [vmem:[%s1 + $0x88] sm:$0xff]
    %v1329 = vld [vmem:[%s1 + $0x90] sm:$0xff]
    %v1330 = vld [vmem:[%s1 + $0x98] sm:$0xff]
    %v1331 = vld [vmem:[%s1 + $0xa0] sm:$0xff]
    %v1332 = vld [vmem:[%s1 + $0xa8] sm:$0xff]
    %v1333 = vld [vmem:[%s1 + $0xb0] sm:$0xff]
    %v1334 = vld [vmem:[%s1 + $0xb8] sm:$0xff]
    %v1335 = vld [vmem:[%s1 + $0xc0] sm:$0xff]
    %v1336 = vld [vmem:[%s1 + $0xc8] sm:$0xff]
    %v1337 = vld [vmem:[%s1 + $0xd0] sm:$0xff]
    %v1338 = vld [vmem:[%s1 + $0xd8] sm:$0xff]
    %v1339 = vld [vmem:[%s1 + $0xe0] sm:$0xff]
    %v1340 = vld [vmem:[%s1 + $0xe8] sm:$0xff]
    %v1341 = vld [vmem:[%s1 + $0xf0] sm:$0xff]
    %v1342 = vld [vmem:[%s1 + $0xf8] sm:$0xff]
    %v1343 = vld [vmem:[%s1 + $0x100] sm:$0xff]
    %v1344 = vld [vmem:[%s1 + $0x108] sm:$0xff]
    %v1345 = vld [vmem:[%s1 + $0x110] sm:$0xff]
    %v1346 = vld [vmem:[%s1 + $0x118] sm:$0xff]
    %v1347 = vld [vmem:[%s1 + $0x120] sm:$0xff]
    %v1348 = vld [vmem:[%s1 + $0x128] sm:$0xff]
    %v1349 = vld [vmem:[%s1 + $0x130] sm:$0xff]
    %v1350 = vld [vmem:[%s1 + $0x138] sm:$0xff]
    %v1351 = vld [vmem:[%s1 + $0x140] sm:$0xff]
    %v1352 = vld [vmem:[%s1 + $0x148] sm:$0xff]
    %v1353 = vld [vmem:[%s1 + $0x150] sm:$0xff]
    %v1354 = vld [vmem:[%s1 + $0x158] sm:$0xff]
    %v1355 = vld [vmem:[%s1 + $0x160] sm:$0xff]
    %v1356 = vld [vmem:[%s1 + $0x168] sm:$0xff]
    %v1357 = vld [vmem:[%s1 + $0x170] sm:$0xff]
    %v1358 = vld [vmem:[%s1 + $0x178] sm:$0xff]
    %v1359 = vld [vmem:[%s1 + $0x180] sm:$0xff]
    %v1360 = vld [vmem:[%s1 + $0x188] sm:$0xff]
    %v1361 = vld [vmem:[%s1 + $0x190] sm:$0xff]
    %v1362 = vld [vmem:[%s1 + $0x198] sm:$0xff]
    %v1363 = vld [vmem:[%s1 + $0x1a0] sm:$0xff]
    %v1364 = vld [vmem:[%s1 + $0x1a8] sm:$0xff]
    %v1365 = vld [vmem:[%s1 + $0x1b0] sm:$0xff]
    %v1366 = vld [vmem:[%s1 + $0x1b8] sm:$0xff]
    %v1367 = vld [vmem:[%s1 + $0x1c0] sm:$0xff]
    %v1368 = vld [vmem:[%s1 + $0x1c8] sm:$0xff]
    %v1369 = vld [vmem:[%s1 + $0x1d0] sm:$0xff]
    %v1370 = vld [vmem:[%s1 + $0x1d8] sm:$0xff]
    %v1371 = vld [vmem:[%s1 + $0x1e0] sm:$0xff]
    %v1372 = vld [vmem:[%s1 + $0x1e8] sm:$0xff]
    %v1373 = vld [vmem:[%s1 + $0x1f0] sm:$0xff]
    %v1374 = vld [vmem:[%s1 + $0x1f8] sm:$0xff]
    %v1375 = vld [vmem:[%s1 + $0x200] sm:$0xff]
    %v1376 = vld [vmem:[%s1 + $0x208] sm:$0xff]
    %v1377 = vld [vmem:[%s1 + $0x210] sm:$0xff]
    %v1378 = vld [vmem:[%s1 + $0x218] sm:$0xff]
    %v1379 = vld [vmem:[%s1 + $0x220] sm:$0xff]
    %v1380 = vld [vmem:[%s1 + $0x228] sm:$0xff]
    %v1381 = vld [vmem:[%s1 + $0x230] sm:$0xff]
    %v1382 = vld [vmem:[%s1 + $0x238] sm:$0xff]
    %v1383 = vld [vmem:[%s1 + $0x240] sm:$0xff]
    %v1384 = vld [vmem:[%s1 + $0x248] sm:$0xff]
    %v1385 = vld [vmem:[%s1 + $0x250] sm:$0xff]
    %v1386 = vld [vmem:[%s1 + $0x258] sm:$0xff]
    %v1387 = vld [vmem:[%s1 + $0x260] sm:$0xff]
    %v1388 = vld [vmem:[%s1 + $0x268] sm:$0xff]
    %v1389 = vld [vmem:[%s1 + $0x270] sm:$0xff]
    %v1390 = vld [vmem:[%s1 + $0x278] sm:$0xff]
    %v1391 = vld [vmem:[%s1 + $0x280] sm:$0xff]
    %v1392 = vld [vmem:[%s1 + $0x288] sm:$0xff]
    %v1393 = vld [vmem:[%s1 + $0x290] sm:$0xff]
    %v1394 = vld [vmem:[%s1 + $0x298] sm:$0xff]
    %v1395 = vld [vmem:[%s1 + $0x2a0] sm:$0xff]
    %v1396 = vld [vmem:[%s1 + $0x2a8] sm:$0xff]
    %v1397 = vld [vmem:[%s1 + $0x2b0] sm:$0xff]
    %v1398 = vld [vmem:[%s1 + $0x2b8] sm:$0xff]
    %v1399 = vld [vmem:[%s1 + $0x2c0] sm:$0xff]
    %v1400 = vld [vmem:[%s1 + $0x2c8] sm:$0xff]
    %v1401 = vld [vmem:[%s1 + $0x2d0] sm:$0xff]
    %v1402 = vld [vmem:[%s1 + $0x2d8] sm:$0xff]
    %v1403 = vld [vmem:[%s1 + $0x2e0] sm:$0xff]
    %v1404 = vld [vmem:[%s1 + $0x2e8] sm:$0xff]
    %v1405 = vld [vmem:[%s1 + $0x2f0] sm:$0xff]
    %v1406 = vld [vmem:[%s1 + $0x2f8] sm:$0xff]
    %v1407 = vld [vmem:[%s1 + $0x300] sm:$0xff]
    %v1408 = vld [vmem:[%s1 + $0x308] sm:$0xff]
    %v1409 = vld [vmem:[%s1 + $0x310] sm:$0xff]
    %v1410 = vld [vmem:[%s1 + $0x318] sm:$0xff]
    %v1411 = vld [vmem:[%s1 + $0x320] sm:$0xff]
    %v1412 = vld [vmem:[%s1 + $0x328] sm:$0xff]
    %v1413 = vld [vmem:[%s1 + $0x330] sm:$0xff]
    %v1414 = vld [vmem:[%s1 + $0x338] sm:$0xff]
    %v1415 = vld [vmem:[%s1 + $0x340] sm:$0xff]
    %v1416 = vld [vmem:[%s1 + $0x348] sm:$0xff]
    %v1417 = vld [vmem:[%s1 + $0x350] sm:$0xff]
    %v1418 = vld [vmem:[%s1 + $0x358] sm:$0xff]
    %v1419 = vld [vmem:[%s1 + $0x360] sm:$0xff]
    %v1420 = vld [vmem:[%s1 + $0x368] sm:$0xff]
    %v1421 = vld [vmem:[%s1 + $0x370] sm:$0xff]
    %v1422 = vld [vmem:[%s1 + $0x378] sm:$0xff]
    %v1423 = vld [vmem:[%s1 + $0x380] sm:$0xff]
    %v1424 = vld [vmem:[%s1 + $0x388] sm:$0xff]
    %v1425 = vld [vmem:[%s1 + $0x390] sm:$0xff]
    %v1426 = vld [vmem:[%s1 + $0x398] sm:$0xff]
    %v1427 = vld [vmem:[%s1 + $0x3a0] sm:$0xff]
    %v1428 = vld [vmem:[%s1 + $0x3a8] sm:$0xff]
    %v1429 = vld [vmem:[%s1 + $0x3b0] sm:$0xff]
    %v1430 = vld [vmem:[%s1 + $0x3b8] sm:$0xff]
    %v1431 = vld [vmem:[%s1 + $0x3c0] sm:$0xff]
    %v1432 = vld [vmem:[%s1 + $0x3c8] sm:$0xff]
    %v1433 = vld [vmem:[%s1 + $0x3d0] sm:$0xff]
    %v1434 = vld [vmem:[%s1 + $0x3d8] sm:$0xff]
    %v1435 = vld [vmem:[%s1 + $0x3e0] sm:$0xff]
    %v1436 = vld [vmem:[%s1 + $0x3e8] sm:$0xff]
    %v1437 = vld [vmem:[%s1 + $0x3f0] sm:$0xff]
    %v1438 = vld [vmem:[%s1 + $0x3f8] sm:$0xff]
    %v1567 = vunpack.c.l.b16 %v1311
    %v1568 = vunpack.c.h.b16 %v1311
    %v1569 = vunpack.c.l.b16 %v1312
    %v1570 = vunpack.c.h.b16 %v1312
    %v1571 = vunpack.c.l.b16 %v1313
    %v1572 = vunpack.c.h.b16 %v1313
    %v1573 = vunpack.c.l.b16 %v1314
    %v1574 = vunpack.c.h.b16 %v1314
    %v1575 = vunpack.c.l.b16 %v1315
    %v1576 = vunpack.c.h.b16 %v1315
    %v1577 = vunpack.c.l.b16 %v1316
    %v1578 = vunpack.c.h.b16 %v1316
    %v1579 = vunpack.c.l.b16 %v1317
    %v1580 = vunpack.c.h.b16 %v1317
    %v1581 = vunpack.c.l.b16 %v1318
    %v1582 = vunpack.c.h.b16 %v1318
    %v1583 = vunpack.c.l.b16 %v1319
    %v1584 = vunpack.c.h.b16 %v1319
    %v1585 = vunpack.c.l.b16 %v1320
    %v1586 = vunpack.c.h.b16 %v1320
    %v1587 = vunpack.c.l.b16 %v1321
    %v1588 = vunpack.c.h.b16 %v1321
    %v1589 = vunpack.c.l.b16 %v1322
    %v1590 = vunpack.c.h.b16 %v1322
    %v1591 = vunpack.c.l.b16 %v1323
    %v1592 = vunpack.c.h.b16 %v1323
    %v1593 = vunpack.c.l.b16 %v1324
    %v1594 = vunpack.c.h.b16 %v1324
    %v1595 = vunpack.c.l.b16 %v1325
    %v1596 = vunpack.c.h.b16 %v1325
    %v1597 = vunpack.c.l.b16 %v1326
    %v1598 = vunpack.c.h.b16 %v1326
    %v1599 = vunpack.c.l.b16 %v1327
    %v1600 = vunpack.c.h.b16 %v1327
    %v1601 = vunpack.c.l.b16 %v1328
    %v1602 = vunpack.c.h.b16 %v1328
    %v1603 = vunpack.c.l.b16 %v1329
    %v1604 = vunpack.c.h.b16 %v1329
    %v1605 = vunpack.c.l.b16 %v1330
    %v1606 = vunpack.c.h.b16 %v1330
    %v1607 = vunpack.c.l.b16 %v1331
    %v1608 = vunpack.c.h.b16 %v1331
    %v1609 = vunpack.c.l.b16 %v1332
    %v1610 = vunpack.c.h.b16 %v1332
    %v1611 = vunpack.c.l.b16 %v1333
    %v1612 = vunpack.c.h.b16 %v1333
    %v1613 = vunpack.c.l.b16 %v1334
    %v1614 = vunpack.c.h.b16 %v1334
    %v1615 = vunpack.c.l.b16 %v1335
    %v1616 = vunpack.c.h.b16 %v1335
    %v1617 = vunpack.c.l.b16 %v1336
    %v1618 = vunpack.c.h.b16 %v1336
    %v1619 = vunpack.c.l.b16 %v1337
    %v1620 = vunpack.c.h.b16 %v1337
    %v1621 = vunpack.c.l.b16 %v1338
    %v1622 = vunpack.c.h.b16 %v1338
    %v1623 = vunpack.c.l.b16 %v1339
    %v1624 = vunpack.c.h.b16 %v1339
    %v1625 = vunpack.c.l.b16 %v1340
    %v1626 = vunpack.c.h.b16 %v1340
    %v1627 = vunpack.c.l.b16 %v1341
    %v1628 = vunpack.c.h.b16 %v1341
    %v1629 = vunpack.c.l.b16 %v1342
    %v1630 = vunpack.c.h.b16 %v1342
    %v1631 = vunpack.c.l.b16 %v1343
    %v1632 = vunpack.c.h.b16 %v1343
    %v1633 = vunpack.c.l.b16 %v1344
    %v1634 = vunpack.c.h.b16 %v1344
    %v1635 = vunpack.c.l.b16 %v1345
    %v1636 = vunpack.c.h.b16 %v1345
    %v1637 = vunpack.c.l.b16 %v1346
    %v1638 = vunpack.c.h.b16 %v1346
    %v1639 = vunpack.c.l.b16 %v1347
    %v1640 = vunpack.c.h.b16 %v1347
    %v1641 = vunpack.c.l.b16 %v1348
    %v1642 = vunpack.c.h.b16 %v1348
    %v1643 = vunpack.c.l.b16 %v1349
    %v1644 = vunpack.c.h.b16 %v1349
    %v1645 = vunpack.c.l.b16 %v1350
    %v1646 = vunpack.c.h.b16 %v1350
    %v1647 = vunpack.c.l.b16 %v1351
    %v1648 = vunpack.c.h.b16 %v1351
    %v1649 = vunpack.c.l.b16 %v1352
    %v1650 = vunpack.c.h.b16 %v1352
    %v1651 = vunpack.c.l.b16 %v1353
    %v1652 = vunpack.c.h.b16 %v1353
    %v1653 = vunpack.c.l.b16 %v1354
    %v1654 = vunpack.c.h.b16 %v1354
    %v1655 = vunpack.c.l.b16 %v1355
    %v1656 = vunpack.c.h.b16 %v1355
    %v1657 = vunpack.c.l.b16 %v1356
    %v1658 = vunpack.c.h.b16 %v1356
    %v1659 = vunpack.c.l.b16 %v1357
    %v1660 = vunpack.c.h.b16 %v1357
    %v1661 = vunpack.c.l.b16 %v1358
    %v1662 = vunpack.c.h.b16 %v1358
    %v1663 = vunpack.c.l.b16 %v1359
    %v1664 = vunpack.c.h.b16 %v1359
    %v1665 = vunpack.c.l.b16 %v1360
    %v1666 = vunpack.c.h.b16 %v1360
    %v1667 = vunpack.c.l.b16 %v1361
    %v1668 = vunpack.c.h.b16 %v1361
    %v1669 = vunpack.c.l.b16 %v1362
    %v1670 = vunpack.c.h.b16 %v1362
    %v1671 = vunpack.c.l.b16 %v1363
    %v1672 = vunpack.c.h.b16 %v1363
    %v1673 = vunpack.c.l.b16 %v1364
    %v1674 = vunpack.c.h.b16 %v1364
    %v1675 = vunpack.c.l.b16 %v1365
    %v1676 = vunpack.c.h.b16 %v1365
    %v1677 = vunpack.c.l.b16 %v1366
    %v1678 = vunpack.c.h.b16 %v1366
    %v1679 = vunpack.c.l.b16 %v1367
    %v1680 = vunpack.c.h.b16 %v1367
    %v1681 = vunpack.c.l.b16 %v1368
    %v1682 = vunpack.c.h.b16 %v1368
    %v1683 = vunpack.c.l.b16 %v1369
    %v1684 = vunpack.c.h.b16 %v1369
    %v1685 = vunpack.c.l.b16 %v1370
    %v1686 = vunpack.c.h.b16 %v1370
    %v1687 = vunpack.c.l.b16 %v1371
    %v1688 = vunpack.c.h.b16 %v1371
    %v1689 = vunpack.c.l.b16 %v1372
    %v1690 = vunpack.c.h.b16 %v1372
    %v1691 = vunpack.c.l.b16 %v1373
    %v1692 = vunpack.c.h.b16 %v1373
    %v1693 = vunpack.c.l.b16 %v1374
    %v1694 = vunpack.c.h.b16 %v1374
    %v1695 = vunpack.c.l.b16 %v1375
    %v1696 = vunpack.c.h.b16 %v1375
    %v1697 = vunpack.c.l.b16 %v1376
    %v1698 = vunpack.c.h.b16 %v1376
    %v1699 = vunpack.c.l.b16 %v1377
    %v1700 = vunpack.c.h.b16 %v1377
    %v1701 = vunpack.c.l.b16 %v1378
    %v1702 = vunpack.c.h.b16 %v1378
    %v1703 = vunpack.c.l.b16 %v1379
    %v1704 = vunpack.c.h.b16 %v1379
    %v1705 = vunpack.c.l.b16 %v1380
    %v1706 = vunpack.c.h.b16 %v1380
    %v1707 = vunpack.c.l.b16 %v1381
    %v1708 = vunpack.c.h.b16 %v1381
    %v1709 = vunpack.c.l.b16 %v1382
    %v1710 = vunpack.c.h.b16 %v1382
    %v1711 = vunpack.c.l.b16 %v1383
    %v1712 = vunpack.c.h.b16 %v1383
    %v1713 = vunpack.c.l.b16 %v1384
    %v1714 = vunpack.c.h.b16 %v1384
    %v1715 = vunpack.c.l.b16 %v1385
    %v1716 = vunpack.c.h.b16 %v1385
    %v1717 = vunpack.c.l.b16 %v1386
    %v1718 = vunpack.c.h.b16 %v1386
    %v1719 = vunpack.c.l.b16 %v1387
    %v1720 = vunpack.c.h.b16 %v1387
    %v1721 = vunpack.c.l.b16 %v1388
    %v1722 = vunpack.c.h.b16 %v1388
    %v1723 = vunpack.c.l.b16 %v1389
    %v1724 = vunpack.c.h.b16 %v1389
    %v1725 = vunpack.c.l.b16 %v1390
    %v1726 = vunpack.c.h.b16 %v1390
    %v1727 = vunpack.c.l.b16 %v1391
    %v1728 = vunpack.c.h.b16 %v1391
    %v1729 = vunpack.c.l.b16 %v1392
    %v1730 = vunpack.c.h.b16 %v1392
    %v1731 = vunpack.c.l.b16 %v1393
    %v1732 = vunpack.c.h.b16 %v1393
    %v1733 = vunpack.c.l.b16 %v1394
    %v1734 = vunpack.c.h.b16 %v1394
    %v1735 = vunpack.c.l.b16 %v1395
    %v1736 = vunpack.c.h.b16 %v1395
    %v1737 = vunpack.c.l.b16 %v1396
    %v1738 = vunpack.c.h.b16 %v1396
    %v1739 = vunpack.c.l.b16 %v1397
    %v1740 = vunpack.c.h.b16 %v1397
    %v1741 = vunpack.c.l.b16 %v1398
    %v1742 = vunpack.c.h.b16 %v1398
    %v1743 = vunpack.c.l.b16 %v1399
    %v1744 = vunpack.c.h.b16 %v1399
    %v1745 = vunpack.c.l.b16 %v1400
    %v1746 = vunpack.c.h.b16 %v1400
    %v1747 = vunpack.c.l.b16 %v1401
    %v1748 = vunpack.c.h.b16 %v1401
    %v1749 = vunpack.c.l.b16 %v1402
    %v1750 = vunpack.c.h.b16 %v1402
    %v1751 = vunpack.c.l.b16 %v1403
    %v1752 = vunpack.c.h.b16 %v1403
    %v1753 = vunpack.c.l.b16 %v1404
    %v1754 = vunpack.c.h.b16 %v1404
    %v1755 = vunpack.c.l.b16 %v1405
    %v1756 = vunpack.c.h.b16 %v1405
    %v1757 = vunpack.c.l.b16 %v1406
    %v1758 = vunpack.c.h.b16 %v1406
    %v1759 = vunpack.c.l.b16 %v1407
    %v1760 = vunpack.c.h.b16 %v1407
    %v1761 = vunpack.c.l.b16 %v1408
    %v1762 = vunpack.c.h.b16 %v1408
    %v1763 = vunpack.c.l.b16 %v1409
    %v1764 = vunpack.c.h.b16 %v1409
    %v1765 = vunpack.c.l.b16 %v1410
    %v1766 = vunpack.c.h.b16 %v1410
    %v1767 = vunpack.c.l.b16 %v1411
    %v1768 = vunpack.c.h.b16 %v1411
    %v1769 = vunpack.c.l.b16 %v1412
    %v1770 = vunpack.c.h.b16 %v1412
    %v1771 = vunpack.c.l.b16 %v1413
    %v1772 = vunpack.c.h.b16 %v1413
    %v1773 = vunpack.c.l.b16 %v1414
    %v1774 = vunpack.c.h.b16 %v1414
    %v1775 = vunpack.c.l.b16 %v1415
    %v1776 = vunpack.c.h.b16 %v1415
    %v1777 = vunpack.c.l.b16 %v1416
    %v1778 = vunpack.c.h.b16 %v1416
    %v1779 = vunpack.c.l.b16 %v1417
    %v1780 = vunpack.c.h.b16 %v1417
    %v1781 = vunpack.c.l.b16 %v1418
    %v1782 = vunpack.c.h.b16 %v1418
    %v1783 = vunpack.c.l.b16 %v1419
    %v1784 = vunpack.c.h.b16 %v1419
    %v1785 = vunpack.c.l.b16 %v1420
    %v1786 = vunpack.c.h.b16 %v1420
    %v1787 = vunpack.c.l.b16 %v1421
    %v1788 = vunpack.c.h.b16 %v1421
    %v1789 = vunpack.c.l.b16 %v1422
    %v1790 = vunpack.c.h.b16 %v1422
    %v1791 = vunpack.c.l.b16 %v1423
    %v1792 = vunpack.c.h.b16 %v1423
    %v1793 = vunpack.c.l.b16 %v1424
    %v1794 = vunpack.c.h.b16 %v1424
    %v1795 = vunpack.c.l.b16 %v1425
    %v1796 = vunpack.c.h.b16 %v1425
    %v1797 = vunpack.c.l.b16 %v1426
    %v1798 = vunpack.c.h.b16 %v1426
    %v1799 = vunpack.c.l.b16 %v1427
    %v1800 = vunpack.c.h.b16 %v1427
    %v1801 = vunpack.c.l.b16 %v1428
    %v1802 = vunpack.c.h.b16 %v1428
    %v1803 = vunpack.c.l.b16 %v1429
    %v1804 = vunpack.c.h.b16 %v1429
    %v1805 = vunpack.c.l.b16 %v1430
    %v1806 = vunpack.c.h.b16 %v1430
    %v1807 = vunpack.c.l.b16 %v1431
    %v1808 = vunpack.c.h.b16 %v1431
    %v1809 = vunpack.c.l.b16 %v1432
    %v1810 = vunpack.c.h.b16 %v1432
    %v1811 = vunpack.c.l.b16 %v1433
    %v1812 = vunpack.c.h.b16 %v1433
    %v1813 = vunpack.c.l.b16 %v1434
    %v1814 = vunpack.c.h.b16 %v1434
    %v1815 = vunpack.c.l.b16 %v1435
    %v1816 = vunpack.c.h.b16 %v1435
    %v1817 = vunpack.c.l.b16 %v1436
    %v1818 = vunpack.c.h.b16 %v1436
    %v1819 = vunpack.c.l.b16 %v1437
    %v1820 = vunpack.c.h.b16 %v1437
    %v1821 = vunpack.c.l.b16 %v1438
    %v1822 = vunpack.c.h.b16 %v1438
    %v1823 = vpack.c.b16 %v1575, %v1567
    %v1824 = vpack.c.b16 %v1576, %v1568
    %v1825 = vpack.c.b16 %v1577, %v1569
    %v1826 = vpack.c.b16 %v1578, %v1570
    %v1827 = vpack.c.b16 %v1579, %v1571
    %v1828 = vpack.c.b16 %v1580, %v1572
    %v1829 = vpack.c.b16 %v1581, %v1573
    %v1830 = vpack.c.b16 %v1582, %v1574
    %v1831 = vpack.c.b16 %v1591, %v1583
    %v1832 = vpack.c.b16 %v1592, %v1584
    %v1833 = vpack.c.b16 %v1593, %v1585
    %v1834 = vpack.c.b16 %v1594, %v1586
    %v1835 = vpack.c.b16 %v1595, %v1587
    %v1836 = vpack.c.b16 %v1596, %v1588
    %v1837 = vpack.c.b16 %v1597, %v1589
    %v1838 = vpack.c.b16 %v1598, %v1590
    %v1839 = vpack.c.b16 %v1607, %v1599
    %v1840 = vpack.c.b16 %v1608, %v1600
    %v1841 = vpack.c.b16 %v1609, %v1601
    %v1842 = vpack.c.b16 %v1610, %v1602
    %v1843 = vpack.c.b16 %v1611, %v1603
    %v1844 = vpack.c.b16 %v1612, %v1604
    %v1845 = vpack.c.b16 %v1613, %v1605
    %v1846 = vpack.c.b16 %v1614, %v1606
    %v1847 = vpack.c.b16 %v1623, %v1615
    %v1848 = vpack.c.b16 %v1624, %v1616
    %v1849 = vpack.c.b16 %v1625, %v1617
    %v1850 = vpack.c.b16 %v1626, %v1618
    %v1851 = vpack.c.b16 %v1627, %v1619
    %v1852 = vpack.c.b16 %v1628, %v1620
    %v1853 = vpack.c.b16 %v1629, %v1621
    %v1854 = vpack.c.b16 %v1630, %v1622
    %v1855 = vpack.c.b16 %v1639, %v1631
    %v1856 = vpack.c.b16 %v1640, %v1632
    %v1857 = vpack.c.b16 %v1641, %v1633
    %v1858 = vpack.c.b16 %v1642, %v1634
    %v1859 = vpack.c.b16 %v1643, %v1635
    %v1860 = vpack.c.b16 %v1644, %v1636
    %v1861 = vpack.c.b16 %v1645, %v1637
    %v1862 = vpack.c.b16 %v1646, %v1638
    %v1863 = vpack.c.b16 %v1655, %v1647
    %v1864 = vpack.c.b16 %v1656, %v1648
    %v1865 = vpack.c.b16 %v1657, %v1649
    %v1866 = vpack.c.b16 %v1658, %v1650
    %v1867 = vpack.c.b16 %v1659, %v1651
    %v1868 = vpack.c.b16 %v1660, %v1652
    %v1869 = vpack.c.b16 %v1661, %v1653
    %v1870 = vpack.c.b16 %v1662, %v1654
    %v1871 = vpack.c.b16 %v1671, %v1663
    %v1872 = vpack.c.b16 %v1672, %v1664
    %v1873 = vpack.c.b16 %v1673, %v1665
    %v1874 = vpack.c.b16 %v1674, %v1666
    %v1875 = vpack.c.b16 %v1675, %v1667
    %v1876 = vpack.c.b16 %v1676, %v1668
    %v1877 = vpack.c.b16 %v1677, %v1669
    %v1878 = vpack.c.b16 %v1678, %v1670
    %v1879 = vpack.c.b16 %v1687, %v1679
    %v1880 = vpack.c.b16 %v1688, %v1680
    %v1881 = vpack.c.b16 %v1689, %v1681
    %v1882 = vpack.c.b16 %v1690, %v1682
    %v1883 = vpack.c.b16 %v1691, %v1683
    %v1884 = vpack.c.b16 %v1692, %v1684
    %v1885 = vpack.c.b16 %v1693, %v1685
    %v1886 = vpack.c.b16 %v1694, %v1686
    %v1887 = vpack.c.b16 %v1703, %v1695
    %v1888 = vpack.c.b16 %v1704, %v1696
    %v1889 = vpack.c.b16 %v1705, %v1697
    %v1890 = vpack.c.b16 %v1706, %v1698
    %v1891 = vpack.c.b16 %v1707, %v1699
    %v1892 = vpack.c.b16 %v1708, %v1700
    %v1893 = vpack.c.b16 %v1709, %v1701
    %v1894 = vpack.c.b16 %v1710, %v1702
    %v1895 = vpack.c.b16 %v1719, %v1711
    %v1896 = vpack.c.b16 %v1720, %v1712
    %v1897 = vpack.c.b16 %v1721, %v1713
    %v1898 = vpack.c.b16 %v1722, %v1714
    %v1899 = vpack.c.b16 %v1723, %v1715
    %v1900 = vpack.c.b16 %v1724, %v1716
    %v1901 = vpack.c.b16 %v1725, %v1717
    %v1902 = vpack.c.b16 %v1726, %v1718
    %v1903 = vpack.c.b16 %v1735, %v1727
    %v1904 = vpack.c.b16 %v1736, %v1728
    %v1905 = vpack.c.b16 %v1737, %v1729
    %v1906 = vpack.c.b16 %v1738, %v1730
    %v1907 = vpack.c.b16 %v1739, %v1731
    %v1908 = vpack.c.b16 %v1740, %v1732
    %v1909 = vpack.c.b16 %v1741, %v1733
    %v1910 = vpack.c.b16 %v1742, %v1734
    %v1911 = vpack.c.b16 %v1751, %v1743
    %v1912 = vpack.c.b16 %v1752, %v1744
    %v1913 = vpack.c.b16 %v1753, %v1745
    %v1914 = vpack.c.b16 %v1754, %v1746
    %v1915 = vpack.c.b16 %v1755, %v1747
    %v1916 = vpack.c.b16 %v1756, %v1748
    %v1917 = vpack.c.b16 %v1757, %v1749
    %v1918 = vpack.c.b16 %v1758, %v1750
    %v1919 = vpack.c.b16 %v1767, %v1759
    %v1920 = vpack.c.b16 %v1768, %v1760
    %v1921 = vpack.c.b16 %v1769, %v1761
    %v1922 = vpack.c.b16 %v1770, %v1762
    %v1923 = vpack.c.b16 %v1771, %v1763
    %v1924 = vpack.c.b16 %v1772, %v1764
    %v1925 = vpack.c.b16 %v1773, %v1765
    %v1926 = vpack.c.b16 %v1774, %v1766
    %v1927 = vpack.c.b16 %v1783, %v1775
    %v1928 = vpack.c.b16 %v1784, %v1776
    %v1929 = vpack.c.b16 %v1785, %v1777
    %v1930 = vpack.c.b16 %v1786, %v1778
    %v1931 = vpack.c.b16 %v1787, %v1779
    %v1932 = vpack.c.b16 %v1788, %v1780
    %v1933 = vpack.c.b16 %v1789, %v1781
    %v1934 = vpack.c.b16 %v1790, %v1782
    %v1935 = vpack.c.b16 %v1799, %v1791
    %v1936 = vpack.c.b16 %v1800, %v1792
    %v1937 = vpack.c.b16 %v1801, %v1793
    %v1938 = vpack.c.b16 %v1802, %v1794
    %v1939 = vpack.c.b16 %v1803, %v1795
    %v1940 = vpack.c.b16 %v1804, %v1796
    %v1941 = vpack.c.b16 %v1805, %v1797
    %v1942 = vpack.c.b16 %v1806, %v1798
    %v1943 = vpack.c.b16 %v1815, %v1807
    %v1944 = vpack.c.b16 %v1816, %v1808
    %v1945 = vpack.c.b16 %v1817, %v1809
    %v1946 = vpack.c.b16 %v1818, %v1810
    %v1947 = vpack.c.b16 %v1819, %v1811
    %v1948 = vpack.c.b16 %v1820, %v1812
    %v1949 = vpack.c.b16 %v1821, %v1813
    %v1950 = vpack.c.b16 %v1822, %v1814
    %2079 = vmatprep.subr.bf16.mxu0 %v1824
    %2080 = vmatpush1.bf16.msra.mxu0 %v1823
    %2081 = vmatprep.subr.bf16.mxu0 %v1832
    %2082 = vmatpush1.bf16.msra.mxu0 %v1831
    %2083 = vmatprep.subr.bf16.mxu0 %v1840
    %2084 = vmatpush1.bf16.msra.mxu0 %v1839
    %2085 = vmatprep.subr.bf16.mxu0 %v1848
    %2086 = vmatpush1.bf16.msra.mxu0 %v1847
    %2087 = vmatprep.subr.bf16.mxu0 %v1856
    %2088 = vmatpush1.bf16.msra.mxu0 %v1855
    %2089 = vmatprep.subr.bf16.mxu0 %v1864
    %2090 = vmatpush1.bf16.msra.mxu0 %v1863
    %2091 = vmatprep.subr.bf16.mxu0 %v1872
    %2092 = vmatpush1.bf16.msra.mxu0 %v1871
    %2093 = vmatprep.subr.bf16.mxu0 %v1880
    %2094 = vmatpush1.bf16.msra.mxu0 %v1879
    %2095 = vmatprep.subr.bf16.mxu0 %v1888
    %2096 = vmatpush1.bf16.msra.mxu0 %v1887
    %2097 = vmatprep.subr.bf16.mxu0 %v1896
    %2098 = vmatpush1.bf16.msra.mxu0 %v1895
    %2099 = vmatprep.subr.bf16.mxu0 %v1904
    %2100 = vmatpush1.bf16.msra.mxu0 %v1903
    %2101 = vmatprep.subr.bf16.mxu0 %v1912
    %2102 = vmatpush1.bf16.msra.mxu0 %v1911
    %2103 = vmatprep.subr.bf16.mxu0 %v1920
    %2104 = vmatpush1.bf16.msra.mxu0 %v1919
    %2105 = vmatprep.subr.bf16.mxu0 %v1928
    %2106 = vmatpush1.bf16.msra.mxu0 %v1927
    %2107 = vmatprep.subr.bf16.mxu0 %v1936
    %2108 = vmatpush1.bf16.msra.mxu0 %v1935
    %2109 = vmatprep.subr.bf16.mxu0 %v1944
    %2110 = vmatpush1.bf16.msra.mxu0 %v1943
    %2111 = vmatprep.mubr.bf16.mxu0 %v1310
    %2112 = vmatmul.mubr.bf16.gmra.mrb[0].mxu0 %v1309
    %v2113 = vpop.f32.mrb[0].mxu0
    %v2114 = vadd.f32 0.0, %v2113
    %v2115 = vpop.f32.mrb[0].mxu0
    %v2116 = vadd.f32 0.0, %v2115
    %v2117 = vpop.f32.mrb[0].mxu0
    %v2118 = vpop.f32.mrb[0].mxu0
    %2119 = vdwg.mxu0
    %2120 = vmatprep.subr.bf16.mxu0 %v1826
    %2121 = vmatpush1.bf16.msra.mxu0 %v1825
    %2122 = vmatprep.subr.bf16.mxu0 %v1834
    %2123 = vmatpush1.bf16.msra.mxu0 %v1833
    %2124 = vmatprep.subr.bf16.mxu0 %v1842
    %2125 = vmatpush1.bf16.msra.mxu0 %v1841
    %2126 = vmatprep.subr.bf16.mxu0 %v1850
    %2127 = vmatpush1.bf16.msra.mxu0 %v1849
    %2128 = vmatprep.subr.bf16.mxu0 %v1858
    %2129 = vmatpush1.bf16.msra.mxu0 %v1857
    %2130 = vmatprep.subr.bf16.mxu0 %v1866
    %2131 = vmatpush1.bf16.msra.mxu0 %v1865
    %2132 = vmatprep.subr.bf16.mxu0 %v1874
    %2133 = vmatpush1.bf16.msra.mxu0 %v1873
    %2134 = vmatprep.subr.bf16.mxu0 %v1882
    %2135 = vmatpush1.bf16.msra.mxu0 %v1881
    %2136 = vmatprep.subr.bf16.mxu0 %v1890
    %2137 = vmatpush1.bf16.msra.mxu0 %v1889
    %2138 = vmatprep.subr.bf16.mxu0 %v1898
    %2139 = vmatpush1.bf16.msra.mxu0 %v1897
    %2140 = vmatprep.subr.bf16.mxu0 %v1906
    %2141 = vmatpush1.bf16.msra.mxu0 %v1905
    %2142 = vmatprep.subr.bf16.mxu0 %v1914
    %2143 = vmatpush1.bf16.msra.mxu0 %v1913
    %2144 = vmatprep.subr.bf16.mxu0 %v1922
    %2145 = vmatpush1.bf16.msra.mxu0 %v1921
    %2146 = vmatprep.subr.bf16.mxu0 %v1930
    %2147 = vmatpush1.bf16.msra.mxu0 %v1929
    %2148 = vmatprep.subr.bf16.mxu0 %v1938
    %2149 = vmatpush1.bf16.msra.mxu0 %v1937
    %2150 = vmatprep.subr.bf16.mxu0 %v1946
    %2151 = vmatpush1.bf16.msra.mxu0 %v1945
    %2152 = vmatprep.mubr.bf16.mxu0 %v1310
    %2153 = vmatmul.mubr.bf16.gmra.mrb[0].mxu0 %v1309
    %v2154 = vpop.f32.mrb[0].mxu0
    %v2155 = vadd.f32 0.0, %v2154
    %v2156 = vpop.f32.mrb[0].mxu0
    %v2157 = vadd.f32 0.0, %v2156
    %v2158 = vpop.f32.mrb[0].mxu0
    %v2159 = vpop.f32.mrb[0].mxu0
    %2160 = vdwg.mxu0
    %2161 = vmatprep.subr.bf16.mxu0 %v1828
    %2162 = vmatpush1.bf16.msra.mxu0 %v1827
    %2163 = vmatprep.subr.bf16.mxu0 %v1836
    %2164 = vmatpush1.bf16.msra.mxu0 %v1835
    %2165 = vmatprep.subr.bf16.mxu0 %v1844
    %2166 = vmatpush1.bf16.msra.mxu0 %v1843
    %2167 = vmatprep.subr.bf16.mxu0 %v1852
    %2168 = vmatpush1.bf16.msra.mxu0 %v1851
    %2169 = vmatprep.subr.bf16.mxu0 %v1860
    %2170 = vmatpush1.bf16.msra.mxu0 %v1859
    %2171 = vmatprep.subr.bf16.mxu0 %v1868
    %2172 = vmatpush1.bf16.msra.mxu0 %v1867
    %2173 = vmatprep.subr.bf16.mxu0 %v1876
    %2174 = vmatpush1.bf16.msra.mxu0 %v1875
    %2175 = vmatprep.subr.bf16.mxu0 %v1884
    %2176 = vmatpush1.bf16.msra.mxu0 %v1883
    %2177 = vmatprep.subr.bf16.mxu0 %v1892
    %2178 = vmatpush1.bf16.msra.mxu0 %v1891
    %2179 = vmatprep.subr.bf16.mxu0 %v1900
    %2180 = vmatpush1.bf16.msra.mxu0 %v1899
    %2181 = vmatprep.subr.bf16.mxu0 %v1908
    %2182 = vmatpush1.bf16.msra.mxu0 %v1907
    %2183 = vmatprep.subr.bf16.mxu0 %v1916
    %2184 = vmatpush1.bf16.msra.mxu0 %v1915
    %2185 = vmatprep.subr.bf16.mxu0 %v1924
    %2186 = vmatpush1.bf16.msra.mxu0 %v1923
    %2187 = vmatprep.subr.bf16.mxu0 %v1932
    %2188 = vmatpush1.bf16.msra.mxu0 %v1931
    %2189 = vmatprep.subr.bf16.mxu0 %v1940
    %2190 = vmatpush1.bf16.msra.mxu0 %v1939
    %2191 = vmatprep.subr.bf16.mxu0 %v1948
    %2192 = vmatpush1.bf16.msra.mxu0 %v1947
    %2193 = vmatprep.mubr.bf16.mxu0 %v1310
    %2194 = vmatmul.mubr.bf16.gmra.mrb[0].mxu0 %v1309
    %v2195 = vpop.f32.mrb[0].mxu0
    %v2196 = vadd.f32 0.0, %v2195
    %v2197 = vpop.f32.mrb[0].mxu0
    %v2198 = vadd.f32 0.0, %v2197
    %v2199 = vpop.f32.mrb[0].mxu0
    %v2200 = vpop.f32.mrb[0].mxu0
    %2201 = vdwg.mxu0
    %2202 = vmatprep.subr.bf16.mxu0 %v1830
    %2203 = vmatpush1.bf16.msra.mxu0 %v1829
    %2204 = vmatprep.subr.bf16.mxu0 %v1838
    %2205 = vmatpush1.bf16.msra.mxu0 %v1837
    %2206 = vmatprep.subr.bf16.mxu0 %v1846
    %2207 = vmatpush1.bf16.msra.mxu0 %v1845
    %2208 = vmatprep.subr.bf16.mxu0 %v1854
    %2209 = vmatpush1.bf16.msra.mxu0 %v1853
    %2210 = vmatprep.subr.bf16.mxu0 %v1862
    %2211 = vmatpush1.bf16.msra.mxu0 %v1861
    %2212 = vmatprep.subr.bf16.mxu0 %v1870
    %2213 = vmatpush1.bf16.msra.mxu0 %v1869
    %2214 = vmatprep.subr.bf16.mxu0 %v1878
    %2215 = vmatpush1.bf16.msra.mxu0 %v1877
    %2216 = vmatprep.subr.bf16.mxu0 %v1886
    %2217 = vmatpush1.bf16.msra.mxu0 %v1885
    %2218 = vmatprep.subr.bf16.mxu0 %v1894
    %2219 = vmatpush1.bf16.msra.mxu0 %v1893
    %2220 = vmatprep.subr.bf16.mxu0 %v1902
    %2221 = vmatpush1.bf16.msra.mxu0 %v1901
    %2222 = vmatprep.subr.bf16.mxu0 %v1910
    %2223 = vmatpush1.bf16.msra.mxu0 %v1909
    %2224 = vmatprep.subr.bf16.mxu0 %v1918
    %2225 = vmatpush1.bf16.msra.mxu0 %v1917
    %2226 = vmatprep.subr.bf16.mxu0 %v1926
    %2227 = vmatpush1.bf16.msra.mxu0 %v1925
    %2228 = vmatprep.subr.bf16.mxu0 %v1934
    %2229 = vmatpush1.bf16.msra.mxu0 %v1933
    %2230 = vmatprep.subr.bf16.mxu0 %v1942
    %2231 = vmatpush1.bf16.msra.mxu0 %v1941
    %2232 = vmatprep.subr.bf16.mxu0 %v1950
    %2233 = vmatpush1.bf16.msra.mxu0 %v1949
    %2234 = vmatprep.mubr.bf16.mxu0 %v1310
    %2235 = vmatmul.mubr.bf16.gmra.mrb[0].mxu0 %v1309
    %v2236 = vpop.f32.mrb[0].mxu0
    %v2237 = vadd.f32 0.0, %v2236
    %v2238 = vpop.f32.mrb[0].mxu0
    %v2239 = vadd.f32 0.0, %v2238
    %v2240 = vpop.f32.mrb[0].mxu0
    %v2241 = vpop.f32.mrb[0].mxu0
    %2242 = vdwg.mxu0
    %v2247 = vrot.slane %v2196, 4
    %v2248 = vrot.slane %v2198, 4
    %v2249 = vrot.slane %v2237, 4
    %v2250 = vrot.slane %v2239, 4
    %v2255 = vsub.f32 %v2114, %v2247
    %v2256 = vsub.f32 %v2116, %v2248
    %v2257 = vsub.f32 %v2155, %v2249
    %v2258 = vsub.f32 %v2157, %v2250
    %v2263 = vrot.slane %v2114, 4
    %v2264 = vrot.slane %v2116, 4
    %v2265 = vrot.slane %v2155, 4
    %v2266 = vrot.slane %v2157, 4
    %v2271 = vadd.f32 %v2196, %v2263
    %v2272 = vadd.f32 %v2198, %v2264
    %v2273 = vadd.f32 %v2237, %v2265
    %v2274 = vadd.f32 %v2239, %v2266
    %v2275 = vlaneseq
    %v2276 = vshrl.u32 %v2275, 7
    %v2277 = vsub.s32 0, %v2276
    %v2278 = vrot.slane %v2255, %v2277
    %v2279 = vlaneseq
    %v2280 = vshrl.u32 %v2279, 7
    %v2281 = vsub.s32 0, %v2280
    %v2282 = vrot.slane %v2256, %v2281
    %v2283 = vlaneseq
    %v2284 = vshrl.u32 %v2283, 7
    %v2285 = vsub.s32 0, %v2284
    %v2286 = vrot.slane %v2257, %v2285
    %v2287 = vlaneseq
    %v2288 = vshrl.u32 %v2287, 7
    %v2289 = vsub.s32 0, %v2288
    %v2290 = vrot.slane %v2258, %v2289
    %v2291 = vmul.f32 %v2255, %v2278
    %v2292 = vmul.f32 %v2256, %v2282
    %v2293 = vmul.f32 %v2257, %v2286
    %v2294 = vmul.f32 %v2258, %v2290
    %v2295 = vlaneseq
    %v2296 = vshrl.u32 %v2295, 7
    %v2297 = vsub.s32 0, %v2296
    %v2298 = vrot.slane %v2271, %v2297
    %v2299 = vlaneseq
    %v2300 = vshrl.u32 %v2299, 7
    %v2301 = vsub.s32 0, %v2300
    %v2302 = vrot.slane %v2272, %v2301
    %v2303 = vlaneseq
    %v2304 = vshrl.u32 %v2303, 7
    %v2305 = vsub.s32 0, %v2304
    %v2306 = vrot.slane %v2273, %v2305
    %v2307 = vlaneseq
    %v2308 = vshrl.u32 %v2307, 7
    %v2309 = vsub.s32 0, %v2308
    %v2310 = vrot.slane %v2274, %v2309
    %v2311 = vmul.f32 %v2271, %v2298
    %v2312 = vmul.f32 %v2272, %v2302
    %v2313 = vmul.f32 %v2273, %v2306
    %v2314 = vmul.f32 %v2274, %v2310
    %v2315 = vadd.f32 %v2291, %v2311
    %v2316 = vadd.f32 %v2292, %v2312
    %v2317 = vadd.f32 %v2293, %v2313
    %v2318 = vadd.f32 %v2294, %v2314
    %v2319 = vpack.c.bf16 %v2315, %v2315
    %v2320 = vpack.c.bf16 %v2316, %v2316
    %v2321 = vpack.c.bf16 %v2317, %v2317
    %v2322 = vpack.c.bf16 %v2318, %v2318
    %v2323 = vmul.f32 %v2271, %v2278
    %v2324 = vmul.f32 %v2272, %v2282
    %v2325 = vmul.f32 %v2273, %v2286
    %v2326 = vmul.f32 %v2274, %v2290
    %v2327 = vmul.f32 %v2255, %v2298
    %v2328 = vmul.f32 %v2256, %v2302
    %v2329 = vmul.f32 %v2257, %v2306
    %v2330 = vmul.f32 %v2258, %v2310
    %v2331 = vsub.f32 %v2323, %v2327
    %v2332 = vsub.f32 %v2324, %v2328
    %v2333 = vsub.f32 %v2325, %v2329
    %v2334 = vsub.f32 %v2326, %v2330
    %v2335 = vpack.c.bf16 %v2331, %v2331
    %v2336 = vpack.c.bf16 %v2332, %v2332
    %v2337 = vpack.c.bf16 %v2333, %v2333
    %v2338 = vpack.c.bf16 %v2334, %v2334
    %v2339 = vlaneseq
    %v2340 = vshrl.u32 %v2339, 7
    %v2341 = vsub.s32 1, %v2340
    %v2342 = vrot.slane %v2255, %v2341
    %v2343 = vlaneseq
    %v2344 = vshrl.u32 %v2343, 7
    %v2345 = vsub.s32 1, %v2344
    %v2346 = vrot.slane %v2256, %v2345
    %v2347 = vlaneseq
    %v2348 = vshrl.u32 %v2347, 7
    %v2349 = vsub.s32 1, %v2348
    %v2350 = vrot.slane %v2257, %v2349
    %v2351 = vlaneseq
    %v2352 = vshrl.u32 %v2351, 7
    %v2353 = vsub.s32 1, %v2352
    %v2354 = vrot.slane %v2258, %v2353
    %v2355 = vmul.f32 %v2255, %v2342
    %v2356 = vmul.f32 %v2256, %v2346
    %v2357 = vmul.f32 %v2257, %v2350
    %v2358 = vmul.f32 %v2258, %v2354
    %v2359 = vlaneseq
    %v2360 = vshrl.u32 %v2359, 7
    %v2361 = vsub.s32 1, %v2360
    %v2362 = vrot.slane %v2271, %v2361
    %v2363 = vlaneseq
    %v2364 = vshrl.u32 %v2363, 7
    %v2365 = vsub.s32 1, %v2364
    %v2366 = vrot.slane %v2272, %v2365
    %v2367 = vlaneseq
    %v2368 = vshrl.u32 %v2367, 7
    %v2369 = vsub.s32 1, %v2368
    %v2370 = vrot.slane %v2273, %v2369
    %v2371 = vlaneseq
    %v2372 = vshrl.u32 %v2371, 7
    %v2373 = vsub.s32 1, %v2372
    %v2374 = vrot.slane %v2274, %v2373
    %v2375 = vmul.f32 %v2271, %v2362
    %v2376 = vmul.f32 %v2272, %v2366
    %v2377 = vmul.f32 %v2273, %v2370
    %v2378 = vmul.f32 %v2274, %v2374
    %v2379 = vadd.f32 %v2355, %v2375
    %v2380 = vadd.f32 %v2356, %v2376
    %v2381 = vadd.f32 %v2357, %v2377
    %v2382 = vadd.f32 %v2358, %v2378
    %v2383 = vpack.c.bf16 %v2379, %v2379
    %v2384 = vpack.c.bf16 %v2380, %v2380
    %v2385 = vpack.c.bf16 %v2381, %v2381
    %v2386 = vpack.c.bf16 %v2382, %v2382
    %v2387 = vmul.f32 %v2271, %v2342
    %v2388 = vmul.f32 %v2272, %v2346
    %v2389 = vmul.f32 %v2273, %v2350
    %v2390 = vmul.f32 %v2274, %v2354
    %v2391 = vmul.f32 %v2255, %v2362
    %v2392 = vmul.f32 %v2256, %v2366
    %v2393 = vmul.f32 %v2257, %v2370
    %v2394 = vmul.f32 %v2258, %v2374
    %v2395 = vsub.f32 %v2387, %v2391
    %v2396 = vsub.f32 %v2388, %v2392
    %v2397 = vsub.f32 %v2389, %v2393
    %v2398 = vsub.f32 %v2390, %v2394
    %v2399 = vpack.c.bf16 %v2395, %v2395
    %v2400 = vpack.c.bf16 %v2396, %v2396
    %v2401 = vpack.c.bf16 %v2397, %v2397
    %v2402 = vpack.c.bf16 %v2398, %v2398
    %v2403 = vlaneseq
    %v2404 = vshrl.u32 %v2403, 7
    %v2405 = vsub.s32 2, %v2404
    %v2406 = vrot.slane %v2255, %v2405
    %v2407 = vlaneseq
    %v2408 = vshrl.u32 %v2407, 7
    %v2409 = vsub.s32 2, %v2408
    %v2410 = vrot.slane %v2256, %v2409
    %v2411 = vlaneseq
    %v2412 = vshrl.u32 %v2411, 7
    %v2413 = vsub.s32 2, %v2412
    %v2414 = vrot.slane %v2257, %v2413
    %v2415 = vlaneseq
    %v2416 = vshrl.u32 %v2415, 7
    %v2417 = vsub.s32 2, %v2416
    %v2418 = vrot.slane %v2258, %v2417
    %v2419 = vmul.f32 %v2255, %v2406
    %v2420 = vmul.f32 %v2256, %v2410
    %v2421 = vmul.f32 %v2257, %v2414
    %v2422 = vmul.f32 %v2258, %v2418
    %v2423 = vlaneseq
    %v2424 = vshrl.u32 %v2423, 7
    %v2425 = vsub.s32 2, %v2424
    %v2426 = vrot.slane %v2271, %v2425
    %v2427 = vlaneseq
    %v2428 = vshrl.u32 %v2427, 7
    %v2429 = vsub.s32 2, %v2428
    %v2430 = vrot.slane %v2272, %v2429
    %v2431 = vlaneseq
    %v2432 = vshrl.u32 %v2431, 7
    %v2433 = vsub.s32 2, %v2432
    %v2434 = vrot.slane %v2273, %v2433
    %v2435 = vlaneseq
    %v2436 = vshrl.u32 %v2435, 7
    %v2437 = vsub.s32 2, %v2436
    %v2438 = vrot.slane %v2274, %v2437
    %v2439 = vmul.f32 %v2271, %v2426
    %v2440 = vmul.f32 %v2272, %v2430
    %v2441 = vmul.f32 %v2273, %v2434
    %v2442 = vmul.f32 %v2274, %v2438
    %v2443 = vadd.f32 %v2419, %v2439
    %v2444 = vadd.f32 %v2420, %v2440
    %v2445 = vadd.f32 %v2421, %v2441
    %v2446 = vadd.f32 %v2422, %v2442
    %v2447 = vpack.c.bf16 %v2443, %v2443
    %v2448 = vpack.c.bf16 %v2444, %v2444
    %v2449 = vpack.c.bf16 %v2445, %v2445
    %v2450 = vpack.c.bf16 %v2446, %v2446
    %v2451 = vmul.f32 %v2271, %v2406
    %v2452 = vmul.f32 %v2272, %v2410
    %v2453 = vmul.f32 %v2273, %v2414
    %v2454 = vmul.f32 %v2274, %v2418
    %v2455 = vmul.f32 %v2255, %v2426
    %v2456 = vmul.f32 %v2256, %v2430
    %v2457 = vmul.f32 %v2257, %v2434
    %v2458 = vmul.f32 %v2258, %v2438
    %v2459 = vsub.f32 %v2451, %v2455
    %v2460 = vsub.f32 %v2452, %v2456
    %v2461 = vsub.f32 %v2453, %v2457
    %v2462 = vsub.f32 %v2454, %v2458
    %v2463 = vpack.c.bf16 %v2459, %v2459
    %v2464 = vpack.c.bf16 %v2460, %v2460
    %v2465 = vpack.c.bf16 %v2461, %v2461
    %v2466 = vpack.c.bf16 %v2462, %v2462
    %v2467 = vlaneseq
    %v2468 = vshrl.u32 %v2467, 7
    %v2469 = vsub.s32 3, %v2468
    %v2470 = vrot.slane %v2255, %v2469
    %v2471 = vlaneseq
    %v2472 = vshrl.u32 %v2471, 7
    %v2473 = vsub.s32 3, %v2472
    %v2474 = vrot.slane %v2256, %v2473
    %v2475 = vlaneseq
    %v2476 = vshrl.u32 %v2475, 7
    %v2477 = vsub.s32 3, %v2476
    %v2478 = vrot.slane %v2257, %v2477
    %v2479 = vlaneseq
    %v2480 = vshrl.u32 %v2479, 7
    %v2481 = vsub.s32 3, %v2480
    %v2482 = vrot.slane %v2258, %v2481
    %v2483 = vmul.f32 %v2255, %v2470
    %v2484 = vmul.f32 %v2256, %v2474
    %v2485 = vmul.f32 %v2257, %v2478
    %v2486 = vmul.f32 %v2258, %v2482
    %v2487 = vlaneseq
    %v2488 = vshrl.u32 %v2487, 7
    %v2489 = vsub.s32 3, %v2488
    %v2490 = vrot.slane %v2271, %v2489
    %v2491 = vlaneseq
    %v2492 = vshrl.u32 %v2491, 7
    %v2493 = vsub.s32 3, %v2492
    %v2494 = vrot.slane %v2272, %v2493
    %v2495 = vlaneseq
    %v2496 = vshrl.u32 %v2495, 7
    %v2497 = vsub.s32 3, %v2496
    %v2498 = vrot.slane %v2273, %v2497
    %v2499 = vlaneseq
    %v2500 = vshrl.u32 %v2499, 7
    %v2501 = vsub.s32 3, %v2500
    %v2502 = vrot.slane %v2274, %v2501
    %v2503 = vmul.f32 %v2271, %v2490
    %v2504 = vmul.f32 %v2272, %v2494
    %v2505 = vmul.f32 %v2273, %v2498
    %v2506 = vmul.f32 %v2274, %v2502
    %v2507 = vadd.f32 %v2483, %v2503
    %v2508 = vadd.f32 %v2484, %v2504
    %v2509 = vadd.f32 %v2485, %v2505
    %v2510 = vadd.f32 %v2486, %v2506
    %v2511 = vpack.c.bf16 %v2507, %v2507
    %v2512 = vpack.c.bf16 %v2508, %v2508
    %v2513 = vpack.c.bf16 %v2509, %v2509
    %v2514 = vpack.c.bf16 %v2510, %v2510
    %v2515 = vmul.f32 %v2271, %v2470
    %v2516 = vmul.f32 %v2272, %v2474
    %v2517 = vmul.f32 %v2273, %v2478
    %v2518 = vmul.f32 %v2274, %v2482
    %v2519 = vmul.f32 %v2255, %v2490
    %v2520 = vmul.f32 %v2256, %v2494
    %v2521 = vmul.f32 %v2257, %v2498
    %v2522 = vmul.f32 %v2258, %v2502
    %v2523 = vsub.f32 %v2515, %v2519
    %v2524 = vsub.f32 %v2516, %v2520
    %v2525 = vsub.f32 %v2517, %v2521
    %v2526 = vsub.f32 %v2518, %v2522
    %v2527 = vpack.c.bf16 %v2523, %v2523
    %v2528 = vpack.c.bf16 %v2524, %v2524
    %v2529 = vpack.c.bf16 %v2525, %v2525
    %v2530 = vpack.c.bf16 %v2526, %v2526
    %v2535 = vrot.slane %v2383, 6
    %v2536 = vrot.slane %v2384, 6
    %v2537 = vrot.slane %v2385, 6
    %v2538 = vrot.slane %v2386, 6
    %v2543 = vrot.slane %v2447, 4
    %v2544 = vrot.slane %v2448, 4
    %v2545 = vrot.slane %v2449, 4
    %v2546 = vrot.slane %v2450, 4
    %v2551 = vrot.slane %v2511, 2
    %v2552 = vrot.slane %v2512, 2
    %v2553 = vrot.slane %v2513, 2
    %v2554 = vrot.slane %v2514, 2
    %v2559 = vrot.slane %v2399, 6
    %v2560 = vrot.slane %v2400, 6
    %v2561 = vrot.slane %v2401, 6
    %v2562 = vrot.slane %v2402, 6
    %v2567 = vrot.slane %v2463, 4
    %v2568 = vrot.slane %v2464, 4
    %v2569 = vrot.slane %v2465, 4
    %v2570 = vrot.slane %v2466, 4
    %v2575 = vrot.slane %v2527, 2
    %v2576 = vrot.slane %v2528, 2
    %v2577 = vrot.slane %v2529, 2
    %v2578 = vrot.slane %v2530, 2
    %vm2579 = vcmask 1041408
    %v2582 = vsel %vm2579, %v2319, %v2535
    %v2585 = vsel %vm2579, %v2320, %v2536
    %v2588 = vsel %vm2579, %v2321, %v2537
    %v2591 = vsel %vm2579, %v2322, %v2538
    %v2593 = vsel %vm1306, %v2582, %v2543
    %v2595 = vsel %vm1306, %v2585, %v2544
    %v2597 = vsel %vm1306, %v2588, %v2545
    %v2599 = vsel %vm1306, %v2591, %v2546
    %vm2600 = vcmask 1045504
    %v2602 = vsel %vm2600, %v2593, %v2551
    %v2605 = vsel %vm2600, %v2595, %v2552
    %v2608 = vsel %vm2600, %v2597, %v2553
    %v2611 = vsel %vm2600, %v2599, %v2554
    %v2615 = vsel %vm2579, %v2335, %v2559
    %v2618 = vsel %vm2579, %v2336, %v2560
    %v2621 = vsel %vm2579, %v2337, %v2561
    %v2624 = vsel %vm2579, %v2338, %v2562
    %v2626 = vsel %vm1306, %v2615, %v2567
    %v2628 = vsel %vm1306, %v2618, %v2568
    %v2630 = vsel %vm1306, %v2621, %v2569
    %v2632 = vsel %vm1306, %v2624, %v2570
    %v2634 = vsel %vm2600, %v2626, %v2575
    %v2637 = vsel %vm2600, %v2628, %v2576
    %v2640 = vsel %vm2600, %v2630, %v2577
    %v2643 = vsel %vm2600, %v2632, %v2578
    %s2645 = smul.u32 4, 64
    %s2646 = smul.u32 %s2645, 4
    %s2647 = sshll.u32 %s2646, 4
    %2648 = dma.done [#allocation3], %s2647
    %v2649 = vld [vmem:[#allocation2] sm:$0xff]
    %v2650 = vld [vmem:[#allocation2 + $0x8] sm:$0xff]
    %v2651 = vld [vmem:[#allocation2 + $0x10] sm:$0xff]
    %v2652 = vld [vmem:[#allocation2 + $0x18] sm:$0xff]
    %v2653 = vld [vmem:[#allocation2 + $0x20] sm:$0xff]
    %v2654 = vld [vmem:[#allocation2 + $0x28] sm:$0xff]
    %v2655 = vld [vmem:[#allocation2 + $0x30] sm:$0xff]
    %v2656 = vld [vmem:[#allocation2 + $0x38] sm:$0xff]
    %v2657 = vld [vmem:[#allocation2 + $0x40] sm:$0xff]
    %v2658 = vld [vmem:[#allocation2 + $0x48] sm:$0xff]
    %v2659 = vld [vmem:[#allocation2 + $0x50] sm:$0xff]
    %v2660 = vld [vmem:[#allocation2 + $0x58] sm:$0xff]
    %v2661 = vld [vmem:[#allocation2 + $0x60] sm:$0xff]
    %v2662 = vld [vmem:[#allocation2 + $0x68] sm:$0xff]
    %v2663 = vld [vmem:[#allocation2 + $0x70] sm:$0xff]
    %v2664 = vld [vmem:[#allocation2 + $0x78] sm:$0xff]
    %v2665 = vld [vmem:[#allocation2 + $0x80] sm:$0xff]
    %v2666 = vld [vmem:[#allocation2 + $0x88] sm:$0xff]
    %v2667 = vld [vmem:[#allocation2 + $0x90] sm:$0xff]
    %v2668 = vld [vmem:[#allocation2 + $0x98] sm:$0xff]
    %v2669 = vld [vmem:[#allocation2 + $0xa0] sm:$0xff]
    %v2670 = vld [vmem:[#allocation2 + $0xa8] sm:$0xff]
    %v2671 = vld [vmem:[#allocation2 + $0xb0] sm:$0xff]
    %v2672 = vld [vmem:[#allocation2 + $0xb8] sm:$0xff]
    %v2673 = vld [vmem:[#allocation2 + $0xc0] sm:$0xff]
    %v2674 = vld [vmem:[#allocation2 + $0xc8] sm:$0xff]
    %v2675 = vld [vmem:[#allocation2 + $0xd0] sm:$0xff]
    %v2676 = vld [vmem:[#allocation2 + $0xd8] sm:$0xff]
    %v2677 = vld [vmem:[#allocation2 + $0xe0] sm:$0xff]
    %v2678 = vld [vmem:[#allocation2 + $0xe8] sm:$0xff]
    %v2679 = vld [vmem:[#allocation2 + $0xf0] sm:$0xff]
    %v2680 = vld [vmem:[#allocation2 + $0xf8] sm:$0xff]
    %v2681 = vld [vmem:[#allocation2 + $0x100] sm:$0xff]
    %v2682 = vld [vmem:[#allocation2 + $0x108] sm:$0xff]
    %v2683 = vld [vmem:[#allocation2 + $0x110] sm:$0xff]
    %v2684 = vld [vmem:[#allocation2 + $0x118] sm:$0xff]
    %v2685 = vld [vmem:[#allocation2 + $0x120] sm:$0xff]
    %v2686 = vld [vmem:[#allocation2 + $0x128] sm:$0xff]
    %v2687 = vld [vmem:[#allocation2 + $0x130] sm:$0xff]
    %v2688 = vld [vmem:[#allocation2 + $0x138] sm:$0xff]
    %v2689 = vld [vmem:[#allocation2 + $0x140] sm:$0xff]
    %v2690 = vld [vmem:[#allocation2 + $0x148] sm:$0xff]
    %v2691 = vld [vmem:[#allocation2 + $0x150] sm:$0xff]
    %v2692 = vld [vmem:[#allocation2 + $0x158] sm:$0xff]
    %v2693 = vld [vmem:[#allocation2 + $0x160] sm:$0xff]
    %v2694 = vld [vmem:[#allocation2 + $0x168] sm:$0xff]
    %v2695 = vld [vmem:[#allocation2 + $0x170] sm:$0xff]
    %v2696 = vld [vmem:[#allocation2 + $0x178] sm:$0xff]
    %v2697 = vld [vmem:[#allocation2 + $0x180] sm:$0xff]
    %v2698 = vld [vmem:[#allocation2 + $0x188] sm:$0xff]
    %v2699 = vld [vmem:[#allocation2 + $0x190] sm:$0xff]
    %v2700 = vld [vmem:[#allocation2 + $0x198] sm:$0xff]
    %v2701 = vld [vmem:[#allocation2 + $0x1a0] sm:$0xff]
    %v2702 = vld [vmem:[#allocation2 + $0x1a8] sm:$0xff]
    %v2703 = vld [vmem:[#allocation2 + $0x1b0] sm:$0xff]
    %v2704 = vld [vmem:[#allocation2 + $0x1b8] sm:$0xff]
    %v2705 = vld [vmem:[#allocation2 + $0x1c0] sm:$0xff]
    %v2706 = vld [vmem:[#allocation2 + $0x1c8] sm:$0xff]
    %v2707 = vld [vmem:[#allocation2 + $0x1d0] sm:$0xff]
    %v2708 = vld [vmem:[#allocation2 + $0x1d8] sm:$0xff]
    %v2709 = vld [vmem:[#allocation2 + $0x1e0] sm:$0xff]
    %v2710 = vld [vmem:[#allocation2 + $0x1e8] sm:$0xff]
    %v2711 = vld [vmem:[#allocation2 + $0x1f0] sm:$0xff]
    %v2712 = vld [vmem:[#allocation2 + $0x1f8] sm:$0xff]
    %v2713 = vld [vmem:[#allocation2 + $0x200] sm:$0xff]
    %v2714 = vld [vmem:[#allocation2 + $0x208] sm:$0xff]
    %v2715 = vld [vmem:[#allocation2 + $0x210] sm:$0xff]
    %v2716 = vld [vmem:[#allocation2 + $0x218] sm:$0xff]
    %v2717 = vld [vmem:[#allocation2 + $0x220] sm:$0xff]
    %v2718 = vld [vmem:[#allocation2 + $0x228] sm:$0xff]
    %v2719 = vld [vmem:[#allocation2 + $0x230] sm:$0xff]
    %v2720 = vld [vmem:[#allocation2 + $0x238] sm:$0xff]
    %v2721 = vld [vmem:[#allocation2 + $0x240] sm:$0xff]
    %v2722 = vld [vmem:[#allocation2 + $0x248] sm:$0xff]
    %v2723 = vld [vmem:[#allocation2 + $0x250] sm:$0xff]
    %v2724 = vld [vmem:[#allocation2 + $0x258] sm:$0xff]
    %v2725 = vld [vmem:[#allocation2 + $0x260] sm:$0xff]
    %v2726 = vld [vmem:[#allocation2 + $0x268] sm:$0xff]
    %v2727 = vld [vmem:[#allocation2 + $0x270] sm:$0xff]
    %v2728 = vld [vmem:[#allocation2 + $0x278] sm:$0xff]
    %v2729 = vld [vmem:[#allocation2 + $0x280] sm:$0xff]
    %v2730 = vld [vmem:[#allocation2 + $0x288] sm:$0xff]
    %v2731 = vld [vmem:[#allocation2 + $0x290] sm:$0xff]
    %v2732 = vld [vmem:[#allocation2 + $0x298] sm:$0xff]
    %v2733 = vld [vmem:[#allocation2 + $0x2a0] sm:$0xff]
    %v2734 = vld [vmem:[#allocation2 + $0x2a8] sm:$0xff]
    %v2735 = vld [vmem:[#allocation2 + $0x2b0] sm:$0xff]
    %v2736 = vld [vmem:[#allocation2 + $0x2b8] sm:$0xff]
    %v2737 = vld [vmem:[#allocation2 + $0x2c0] sm:$0xff]
    %v2738 = vld [vmem:[#allocation2 + $0x2c8] sm:$0xff]
    %v2739 = vld [vmem:[#allocation2 + $0x2d0] sm:$0xff]
    %v2740 = vld [vmem:[#allocation2 + $0x2d8] sm:$0xff]
    %v2741 = vld [vmem:[#allocation2 + $0x2e0] sm:$0xff]
    %v2742 = vld [vmem:[#allocation2 + $0x2e8] sm:$0xff]
    %v2743 = vld [vmem:[#allocation2 + $0x2f0] sm:$0xff]
    %v2744 = vld [vmem:[#allocation2 + $0x2f8] sm:$0xff]
    %v2745 = vld [vmem:[#allocation2 + $0x300] sm:$0xff]
    %v2746 = vld [vmem:[#allocation2 + $0x308] sm:$0xff]
    %v2747 = vld [vmem:[#allocation2 + $0x310] sm:$0xff]
    %v2748 = vld [vmem:[#allocation2 + $0x318] sm:$0xff]
    %v2749 = vld [vmem:[#allocation2 + $0x320] sm:$0xff]
    %v2750 = vld [vmem:[#allocation2 + $0x328] sm:$0xff]
    %v2751 = vld [vmem:[#allocation2 + $0x330] sm:$0xff]
    %v2752 = vld [vmem:[#allocation2 + $0x338] sm:$0xff]
    %v2753 = vld [vmem:[#allocation2 + $0x340] sm:$0xff]
    %v2754 = vld [vmem:[#allocation2 + $0x348] sm:$0xff]
    %v2755 = vld [vmem:[#allocation2 + $0x350] sm:$0xff]
    %v2756 = vld [vmem:[#allocation2 + $0x358] sm:$0xff]
    %v2757 = vld [vmem:[#allocation2 + $0x360] sm:$0xff]
    %v2758 = vld [vmem:[#allocation2 + $0x368] sm:$0xff]
    %v2759 = vld [vmem:[#allocation2 + $0x370] sm:$0xff]
    %v2760 = vld [vmem:[#allocation2 + $0x378] sm:$0xff]
    %v2761 = vld [vmem:[#allocation2 + $0x380] sm:$0xff]
    %v2762 = vld [vmem:[#allocation2 + $0x388] sm:$0xff]
    %v2763 = vld [vmem:[#allocation2 + $0x390] sm:$0xff]
    %v2764 = vld [vmem:[#allocation2 + $0x398] sm:$0xff]
    %v2765 = vld [vmem:[#allocation2 + $0x3a0] sm:$0xff]
    %v2766 = vld [vmem:[#allocation2 + $0x3a8] sm:$0xff]
    %v2767 = vld [vmem:[#allocation2 + $0x3b0] sm:$0xff]
    %v2768 = vld [vmem:[#allocation2 + $0x3b8] sm:$0xff]
    %v2769 = vld [vmem:[#allocation2 + $0x3c0] sm:$0xff]
    %v2770 = vld [vmem:[#allocation2 + $0x3c8] sm:$0xff]
    %v2771 = vld [vmem:[#allocation2 + $0x3d0] sm:$0xff]
    %v2772 = vld [vmem:[#allocation2 + $0x3d8] sm:$0xff]
    %v2773 = vld [vmem:[#allocation2 + $0x3e0] sm:$0xff]
    %v2774 = vld [vmem:[#allocation2 + $0x3e8] sm:$0xff]
    %v2775 = vld [vmem:[#allocation2 + $0x3f0] sm:$0xff]
    %v2776 = vld [vmem:[#allocation2 + $0x3f8] sm:$0xff]
    %2777 = vmatprep.subr.bf16.mxu0 %v2650
    %2778 = vmatpush1.bf16.msra.mxu0 %v2649
    %2779 = vmatprep.subr.bf16.mxu0 %v2654
    %2780 = vmatpush1.bf16.msra.mxu0 %v2653
    %2781 = vmatprep.subr.bf16.mxu0 %v2658
    %2782 = vmatpush1.bf16.msra.mxu0 %v2657
    %2783 = vmatprep.subr.bf16.mxu0 %v2662
    %2784 = vmatpush1.bf16.msra.mxu0 %v2661
    %2785 = vmatprep.subr.bf16.mxu0 %v2666
    %2786 = vmatpush1.bf16.msra.mxu0 %v2665
    %2787 = vmatprep.subr.bf16.mxu0 %v2670
    %2788 = vmatpush1.bf16.msra.mxu0 %v2669
    %2789 = vmatprep.subr.bf16.mxu0 %v2674
    %2790 = vmatpush1.bf16.msra.mxu0 %v2673
    %2791 = vmatprep.subr.bf16.mxu0 %v2678
    %2792 = vmatpush1.bf16.msra.mxu0 %v2677
    %2793 = vmatprep.subr.bf16.mxu0 %v2682
    %2794 = vmatpush1.bf16.msra.mxu0 %v2681
    %2795 = vmatprep.subr.bf16.mxu0 %v2686
    %2796 = vmatpush1.bf16.msra.mxu0 %v2685
    %2797 = vmatprep.subr.bf16.mxu0 %v2690
    %2798 = vmatpush1.bf16.msra.mxu0 %v2689
    %2799 = vmatprep.subr.bf16.mxu0 %v2694
    %2800 = vmatpush1.bf16.msra.mxu0 %v2693
    %2801 = vmatprep.subr.bf16.mxu0 %v2698
    %2802 = vmatpush1.bf16.msra.mxu0 %v2697
    %2803 = vmatprep.subr.bf16.mxu0 %v2702
    %2804 = vmatpush1.bf16.msra.mxu0 %v2701
    %2805 = vmatprep.subr.bf16.mxu0 %v2706
    %2806 = vmatpush1.bf16.msra.mxu0 %v2705
    %2807 = vmatprep.subr.bf16.mxu0 %v2710
    %2808 = vmatpush1.bf16.msra.mxu0 %v2709
    %2809 = vmatprep.mubr.bf16.mxu0 %v2605
    %2810 = vmatmul.mubr.bf16.gmra.mrb[0].mxu0 %v2602
    %v2811 = vpop.f32.mrb[0].mxu0
    %v2812 = vadd.f32 0.0, %v2811
    %v2813 = vpop.f32.mrb[0].mxu0
    %v2814 = vadd.f32 0.0, %v2813
    %v2815 = vpop.f32.mrb[0].mxu0
    %v2816 = vadd.f32 0.0, %v2815
    %v2817 = vpop.f32.mrb[0].mxu0
    %v2818 = vadd.f32 0.0, %v2817
    %2819 = vmatprep.mubr.bf16.mxu0 %v2637
    %2820 = vmatmul.mubr.bf16.gmra.mrb[0].mxu0 %v2634
    %v2821 = vpop.f32.mrb[0].mxu0
    %v2822 = vadd.f32 0.0, %v2821
    %v2823 = vpop.f32.mrb[0].mxu0
    %v2824 = vadd.f32 0.0, %v2823
    %v2825 = vpop.f32.mrb[0].mxu0
    %v2826 = vadd.f32 0.0, %v2825
    %v2827 = vpop.f32.mrb[0].mxu0
    %v2828 = vadd.f32 0.0, %v2827
    %2829 = vdwg.mxu0
    %2830 = vmatprep.subr.bf16.mxu0 %v2714
    %2831 = vmatpush1.bf16.msra.mxu0 %v2713
    %2832 = vmatprep.subr.bf16.mxu0 %v2718
    %2833 = vmatpush1.bf16.msra.mxu0 %v2717
    %2834 = vmatprep.subr.bf16.mxu0 %v2722
    %2835 = vmatpush1.bf16.msra.mxu0 %v2721
    %2836 = vmatprep.subr.bf16.mxu0 %v2726
    %2837 = vmatpush1.bf16.msra.mxu0 %v2725
    %2838 = vmatprep.subr.bf16.mxu0 %v2730
    %2839 = vmatpush1.bf16.msra.mxu0 %v2729
    %2840 = vmatprep.subr.bf16.mxu0 %v2734
    %2841 = vmatpush1.bf16.msra.mxu0 %v2733
    %2842 = vmatprep.subr.bf16.mxu0 %v2738
    %2843 = vmatpush1.bf16.msra.mxu0 %v2737
    %2844 = vmatprep.subr.bf16.mxu0 %v2742
    %2845 = vmatpush1.bf16.msra.mxu0 %v2741
    %2846 = vmatprep.subr.bf16.mxu0 %v2746
    %2847 = vmatpush1.bf16.msra.mxu0 %v2745
    %2848 = vmatprep.subr.bf16.mxu0 %v2750
    %2849 = vmatpush1.bf16.msra.mxu0 %v2749
    %2850 = vmatprep.subr.bf16.mxu0 %v2754
    %2851 = vmatpush1.bf16.msra.mxu0 %v2753
    %2852 = vmatprep.subr.bf16.mxu0 %v2758
    %2853 = vmatpush1.bf16.msra.mxu0 %v2757
    %2854 = vmatprep.subr.bf16.mxu0 %v2762
    %2855 = vmatpush1.bf16.msra.mxu0 %v2761
    %2856 = vmatprep.subr.bf16.mxu0 %v2766
    %2857 = vmatpush1.bf16.msra.mxu0 %v2765
    %2858 = vmatprep.subr.bf16.mxu0 %v2770
    %2859 = vmatpush1.bf16.msra.mxu0 %v2769
    %2860 = vmatprep.subr.bf16.mxu0 %v2774
    %2861 = vmatpush1.bf16.msra.mxu0 %v2773
    %2862 = vmatprep.mubr.bf16.mxu0 %v2611
    %2863 = vmatmul.mubr.bf16.gmra.mrb[0].mxu0 %v2608
    %v2864 = vpop.f32.mrb[0].mxu0
    %v2865 = vadd.f32 %v2812, %v2864
    %v2866 = vpop.f32.mrb[0].mxu0
    %v2867 = vadd.f32 %v2814, %v2866
    %v2868 = vpop.f32.mrb[0].mxu0
    %v2869 = vadd.f32 %v2816, %v2868
    %v2870 = vpop.f32.mrb[0].mxu0
    %v2871 = vadd.f32 %v2818, %v2870
    %2872 = vmatprep.mubr.bf16.mxu0 %v2643
    %2873 = vmatmul.mubr.bf16.gmra.mrb[0].mxu0 %v2640
    %v2874 = vpop.f32.mrb[0].mxu0
    %v2875 = vadd.f32 %v2822, %v2874
    %v2876 = vpop.f32.mrb[0].mxu0
    %v2877 = vadd.f32 %v2824, %v2876
    %v2878 = vpop.f32.mrb[0].mxu0
    %v2879 = vadd.f32 %v2826, %v2878
    %v2880 = vpop.f32.mrb[0].mxu0
    %v2881 = vadd.f32 %v2828, %v2880
    %2882 = vdwg.mxu0
    %2883 = vmatprep.subr.bf16.mxu0 %v2652
    %2884 = vmatpush1.bf16.msra.mxu0 %v2651
    %2885 = vmatprep.subr.bf16.mxu0 %v2656
    %2886 = vmatpush1.bf16.msra.mxu0 %v2655
    %2887 = vmatprep.subr.bf16.mxu0 %v2660
    %2888 = vmatpush1.bf16.msra.mxu0 %v2659
    %2889 = vmatprep.subr.bf16.mxu0 %v2664
    %2890 = vmatpush1.bf16.msra.mxu0 %v2663
    %2891 = vmatprep.subr.bf16.mxu0 %v2668
    %2892 = vmatpush1.bf16.msra.mxu0 %v2667
    %2893 = vmatprep.subr.bf16.mxu0 %v2672
    %2894 = vmatpush1.bf16.msra.mxu0 %v2671
    %2895 = vmatprep.subr.bf16.mxu0 %v2676
    %2896 = vmatpush1.bf16.msra.mxu0 %v2675
    %2897 = vmatprep.subr.bf16.mxu0 %v2680
    %2898 = vmatpush1.bf16.msra.mxu0 %v2679
    %2899 = vmatprep.subr.bf16.mxu0 %v2684
    %2900 = vmatpush1.bf16.msra.mxu0 %v2683
    %2901 = vmatprep.subr.bf16.mxu0 %v2688
    %2902 = vmatpush1.bf16.msra.mxu0 %v2687
    %2903 = vmatprep.subr.bf16.mxu0 %v2692
    %2904 = vmatpush1.bf16.msra.mxu0 %v2691
    %2905 = vmatprep.subr.bf16.mxu0 %v2696
    %2906 = vmatpush1.bf16.msra.mxu0 %v2695
    %2907 = vmatprep.subr.bf16.mxu0 %v2700
    %2908 = vmatpush1.bf16.msra.mxu0 %v2699
    %2909 = vmatprep.subr.bf16.mxu0 %v2704
    %2910 = vmatpush1.bf16.msra.mxu0 %v2703
    %2911 = vmatprep.subr.bf16.mxu0 %v2708
    %2912 = vmatpush1.bf16.msra.mxu0 %v2707
    %2913 = vmatprep.subr.bf16.mxu0 %v2712
    %2914 = vmatpush1.bf16.msra.mxu0 %v2711
    %2915 = vmatprep.mubr.bf16.mxu0 %v2605
    %2916 = vmatmul.mubr.bf16.gmra.mrb[0].mxu0 %v2602
    %v2917 = vpop.f32.mrb[0].mxu0
    %v2918 = vadd.f32 0.0, %v2917
    %v2919 = vpop.f32.mrb[0].mxu0
    %v2920 = vadd.f32 0.0, %v2919
    %v2921 = vpop.f32.mrb[0].mxu0
    %v2922 = vadd.f32 0.0, %v2921
    %v2923 = vpop.f32.mrb[0].mxu0
    %v2924 = vadd.f32 0.0, %v2923
    %2925 = vmatprep.mubr.bf16.mxu0 %v2637
    %2926 = vmatmul.mubr.bf16.gmra.mrb[0].mxu0 %v2634
    %v2927 = vpop.f32.mrb[0].mxu0
    %v2928 = vadd.f32 0.0, %v2927
    %v2929 = vpop.f32.mrb[0].mxu0
    %v2930 = vadd.f32 0.0, %v2929
    %v2931 = vpop.f32.mrb[0].mxu0
    %v2932 = vadd.f32 0.0, %v2931
    %v2933 = vpop.f32.mrb[0].mxu0
    %v2934 = vadd.f32 0.0, %v2933
    %2935 = vdwg.mxu0
    %2936 = vmatprep.subr.bf16.mxu0 %v2716
    %2937 = vmatpush1.bf16.msra.mxu0 %v2715
    %2938 = vmatprep.subr.bf16.mxu0 %v2720
    %2939 = vmatpush1.bf16.msra.mxu0 %v2719
    %2940 = vmatprep.subr.bf16.mxu0 %v2724
    %2941 = vmatpush1.bf16.msra.mxu0 %v2723
    %2942 = vmatprep.subr.bf16.mxu0 %v2728
    %2943 = vmatpush1.bf16.msra.mxu0 %v2727
    %2944 = vmatprep.subr.bf16.mxu0 %v2732
    %2945 = vmatpush1.bf16.msra.mxu0 %v2731
    %2946 = vmatprep.subr.bf16.mxu0 %v2736
    %2947 = vmatpush1.bf16.msra.mxu0 %v2735
    %2948 = vmatprep.subr.bf16.mxu0 %v2740
    %2949 = vmatpush1.bf16.msra.mxu0 %v2739
    %2950 = vmatprep.subr.bf16.mxu0 %v2744
    %2951 = vmatpush1.bf16.msra.mxu0 %v2743
    %2952 = vmatprep.subr.bf16.mxu0 %v2748
    %2953 = vmatpush1.bf16.msra.mxu0 %v2747
    %2954 = vmatprep.subr.bf16.mxu0 %v2752
    %2955 = vmatpush1.bf16.msra.mxu0 %v2751
    %2956 = vmatprep.subr.bf16.mxu0 %v2756
    %2957 = vmatpush1.bf16.msra.mxu0 %v2755
    %2958 = vmatprep.subr.bf16.mxu0 %v2760
    %2959 = vmatpush1.bf16.msra.mxu0 %v2759
    %2960 = vmatprep.subr.bf16.mxu0 %v2764
    %2961 = vmatpush1.bf16.msra.mxu0 %v2763
    %2962 = vmatprep.subr.bf16.mxu0 %v2768
    %2963 = vmatpush1.bf16.msra.mxu0 %v2767
    %2964 = vmatprep.subr.bf16.mxu0 %v2772
    %2965 = vmatpush1.bf16.msra.mxu0 %v2771
    %2966 = vmatprep.subr.bf16.mxu0 %v2776
    %2967 = vmatpush1.bf16.msra.mxu0 %v2775
    %2968 = vmatprep.mubr.bf16.mxu0 %v2611
    %2969 = vmatmul.mubr.bf16.gmra.mrb[0].mxu0 %v2608
    %v2970 = vpop.f32.mrb[0].mxu0
    %v2971 = vadd.f32 %v2918, %v2970
    %v2972 = vpop.f32.mrb[0].mxu0
    %v2973 = vadd.f32 %v2920, %v2972
    %v2974 = vpop.f32.mrb[0].mxu0
    %v2975 = vadd.f32 %v2922, %v2974
    %v2976 = vpop.f32.mrb[0].mxu0
    %v2977 = vadd.f32 %v2924, %v2976
    %2978 = vmatprep.mubr.bf16.mxu0 %v2643
    %2979 = vmatmul.mubr.bf16.gmra.mrb[0].mxu0 %v2640
    %v2980 = vpop.f32.mrb[0].mxu0
    %v2981 = vadd.f32 %v2928, %v2980
    %v2982 = vpop.f32.mrb[0].mxu0
    %v2983 = vadd.f32 %v2930, %v2982
    %v2984 = vpop.f32.mrb[0].mxu0
    %v2985 = vadd.f32 %v2932, %v2984
    %v2986 = vpop.f32.mrb[0].mxu0
    %v2987 = vadd.f32 %v2934, %v2986
    %2988 = vdwg.mxu0
    %v2989 = vsub.f32 %v2865, %v2981
    %v2990 = vsub.f32 %v2867, %v2983
    %v2991 = vsub.f32 %v2869, %v2985
    %v2992 = vsub.f32 %v2871, %v2987
    %v2993 = vadd.f32 %v2971, %v2875
    %v2994 = vadd.f32 %v2973, %v2877
    %v2995 = vadd.f32 %v2975, %v2879
    %v2996 = vadd.f32 %v2977, %v2881
    %v2997 = vmul.f32 %v2989, %v2989
    %v2998 = vmul.f32 %v2990, %v2990
    %v2999 = vmul.f32 %v2991, %v2991
    %v3000 = vmul.f32 %v2992, %v2992
    %v3001 = vmul.f32 %v2993, %v2993
    %v3002 = vmul.f32 %v2994, %v2994
    %v3003 = vmul.f32 %v2995, %v2995
    %v3004 = vmul.f32 %v2996, %v2996
    %v3005 = vadd.f32 %v2997, %v3001
    %v3006 = vadd.f32 %v2998, %v3002
    %v3007 = vadd.f32 %v2999, %v3003
    %v3008 = vadd.f32 %v3000, %v3004
    %v3009 = vld [vmem:[%s3] sm:$0xff]
    %v3010 = vld [vmem:[%s3 + $0x8] sm:$0xff]
    %v3011 = vld [vmem:[%s3 + $0x10] sm:$0xff]
    %v3012 = vld [vmem:[%s3 + $0x18] sm:$0xff]
    %v3013 = vld [vmem:[%s4] sm:$0xff]
    %v3014 = vld [vmem:[%s4 + $0x8] sm:$0xff]
    %v3015 = vld [vmem:[%s4 + $0x10] sm:$0xff]
    %v3016 = vld [vmem:[%s4 + $0x18] sm:$0xff]
    %v3017 = vmul.f32 %v3005, %v3009
    %v3018 = vmul.f32 %v3006, %v3010
    %v3019 = vmul.f32 %v3007, %v3011
    %v3020 = vmul.f32 %v3008, %v3012
    %v3021 = vmul.f32 %v3005, %v3013
    %v3022 = vmul.f32 %v3006, %v3014
    %v3023 = vmul.f32 %v3007, %v3015
    %v3024 = vmul.f32 %v3008, %v3016
    %v3025 = vmax.f32 %v3017, %v3018
    %v3026 = vmax.f32 %v3019, %v3020
    %v3027 = vmax.f32 %v3025, %v3026
    %3028 = vmax.xlane.f32.xlu0 %v3027
    %v3029 = vpop.xlane.xlu0 %3028
    %v3030 = vrot.slane %v3029, 4
    %v3031 = vmax.f32 %v3029, %v3030
    %v3032 = vrot.slane %v3031, 2
    %v3033 = vmax.f32 %v3031, %v3032
    %v3034 = vrot.slane %v3033, 1
    %v3035 = vmax.f32 %v3033, %v3034
    %s3036 = vtos %v3035
    %v3037 = vstv %s3036
    %v3038 = vmax.f32 %v3021, %v3022
    %v3039 = vmax.f32 %v3023, %v3024
    %v3040 = vmax.f32 %v3038, %v3039
    %3041 = vmax.xlane.f32.xlu0 %v3040
    %v3042 = vpop.xlane.xlu0 %3041
    %v3043 = vrot.slane %v3042, 4
    %v3044 = vmax.f32 %v3042, %v3043
    %v3045 = vrot.slane %v3044, 2
    %v3046 = vmax.f32 %v3044, %v3045
    %v3047 = vrot.slane %v3046, 1
    %v3048 = vmax.f32 %v3046, %v3047
    %s3049 = vtos %v3048
    %v3050 = vstv %s3049
    %v3051 = vadd.f32 %v3017, %v3018
    %v3052 = vadd.f32 %v3051, %v3019
    %v3053 = vadd.f32 %v3052, %v3020
    %3054 = vadd.xlane.f32.xlu0 %v3053
    %v3055 = vpop.xlane.xlu0 %3054
    %v3056 = vrot.slane %v3055, 4
    %v3057 = vadd.f32 %v3055, %v3056
    %v3058 = vrot.slane %v3057, 2
    %v3059 = vadd.f32 %v3057, %v3058
    %v3060 = vrot.slane %v3059, 1
    %v3061 = vadd.f32 %v3059, %v3060
    %s3062 = vtos %v3061
    %v3063 = vstv %s3062
    %v3064 = vadd.f32 %v3021, %v3022
    %v3065 = vadd.f32 %v3064, %v3023
    %v3066 = vadd.f32 %v3065, %v3024
    %3067 = vadd.xlane.f32.xlu0 %v3066
    %v3068 = vpop.xlane.xlu0 %3067
    %v3069 = vrot.slane %v3068, 4
    %v3070 = vadd.f32 %v3068, %v3069
    %v3071 = vrot.slane %v3070, 2
    %v3072 = vadd.f32 %v3070, %v3071
    %v3073 = vrot.slane %v3072, 1
    %v3074 = vadd.f32 %v3072, %v3073
    %s3075 = vtos %v3074
    %v3076 = vstv %s3075
    %v3077 = vmax.f32 %v3037, %v3050
    %v3078 = vmul.f32 %v3077, 1.5258789e-05
    %v3079 = vadd.f32 %v3063, %v3076
    %v3080 = vmul.f32 %v3079, 1.5258789e-05
    %v3081 = vadd.f32 %v3009, %v3013
    %v3082 = vadd.f32 %v3010, %v3014
    %v3083 = vadd.f32 %v3011, %v3015
    %v3084 = vadd.f32 %v3012, %v3016
    %v3085 = vmul.f32 %v3081, 0.015258789
    %v3086 = vmul.f32 %v3082, 0.015258789
    %v3087 = vmul.f32 %v3083, 0.015258789
    %v3088 = vmul.f32 %v3084, 0.015258789
    %vm3089 = vcmp.gt.f32.partialorder %v3081, 0.0
    %vm3090 = vcmp.gt.f32.partialorder %v3082, 0.0
    %vm3091 = vcmp.gt.f32.partialorder %v3083, 0.0
    %vm3092 = vcmp.gt.f32.partialorder %v3084, 0.0
    %v3093 = vsel %vm3089, 0.0, -1e+30
    %v3094 = vsel %vm3090, 0.0, -1e+30
    %v3095 = vsel %vm3091, 0.0, -1e+30
    %v3096 = vsel %vm3092, 0.0, -1e+30
    %v3097 = vmul.f32 %v3078, 1000.0
    %v3098 = vmul.f32 %v3005, %v3085
    %v3099 = vmul.f32 %v3006, %v3086
    %v3100 = vmul.f32 %v3007, %v3087
    %v3101 = vmul.f32 %v3008, %v3088
    %v3102 = vsub.f32 %v3093, %v3097
    %v3103 = vsub.f32 %v3094, %v3097
    %v3104 = vsub.f32 %v3095, %v3097
    %v3105 = vsub.f32 %v3096, %v3097
    %v3106 = vadd.f32 %v3098, %v3102
    %v3107 = vadd.f32 %v3099, %v3103
    %v3108 = vadd.f32 %v3100, %v3104
    %v3109 = vadd.f32 %v3101, %v3105
    %v3110 = vmul.f32 %v3106, 1.442695
    %v3111 = vpow.pop %v3110
    %v3112 = vmul.f32 %v3107, 1.442695
    %v3113 = vpow.pop %v3112
    %v3114 = vmul.f32 %v3108, 1.442695
    %v3115 = vpow.pop %v3114
    %v3116 = vmul.f32 %v3109, 1.442695
    %v3117 = vpow.pop %v3116
    %v3118 = vadd.f32 %v3111, %v3113
    %v3119 = vadd.f32 %v3118, %v3115
    %v3120 = vadd.f32 %v3119, %v3117
    %3121 = vadd.xlane.f32.xlu0 %v3120
    %v3122 = vpop.xlane.xlu0 %3121
    %v3123 = vrot.slane %v3122, 4
    %v3124 = vadd.f32 %v3122, %v3123
    %v3125 = vrot.slane %v3124, 2
    %v3126 = vadd.f32 %v3124, %v3125
    %v3127 = vrot.slane %v3126, 1
    %v3128 = vadd.f32 %v3126, %v3127
    %s3129 = vtos %v3128
    %v3130 = vstv %s3129
    %v3131 = vlog2.pop %v3130
    %v3132 = vmul.f32 %v3131, 0.6931472
    %v3133 = vadd.f32 %v3097, %v3132
    %v3134 = vmul.f32 %v3133, 0.001
    %v3135 = vlaneseq
    %v3136 = vand.u32 %v3135, 127
    %vm3137 = vcmp.eq.s32.totalorder %v3136, 0
    %v3138 = vsel %vm3137, %v3134, 0.0
    %vm3139 = vcmp.eq.s32.totalorder %v3136, 1
    %v3140 = vsel %vm3139, %v3078, %v3138
    %vm3141 = vcmp.eq.s32.totalorder %v3136, 2
    %v3142 = vsel %vm3141, %v3037, %v3140
    %vm3143 = vcmp.eq.s32.totalorder %v3136, 3
    %v3144 = vsel %vm3143, %v3050, %v3142
    %vm3145 = vcmp.eq.s32.totalorder %v3136, 4
    %v3146 = vsel %vm3145, %v3080, %v3144
    %vm3147 = vcmp.eq.s32.totalorder %v3136, 5
    %v3148 = vsel %vm3147, %v3063, %v3146
    %vm3149 = vcmp.eq.s32.totalorder %v3136, 6
    %v3150 = vsel %vm3149, %v3076, %v3148
    %3151 = vst [vmem:[#allocation4] sm:$0x1] %v3150
    // Predicated region
    $region55: #{_nngd_forward.1} parent=1 // pred_check
      _
    $region56: #{_nngd_forward.1} parent=1 // pred_check_branch
      %3153 = sbr.rel (0) target = $region58
    $region57: #{_nngd_forward.1} parent=1 // pred_region
      %s3155 = ssub.s32 16, 16
      %3156 = vsyncadd [#allocation5], %s3155
      %s3158 = sshll.u32 [#allocation4], 4
      %s3159 = int_to_ptr.vmem [resolvable:$true] %s3158
      %3161 = dma.vmem_to_hbm [thread:$0]  %s3159, 16, %s5, [#allocation5]
    $region58: #{_nngd_forward.1} parent=1 // pred_fallthru
      _
    // Predicated region
    $region59: #{_nngd_forward.1} parent=1 // pred_check
      _
    $region60: #{_nngd_forward.1} parent=1 // pred_check_branch
      %3163 = sbr.rel (0) target = $region62
    $region61: #{_nngd_forward.1} parent=1 // pred_region
      %3164 = dma.done [#allocation5], 16
    $region62: #{_nngd_forward.1} parent=1 // pred_fallthru
      _
    %3165 = vsyncpa [#allocation5], 1
  %3166 = vsyncmov [#allocation3]
  %s3167 = vpop.sfrf %3166
  %p3168 = scmp.eq.s32.totalorder %s3167, 0
  %p3169 = pneg %p3168
  %3171 = shalt.err (%p3169)

</llo_original>
